<compile_context>
chip_gen: v7x
topology: tpu7x:2x2x1
jax: 0.10.0
libtpu: 0.0.40
codegen_flags: <defaults>
</compile_context>

<pallas_src>
import jax
import jax.numpy as jnp
from jax import lax
from jax.experimental import pallas as pl
from jax.experimental.pallas import tpu as pltpu

# ---------------- small BERT config (synthetic, shapes only) ----------------
VOCAB = 100
TYPE_VOCAB = 2
MAX_POS = 16
HIDDEN = 32
HEADS = 2
HEAD_DIM = HIDDEN // HEADS
INTERMEDIATE = 64
LAYERS = 2
NUM_LABELS = 5            # == len(Declaration.Config.id2tag) stand-in
LPAD = 128                # classifier logits padded to a full 128-lane slab
BATCH = 2
SEQ = 8
LN_EPS = 1e-12
NEG_INF = -1e9
INV_SQRT2 = 0.7071067811865476

_VMEM = pl.BlockSpec(memory_space=pltpu.MemorySpace.VMEM)


# ----------------------------- Pallas kernels -------------------------------
def _bert_forward_kernel(
    x_ref, bias_ref, eg_ref, eb_ref,
    wqkv_ref, bqkv_ref, wo_ref, bo_ref,
    ln1g_ref, ln1b_ref, w1_ref, b1_ref, w2_ref, b2_ref, ln2g_ref, ln2b_ref,
    wc_ref, bc_ref,
    logits_ref,
):
    """Entire BERT encoder + token-classification head in one kernel.

    Layout: activations are (B*S, HIDDEN) with HIDDEN on the lane axis.
    Weights are packed on leading axes:
      wqkv: (L, 3, HEADS, H, HEAD_DIM)   bqkv: (L, 3, HEADS, 1, HEAD_DIM)
      wo:   (L, HEADS, HEAD_DIM, H)      bo/ln*/b1/b2: (L, 1, dim)
      wc:   (H, LPAD) zero-padded        bc: (1, LPAD)
    """
    def layer_norm(x, g, b):
        mu = jnp.mean(x, axis=-1, keepdims=True)
        d = x - mu
        var = jnp.mean(d * d, axis=-1, keepdims=True)
        return d * lax.rsqrt(var + LN_EPS) * g + b

    bias = bias_ref[...]                       # (B*S, B*S) additive attention bias
    x = layer_norm(x_ref[...], eg_ref[...], eb_ref[...])
    scale = 1.0 / float(HEAD_DIM) ** 0.5

    for l in range(LAYERS):                    # static unroll; all weights VMEM-resident
        # ---------------- multi-head self-attention ----------------
        attn = jnp.zeros((x.shape[0], HIDDEN), jnp.float32)
        for h in range(HEADS):
            q = jnp.dot(x, wqkv_ref[l, 0, h],
                        preferred_element_type=jnp.float32) + bqkv_ref[l, 0, h]
            k = jnp.dot(x, wqkv_ref[l, 1, h],
                        preferred_element_type=jnp.float32) + bqkv_ref[l, 1, h]
            v = jnp.dot(x, wqkv_ref[l, 2, h],
                        preferred_element_type=jnp.float32) + bqkv_ref[l, 2, h]
            # scores: contract HEAD_DIM of q and k directly (no k.T transpose)
            s = lax.dot_general(q, k, (((1,), (1,)), ((), ())),
                                preferred_element_type=jnp.float32) * scale + bias
            m = jnp.max(s, axis=-1, keepdims=True)
            p = jnp.exp(s - m)
            p = p / jnp.sum(p, axis=-1, keepdims=True)
            ctx = jnp.dot(p, v, preferred_element_type=jnp.float32)   # (B*S, HEAD_DIM)
            # fold the per-head slice of the output projection into the accumulation
            attn = attn + jnp.dot(ctx, wo_ref[l, h],
                                  preferred_element_type=jnp.float32)
        attn = attn + bo_ref[l]                # dropout: identity (eval)
        x = layer_norm(x + attn, ln1g_ref[l], ln1b_ref[l])

        # ---------------- feed-forward (exact GELU) ----------------
        ff = jnp.dot(x, w1_ref[l], preferred_element_type=jnp.float32) + b1_ref[l]
        ff = 0.5 * ff * (1.0 + lax.erf(ff * INV_SQRT2))
        ff = jnp.dot(ff, w2_ref[l], preferred_element_type=jnp.float32) + b2_ref[l]
        x = layer_norm(x + ff, ln2g_ref[l], ln2b_ref[l])   # dropout: identity (eval)

    # -------- token-classification head: lane-dense (B*S, 128) store --------
    logits_ref[...] = (jnp.dot(x, wc_ref[...], preferred_element_type=jnp.float32)
                       + bc_ref[...]).astype(logits_ref.dtype)


def _ce_kernel(logits_ref, onehot_ref, loss_ref):
    """Mean token-level cross-entropy over the padded (M, LPAD) logits."""
    lg = logits_ref[...]
    col = lax.broadcasted_iota(jnp.int32, lg.shape, 1)
    lg = jnp.where(col < NUM_LABELS, lg, jnp.float32(NEG_INF))   # kill padded label lanes
    m = jnp.max(lg, axis=-1, keepdims=True)
    lse = m + jnp.log(jnp.sum(jnp.exp(lg - m), axis=-1, keepdims=True))
    nll = jnp.sum(onehot_ref[...] * (lse - lg), axis=-1, keepdims=True)     # (M, 1)
    mean = jnp.sum(nll, axis=0, keepdims=True) / jnp.float32(nll.shape[0])  # (1, 1)
    loss_ref[...] = jnp.broadcast_to(mean, (1, LPAD))   # lane-dense store; host reads [0,0]


# ----------------------------- Pallas wrappers -------------------------------
def _fused_forward(x, bias, p):
    inputs = (x, bias, p["emb_ln_g"], p["emb_ln_b"],
              p["wqkv"], p["bqkv"], p["wo"], p["bo"],
              p["ln1_g"], p["ln1_b"], p["w1"], p["b1"],
              p["w2"], p["b2"], p["ln2_g"], p["ln2_b"],
              p["wc_pad"], p["bc_pad"])
    return pl.pallas_call(
        _bert_forward_kernel,
        out_shape=jax.ShapeDtypeStruct((x.shape[0], LPAD), jnp.float32),
        in_specs=[_VMEM] * len(inputs),
        out_specs=_VMEM,
    )(*inputs)


def _cross_entropy(logits_pad, onehot_pad):
    out = pl.pallas_call(
        _ce_kernel,
        out_shape=jax.ShapeDtypeStruct((1, LPAD), jnp.float32),
        in_specs=[_VMEM, _VMEM],
        out_specs=_VMEM,
    )(logits_pad, onehot_pad)
    return out[0, 0]


# ----------------------------- parameter init --------------------------------
def init_params(key):
    def nrm(k, shape):
        return jax.random.normal(k, shape, dtype=jnp.float32) * 0.02

    ks = iter(jax.random.split(key, 16))
    wc = nrm(next(ks), (HIDDEN, NUM_LABELS))
    wc_pad = jnp.zeros((HIDDEN, LPAD), jnp.float32).at[:, :NUM_LABELS].set(wc)
    return {
        "word_emb": nrm(next(ks), (VOCAB, HIDDEN)),
        "pos_emb": nrm(next(ks), (MAX_POS, HIDDEN)),
        "type_emb": nrm(next(ks), (TYPE_VOCAB, HIDDEN)),
        "emb_ln_g": jnp.ones((1, HIDDEN), jnp.float32),
        "emb_ln_b": jnp.zeros((1, HIDDEN), jnp.float32),
        # packed per-(layer, q/k/v, head) attention weights
        "wqkv": nrm(next(ks), (LAYERS, 3, HEADS, HIDDEN, HEAD_DIM)),
        "bqkv": jnp.zeros((LAYERS, 3, HEADS, 1, HEAD_DIM), jnp.float32),
        "wo": nrm(next(ks), (LAYERS, HEADS, HEAD_DIM, HIDDEN)),
        "bo": jnp.zeros((LAYERS, 1, HIDDEN), jnp.float32),
        "ln1_g": jnp.ones((LAYERS, 1, HIDDEN), jnp.float32),
        "ln1_b": jnp.zeros((LAYERS, 1, HIDDEN), jnp.float32),
        "w1": nrm(next(ks), (LAYERS, HIDDEN, INTERMEDIATE)),
        "b1": jnp.zeros((LAYERS, 1, INTERMEDIATE), jnp.float32),
        "w2": nrm(next(ks), (LAYERS, INTERMEDIATE, HIDDEN)),
        "b2": jnp.zeros((LAYERS, 1, HIDDEN), jnp.float32),
        "ln2_g": jnp.ones((LAYERS, 1, HIDDEN), jnp.float32),
        "ln2_b": jnp.zeros((LAYERS, 1, HIDDEN), jnp.float32),
        "wc_pad": wc_pad,
        "bc_pad": jnp.zeros((1, LPAD), jnp.float32),
    }


# ------------------------------ forward pass ---------------------------------
def bert_class_forward(params, ids, mask, labels=None):
    """Mirrors BERTClass.forward(ids, mask, labels): returns (loss, logits) if
    labels is not None, else logits."""
    B, S = ids.shape
    # Embeddings (gather + adds are host-side JAX glue; all the rest is one fused kernel).
    x = (jnp.take(params["word_emb"], ids, axis=0)
         + params["pos_emb"][None, :S, :]
         + params["type_emb"][0][None, None, :]).reshape(B * S, HIDDEN)

    # Combined additive attention bias over the flattened (B*S) axis:
    #   same batch & valid key  ->      0
    #   same batch & padded key -> -10000 (BERT-style)
    #   different batch         ->  -1e9  (block-diagonal batching inside the kernel)
    key_bias = ((1.0 - mask.astype(jnp.float32)) * -10000.0).reshape(B * S)
    batch_ids = jnp.repeat(jnp.arange(B, dtype=jnp.int32), S)
    same_batch = batch_ids[:, None] == batch_ids[None, :]
    bias = jnp.where(same_batch, key_bias[None, :], jnp.float32(NEG_INF))

    logits_pad = _fused_forward(x, bias, params)               # (B*S, 128) lane-dense
    logits = logits_pad[:, :NUM_LABELS].reshape(B, S, NUM_LABELS)

    if labels is not None:
        # TODO(synk): HF ignores label == -100 positions; here all labels are treated valid.
        onehot = jax.nn.one_hot(labels.reshape(-1), LPAD, dtype=jnp.float32)
        loss = _cross_entropy(logits_pad, onehot)
        return loss, logits
    return logits


# ----------------------------------- main -------------------------------------
if __name__ == "__main__":
    key = jax.random.PRNGKey(0)
    k_param, k_ids, k_lab = jax.random.split(key, 3)

    params = init_params(k_param)
    ids = jax.random.randint(k_ids, (BATCH, SEQ), 0, VOCAB, dtype=jnp.int32)
    mask = jnp.ones((BATCH, SEQ), dtype=jnp.int32).at[:, -2:].set(0)   # some right padding
    labels = jax.random.randint(k_lab, (BATCH, SEQ), 0, NUM_LABELS, dtype=jnp.int32)

    fwd = jax.jit(bert_class_forward)
    loss, logits = fwd(params, ids, mask, labels)
    logits_only = fwd(params, ids, mask)

    jax.block_until_ready((loss, logits, logits_only))
    assert logits.shape == (BATCH, SEQ, NUM_LABELS)
    assert logits_only.shape == (BATCH, SEQ, NUM_LABELS)
    assert bool(jnp.isfinite(loss))
    assert bool(jnp.all(jnp.isfinite(logits)))
    print("KERNEL_OK")
</pallas_src>

<mosaic_0001>
module attributes {stable_mosaic.version = 11 : i64} {
  func.func @_ce_kernel(%arg0: memref<16x128xf32, #tpu.memory_space<vmem>>, %arg1: memref<16x128xf32, #tpu.memory_space<vmem>>, %arg2: memref<1x128xf32, #tpu.memory_space<vmem>>) attributes {dimension_semantics = [], scalar_prefetch = 0 : i64, scratch_operands = 0 : i64, tpu.core_type = #tpu.core_type<tc>} {
    %c0 = arith.constant 0 : index
    %c0_0 = arith.constant 0 : index
    %0 = vector.load %arg0[%c0, %c0_0] : memref<16x128xf32, #tpu.memory_space<vmem>>, vector<16x128xf32>
    %1 = tpu.iota {dimensions = array<i32: 1>} : vector<16x128xi32>
    %c5_i32 = arith.constant 5 : i32
    %2 = vector.broadcast %c5_i32 : i32 to vector<16x128xi32>
    %3 = arith.cmpi slt, %1, %2 : vector<16x128xi32>
    %cst = arith.constant -1.000000e+09 : f32
    %4 = vector.broadcast %cst : f32 to vector<16x128xf32>
    %5 = arith.select %3, %0, %4 : vector<16x128xi1>, vector<16x128xf32>
    %cst_1 = arith.constant dense<0xFF800000> : vector<16xf32>
    %6 = vector.multi_reduction <maximumf>, %5, %cst_1 [1] : vector<16x128xf32> to vector<16xf32>
    %7 = vector.shape_cast %6 : vector<16xf32> to vector<16x1xf32>
    %8 = vector.broadcast %7 : vector<16x1xf32> to vector<16x128xf32>
    %9 = arith.subf %5, %8 : vector<16x128xf32>
    %10 = math.exp %9 : vector<16x128xf32>
    %cst_2 = arith.constant dense<0.000000e+00> : vector<16xf32>
    %11 = vector.multi_reduction <add>, %10, %cst_2 [1] : vector<16x128xf32> to vector<16xf32>
    %12 = vector.shape_cast %11 : vector<16xf32> to vector<16x1xf32>
    %13 = math.log %12 : vector<16x1xf32>
    %14 = arith.addf %7, %13 : vector<16x1xf32>
    %c0_3 = arith.constant 0 : index
    %c0_4 = arith.constant 0 : index
    %15 = vector.load %arg1[%c0_3, %c0_4] : memref<16x128xf32, #tpu.memory_space<vmem>>, vector<16x128xf32>
    %16 = vector.broadcast %14 : vector<16x1xf32> to vector<16x128xf32>
    %17 = arith.subf %16, %5 : vector<16x128xf32>
    %18 = arith.mulf %15, %17 : vector<16x128xf32>
    %cst_5 = arith.constant dense<0.000000e+00> : vector<16xf32>
    %19 = vector.multi_reduction <add>, %18, %cst_5 [1] : vector<16x128xf32> to vector<16xf32>
    %20 = vector.shape_cast %19 : vector<16xf32> to vector<16x1xf32>
    %cst_6 = arith.constant dense<0.000000e+00> : vector<1xf32>
    %21 = vector.multi_reduction <add>, %20, %cst_6 [0] : vector<16x1xf32> to vector<1xf32>
    %22 = vector.shape_cast %21 : vector<1xf32> to vector<1x1xf32>
    %cst_7 = arith.constant 1.600000e+01 : f32
    %23 = vector.broadcast %cst_7 : f32 to vector<1x1xf32>
    %24 = arith.divf %22, %23 : vector<1x1xf32>
    %25 = vector.shape_cast %24 : vector<1x1xf32> to vector<1x1xf32>
    %26 = vector.broadcast %25 : vector<1x1xf32> to vector<1x128xf32>
    %c0_8 = arith.constant 0 : index
    %c0_9 = arith.constant 0 : index
    %27 = vector.load %arg2[%c0_8, %c0_9] : memref<1x128xf32, #tpu.memory_space<vmem>>, vector<1x128xf32>
    tpu.vector_store %arg2[%c0_8, %c0_9], %26 {strides = array<i32>} : memref<1x128xf32, #tpu.memory_space<vmem>>, vector<1x128xf32>,
    return
  }
}

module attributes {stable_mosaic.version = 11 : i64} {
  func.func @_bert_forward_kernel(%arg0: memref<16x32xf32, #tpu.memory_space<vmem>>, %arg1: memref<16x16xf32, #tpu.memory_space<vmem>>, %arg2: memref<1x32xf32, #tpu.memory_space<vmem>>, %arg3: memref<1x32xf32, #tpu.memory_space<vmem>>, %arg4: memref<2x3x2x32x16xf32, #tpu.memory_space<vmem>>, %arg5: memref<2x3x2x1x16xf32, #tpu.memory_space<vmem>>, %arg6: memref<2x2x16x32xf32, #tpu.memory_space<vmem>>, %arg7: memref<2x1x32xf32, #tpu.memory_space<vmem>>, %arg8: memref<2x1x32xf32, #tpu.memory_space<vmem>>, %arg9: memref<2x1x32xf32, #tpu.memory_space<vmem>>, %arg10: memref<2x32x64xf32, #tpu.memory_space<vmem>>, %arg11: memref<2x1x64xf32, #tpu.memory_space<vmem>>, %arg12: memref<2x64x32xf32, #tpu.memory_space<vmem>>, %arg13: memref<2x1x32xf32, #tpu.memory_space<vmem>>, %arg14: memref<2x1x32xf32, #tpu.memory_space<vmem>>, %arg15: memref<2x1x32xf32, #tpu.memory_space<vmem>>, %arg16: memref<32x128xf32, #tpu.memory_space<vmem>>, %arg17: memref<1x128xf32, #tpu.memory_space<vmem>>, %arg18: memref<16x128xf32, #tpu.memory_space<vmem>>) attributes {dimension_semantics = [], scalar_prefetch = 0 : i64, scratch_operands = 0 : i64, tpu.core_type = #tpu.core_type<tc>} {
    %c0 = arith.constant 0 : index
    %c0_0 = arith.constant 0 : index
    %0 = vector.load %arg1[%c0, %c0_0] : memref<16x16xf32, #tpu.memory_space<vmem>>, vector<16x16xf32>
    %c0_1 = arith.constant 0 : index
    %c0_2 = arith.constant 0 : index
    %1 = vector.load %arg0[%c0_1, %c0_2] : memref<16x32xf32, #tpu.memory_space<vmem>>, vector<16x32xf32>
    %c0_3 = arith.constant 0 : index
    %c0_4 = arith.constant 0 : index
    %2 = vector.load %arg2[%c0_3, %c0_4] : memref<1x32xf32, #tpu.memory_space<vmem>>, vector<1x32xf32>
    %c0_5 = arith.constant 0 : index
    %c0_6 = arith.constant 0 : index
    %3 = vector.load %arg3[%c0_5, %c0_6] : memref<1x32xf32, #tpu.memory_space<vmem>>, vector<1x32xf32>
    %cst = arith.constant dense<0.000000e+00> : vector<16xf32>
    %4 = vector.multi_reduction <add>, %1, %cst [1] : vector<16x32xf32> to vector<16xf32>
    %5 = vector.shape_cast %4 : vector<16xf32> to vector<16x1xf32>
    %cst_7 = arith.constant 3.200000e+01 : f32
    %6 = vector.broadcast %cst_7 : f32 to vector<16x1xf32>
    %7 = arith.divf %5, %6 : vector<16x1xf32>
    %8 = vector.broadcast %7 : vector<16x1xf32> to vector<16x32xf32>
    %9 = arith.subf %1, %8 : vector<16x32xf32>
    %10 = arith.mulf %9, %9 : vector<16x32xf32>
    %cst_8 = arith.constant dense<0.000000e+00> : vector<16xf32>
    %11 = vector.multi_reduction <add>, %10, %cst_8 [1] : vector<16x32xf32> to vector<16xf32>
    %12 = vector.shape_cast %11 : vector<16xf32> to vector<16x1xf32>
    %cst_9 = arith.constant 3.200000e+01 : f32
    %13 = vector.broadcast %cst_9 : f32 to vector<16x1xf32>
    %14 = arith.divf %12, %13 : vector<16x1xf32>
    %cst_10 = arith.constant 9.99999996E-13 : f32
    %15 = vector.broadcast %cst_10 : f32 to vector<16x1xf32>
    %16 = arith.addf %14, %15 : vector<16x1xf32>
    %17 = math.rsqrt %16 : vector<16x1xf32>
    %18 = vector.broadcast %17 : vector<16x1xf32> to vector<16x32xf32>
    %19 = arith.mulf %9, %18 : vector<16x32xf32>
    %20 = vector.broadcast %2 : vector<1x32xf32> to vector<16x32xf32>
    %21 = arith.mulf %19, %20 : vector<16x32xf32>
    %22 = vector.broadcast %3 : vector<1x32xf32> to vector<16x32xf32>
    %23 = arith.addf %21, %22 : vector<16x32xf32>
    %cst_11 = arith.constant 0.000000e+00 : f32
    %24 = vector.broadcast %cst_11 : f32 to vector<16x32xf32>
    %c0_12 = arith.constant 0 : index
    %c0_13 = arith.constant 0 : index
    %c0_14 = arith.constant 0 : index
    %c0_15 = arith.constant 0 : index
    %c0_16 = arith.constant 0 : index
    %25 = vector.load %arg4[%c0_12, %c0_13, %c0_14, %c0_15, %c0_16] : memref<2x3x2x32x16xf32, #tpu.memory_space<vmem>>, vector<1x1x1x32x16xf32>
    %26 = vector.shape_cast %25 : vector<1x1x1x32x16xf32> to vector<32x16xf32>
    %cst_17 = arith.constant dense<0.000000e+00> : vector<16x16xf32>
    %27 = tpu.matmul %23, %26, %cst_17 {dimension_numbers = #tpu.dot_dimension_numbers<[1], [0], [0], [1], [0, 0, 1, 1], [], []>} : vector<16x32xf32>, vector<32x16xf32>, vector<16x16xf32> -> vector<16x16xf32>
    %c0_18 = arith.constant 0 : index
    %c0_19 = arith.constant 0 : index
    %c0_20 = arith.constant 0 : index
    %c0_21 = arith.constant 0 : index
    %c0_22 = arith.constant 0 : index
    %28 = vector.load %arg5[%c0_18, %c0_19, %c0_20, %c0_21, %c0_22] : memref<2x3x2x1x16xf32, #tpu.memory_space<vmem>>, vector<1x1x1x1x16xf32>
    %29 = vector.shape_cast %28 : vector<1x1x1x1x16xf32> to vector<1x16xf32>
    %30 = vector.broadcast %29 : vector<1x16xf32> to vector<16x16xf32>
    %31 = arith.addf %27, %30 : vector<16x16xf32>
    %c0_23 = arith.constant 0 : index
    %c1 = arith.constant 1 : index
    %c0_24 = arith.constant 0 : index
    %c0_25 = arith.constant 0 : index
    %c0_26 = arith.constant 0 : index
    %32 = vector.load %arg4[%c0_23, %c1, %c0_24, %c0_25, %c0_26] : memref<2x3x2x32x16xf32, #tpu.memory_space<vmem>>, vector<1x1x1x32x16xf32>
    %33 = vector.shape_cast %32 : vector<1x1x1x32x16xf32> to vector<32x16xf32>
    %cst_27 = arith.constant dense<0.000000e+00> : vector<16x16xf32>
    %34 = tpu.matmul %23, %33, %cst_27 {dimension_numbers = #tpu.dot_dimension_numbers<[1], [0], [0], [1], [0, 0, 1, 1], [], []>} : vector<16x32xf32>, vector<32x16xf32>, vector<16x16xf32> -> vector<16x16xf32>
    %c0_28 = arith.constant 0 : index
    %c1_29 = arith.constant 1 : index
    %c0_30 = arith.constant 0 : index
    %c0_31 = arith.constant 0 : index
    %c0_32 = arith.constant 0 : index
    %35 = vector.load %arg5[%c0_28, %c1_29, %c0_30, %c0_31, %c0_32] : memref<2x3x2x1x16xf32, #tpu.memory_space<vmem>>, vector<1x1x1x1x16xf32>
    %36 = vector.shape_cast %35 : vector<1x1x1x1x16xf32> to vector<1x16xf32>
    %37 = vector.broadcast %36 : vector<1x16xf32> to vector<16x16xf32>
    %38 = arith.addf %34, %37 : vector<16x16xf32>
    %c0_33 = arith.constant 0 : index
    %c2 = arith.constant 2 : index
    %c0_34 = arith.constant 0 : index
    %c0_35 = arith.constant 0 : index
    %c0_36 = arith.constant 0 : index
    %39 = vector.load %arg4[%c0_33, %c2, %c0_34, %c0_35, %c0_36] : memref<2x3x2x32x16xf32, #tpu.memory_space<vmem>>, vector<1x1x1x32x16xf32>
    %40 = vector.shape_cast %39 : vector<1x1x1x32x16xf32> to vector<32x16xf32>
    %cst_37 = arith.constant dense<0.000000e+00> : vector<16x16xf32>
    %41 = tpu.matmul %23, %40, %cst_37 {dimension_numbers = #tpu.dot_dimension_numbers<[1], [0], [0], [1], [0, 0, 1, 1], [], []>} : vector<16x32xf32>, vector<32x16xf32>, vector<16x16xf32> -> vector<16x16xf32>
    %c0_38 = arith.constant 0 : index
    %c2_39 = arith.constant 2 : index
    %c0_40 = arith.constant 0 : index
    %c0_41 = arith.constant 0 : index
    %c0_42 = arith.constant 0 : index
    %42 = vector.load %arg5[%c0_38, %c2_39, %c0_40, %c0_41, %c0_42] : memref<2x3x2x1x16xf32, #tpu.memory_space<vmem>>, vector<1x1x1x1x16xf32>
    %43 = vector.shape_cast %42 : vector<1x1x1x1x16xf32> to vector<1x16xf32>
    %44 = vector.broadcast %43 : vector<1x16xf32> to vector<16x16xf32>
    %45 = arith.addf %41, %44 : vector<16x16xf32>
    %cst_43 = arith.constant dense<0.000000e+00> : vector<16x16xf32>
    %46 = tpu.matmul %31, %38, %cst_43 {dimension_numbers = #tpu.dot_dimension_numbers<[1], [1], [0], [0], [0, 0, 1, 0], [], []>} : vector<16x16xf32>, vector<16x16xf32>, vector<16x16xf32> -> vector<16x16xf32>
    %cst_44 = arith.constant 2.500000e-01 : f32
    %47 = vector.broadcast %cst_44 : f32 to vector<16x16xf32>
    %48 = arith.mulf %46, %47 : vector<16x16xf32>
    %49 = arith.addf %48, %0 : vector<16x16xf32>
    %cst_45 = arith.constant dense<0xFF800000> : vector<16xf32>
    %50 = vector.multi_reduction <maximumf>, %49, %cst_45 [1] : vector<16x16xf32> to vector<16xf32>
    %51 = vector.shape_cast %50 : vector<16xf32> to vector<16x1xf32>
    %52 = vector.broadcast %51 : vector<16x1xf32> to vector<16x16xf32>
    %53 = arith.subf %49, %52 : vector<16x16xf32>
    %54 = math.exp %53 : vector<16x16xf32>
    %cst_46 = arith.constant dense<0.000000e+00> : vector<16xf32>
    %55 = vector.multi_reduction <add>, %54, %cst_46 [1] : vector<16x16xf32> to vector<16xf32>
    %56 = vector.shape_cast %55 : vector<16xf32> to vector<16x1xf32>
    %57 = vector.broadcast %56 : vector<16x1xf32> to vector<16x16xf32>
    %58 = arith.divf %54, %57 : vector<16x16xf32>
    %cst_47 = arith.constant dense<0.000000e+00> : vector<16x16xf32>
    %59 = tpu.matmul %58, %45, %cst_47 {dimension_numbers = #tpu.dot_dimension_numbers<[1], [0], [0], [1], [0, 0, 1, 1], [], []>} : vector<16x16xf32>, vector<16x16xf32>, vector<16x16xf32> -> vector<16x16xf32>
    %c0_48 = arith.constant 0 : index
    %c0_49 = arith.constant 0 : index
    %c0_50 = arith.constant 0 : index
    %c0_51 = arith.constant 0 : index
    %60 = vector.load %arg6[%c0_48, %c0_49, %c0_50, %c0_51] : memref<2x2x16x32xf32, #tpu.memory_space<vmem>>, vector<1x1x16x32xf32>
    %61 = vector.shape_cast %60 : vector<1x1x16x32xf32> to vector<16x32xf32>
    %cst_52 = arith.constant dense<0.000000e+00> : vector<16x32xf32>
    %62 = tpu.matmul %59, %61, %cst_52 {dimension_numbers = #tpu.dot_dimension_numbers<[1], [0], [0], [1], [0, 0, 1, 1], [], []>} : vector<16x16xf32>, vector<16x32xf32>, vector<16x32xf32> -> vector<16x32xf32>
    %63 = arith.addf %24, %62 : vector<16x32xf32>
    %c0_53 = arith.constant 0 : index
    %c0_54 = arith.constant 0 : index
    %c1_55 = arith.constant 1 : index
    %c0_56 = arith.constant 0 : index
    %c0_57 = arith.constant 0 : index
    %64 = vector.load %arg4[%c0_53, %c0_54, %c1_55, %c0_56, %c0_57] : memref<2x3x2x32x16xf32, #tpu.memory_space<vmem>>, vector<1x1x1x32x16xf32>
    %65 = vector.shape_cast %64 : vector<1x1x1x32x16xf32> to vector<32x16xf32>
    %cst_58 = arith.constant dense<0.000000e+00> : vector<16x16xf32>
    %66 = tpu.matmul %23, %65, %cst_58 {dimension_numbers = #tpu.dot_dimension_numbers<[1], [0], [0], [1], [0, 0, 1, 1], [], []>} : vector<16x32xf32>, vector<32x16xf32>, vector<16x16xf32> -> vector<16x16xf32>
    %c0_59 = arith.constant 0 : index
    %c0_60 = arith.constant 0 : index
    %c1_61 = arith.constant 1 : index
    %c0_62 = arith.constant 0 : index
    %c0_63 = arith.constant 0 : index
    %67 = vector.load %arg5[%c0_59, %c0_60, %c1_61, %c0_62, %c0_63] : memref<2x3x2x1x16xf32, #tpu.memory_space<vmem>>, vector<1x1x1x1x16xf32>
    %68 = vector.shape_cast %67 : vector<1x1x1x1x16xf32> to vector<1x16xf32>
    %69 = vector.broadcast %68 : vector<1x16xf32> to vector<16x16xf32>
    %70 = arith.addf %66, %69 : vector<16x16xf32>
    %c0_64 = arith.constant 0 : index
    %c1_65 = arith.constant 1 : index
    %c1_66 = arith.constant 1 : index
    %c0_67 = arith.constant 0 : index
    %c0_68 = arith.constant 0 : index
    %71 = vector.load %arg4[%c0_64, %c1_65, %c1_66, %c0_67, %c0_68] : memref<2x3x2x32x16xf32, #tpu.memory_space<vmem>>, vector<1x1x1x32x16xf32>
    %72 = vector.shape_cast %71 : vector<1x1x1x32x16xf32> to vector<32x16xf32>
    %cst_69 = arith.constant dense<0.000000e+00> : vector<16x16xf32>
    %73 = tpu.matmul %23, %72, %cst_69 {dimension_numbers = #tpu.dot_dimension_numbers<[1], [0], [0], [1], [0, 0, 1, 1], [], []>} : vector<16x32xf32>, vector<32x16xf32>, vector<16x16xf32> -> vector<16x16xf32>
    %c0_70 = arith.constant 0 : index
    %c1_71 = arith.constant 1 : index
    %c1_72 = arith.constant 1 : index
    %c0_73 = arith.constant 0 : index
    %c0_74 = arith.constant 0 : index
    %74 = vector.load %arg5[%c0_70, %c1_71, %c1_72, %c0_73, %c0_74] : memref<2x3x2x1x16xf32, #tpu.memory_space<vmem>>, vector<1x1x1x1x16xf32>
    %75 = vector.shape_cast %74 : vector<1x1x1x1x16xf32> to vector<1x16xf32>
    %76 = vector.broadcast %75 : vector<1x16xf32> to vector<16x16xf32>
    %77 = arith.addf %73, %76 : vector<16x16xf32>
    %c0_75 = arith.constant 0 : index
    %c2_76 = arith.constant 2 : index
    %c1_77 = arith.constant 1 : index
    %c0_78 = arith.constant 0 : index
    %c0_79 = arith.constant 0 : index
    %78 = vector.load %arg4[%c0_75, %c2_76, %c1_77, %c0_78, %c0_79] : memref<2x3x2x32x16xf32, #tpu.memory_space<vmem>>, vector<1x1x1x32x16xf32>
    %79 = vector.shape_cast %78 : vector<1x1x1x32x16xf32> to vector<32x16xf32>
    %cst_80 = arith.constant dense<0.000000e+00> : vector<16x16xf32>
    %80 = tpu.matmul %23, %79, %cst_80 {dimension_numbers = #tpu.dot_dimension_numbers<[1], [0], [0], [1], [0, 0, 1, 1], [], []>} : vector<16x32xf32>, vector<32x16xf32>, vector<16x16xf32> -> vector<16x16xf32>
    %c0_81 = arith.constant 0 : index
    %c2_82 = arith.constant 2 : index
    %c1_83 = arith.constant 1 : index
    %c0_84 = arith.constant 0 : index
    %c0_85 = arith.constant 0 : index
    %81 = vector.load %arg5[%c0_81, %c2_82, %c1_83, %c0_84, %c0_85] : memref<2x3x2x1x16xf32, #tpu.memory_space<vmem>>, vector<1x1x1x1x16xf32>
    %82 = vector.shape_cast %81 : vector<1x1x1x1x16xf32> to vector<1x16xf32>
    %83 = vector.broadcast %82 : vector<1x16xf32> to vector<16x16xf32>
    %84 = arith.addf %80, %83 : vector<16x16xf32>
    %cst_86 = arith.constant dense<0.000000e+00> : vector<16x16xf32>
    %85 = tpu.matmul %70, %77, %cst_86 {dimension_numbers = #tpu.dot_dimension_numbers<[1], [1], [0], [0], [0, 0, 1, 0], [], []>} : vector<16x16xf32>, vector<16x16xf32>, vector<16x16xf32> -> vector<16x16xf32>
    %cst_87 = arith.constant 2.500000e-01 : f32
    %86 = vector.broadcast %cst_87 : f32 to vector<16x16xf32>
    %87 = arith.mulf %85, %86 : vector<16x16xf32>
    %88 = arith.addf %87, %0 : vector<16x16xf32>
    %cst_88 = arith.constant dense<0xFF800000> : vector<16xf32>
    %89 = vector.multi_reduction <maximumf>, %88, %cst_88 [1] : vector<16x16xf32> to vector<16xf32>
    %90 = vector.shape_cast %89 : vector<16xf32> to vector<16x1xf32>
    %91 = vector.broadcast %90 : vector<16x1xf32> to vector<16x16xf32>
    %92 = arith.subf %88, %91 : vector<16x16xf32>
    %93 = math.exp %92 : vector<16x16xf32>
    %cst_89 = arith.constant dense<0.000000e+00> : vector<16xf32>
    %94 = vector.multi_reduction <add>, %93, %cst_89 [1] : vector<16x16xf32> to vector<16xf32>
    %95 = vector.shape_cast %94 : vector<16xf32> to vector<16x1xf32>
    %96 = vector.broadcast %95 : vector<16x1xf32> to vector<16x16xf32>
    %97 = arith.divf %93, %96 : vector<16x16xf32>
    %cst_90 = arith.constant dense<0.000000e+00> : vector<16x16xf32>
    %98 = tpu.matmul %97, %84, %cst_90 {dimension_numbers = #tpu.dot_dimension_numbers<[1], [0], [0], [1], [0, 0, 1, 1], [], []>} : vector<16x16xf32>, vector<16x16xf32>, vector<16x16xf32> -> vector<16x16xf32>
    %c0_91 = arith.constant 0 : index
    %c1_92 = arith.constant 1 : index
    %c0_93 = arith.constant 0 : index
    %c0_94 = arith.constant 0 : index
    %99 = vector.load %arg6[%c0_91, %c1_92, %c0_93, %c0_94] : memref<2x2x16x32xf32, #tpu.memory_space<vmem>>, vector<1x1x16x32xf32>
    %100 = vector.shape_cast %99 : vector<1x1x16x32xf32> to vector<16x32xf32>
    %cst_95 = arith.constant dense<0.000000e+00> : vector<16x32xf32>
    %101 = tpu.matmul %98, %100, %cst_95 {dimension_numbers = #tpu.dot_dimension_numbers<[1], [0], [0], [1], [0, 0, 1, 1], [], []>} : vector<16x16xf32>, vector<16x32xf32>, vector<16x32xf32> -> vector<16x32xf32>
    %102 = arith.addf %63, %101 : vector<16x32xf32>
    %c0_96 = arith.constant 0 : index
    %c0_97 = arith.constant 0 : index
    %c0_98 = arith.constant 0 : index
    %103 = vector.load %arg7[%c0_96, %c0_97, %c0_98] : memref<2x1x32xf32, #tpu.memory_space<vmem>>, vector<1x1x32xf32>
    %104 = vector.shape_cast %103 : vector<1x1x32xf32> to vector<1x32xf32>
    %105 = vector.broadcast %104 : vector<1x32xf32> to vector<16x32xf32>
    %106 = arith.addf %102, %105 : vector<16x32xf32>
    %107 = arith.addf %23, %106 : vector<16x32xf32>
    %c0_99 = arith.constant 0 : index
    %c0_100 = arith.constant 0 : index
    %c0_101 = arith.constant 0 : index
    %108 = vector.load %arg8[%c0_99, %c0_100, %c0_101] : memref<2x1x32xf32, #tpu.memory_space<vmem>>, vector<1x1x32xf32>
    %109 = vector.shape_cast %108 : vector<1x1x32xf32> to vector<1x32xf32>
    %c0_102 = arith.constant 0 : index
    %c0_103 = arith.constant 0 : index
    %c0_104 = arith.constant 0 : index
    %110 = vector.load %arg9[%c0_102, %c0_103, %c0_104] : memref<2x1x32xf32, #tpu.memory_space<vmem>>, vector<1x1x32xf32>
    %111 = vector.shape_cast %110 : vector<1x1x32xf32> to vector<1x32xf32>
    %cst_105 = arith.constant dense<0.000000e+00> : vector<16xf32>
    %112 = vector.multi_reduction <add>, %107, %cst_105 [1] : vector<16x32xf32> to vector<16xf32>
    %113 = vector.shape_cast %112 : vector<16xf32> to vector<16x1xf32>
    %cst_106 = arith.constant 3.200000e+01 : f32
    %114 = vector.broadcast %cst_106 : f32 to vector<16x1xf32>
    %115 = arith.divf %113, %114 : vector<16x1xf32>
    %116 = vector.broadcast %115 : vector<16x1xf32> to vector<16x32xf32>
    %117 = arith.subf %107, %116 : vector<16x32xf32>
    %118 = arith.mulf %117, %117 : vector<16x32xf32>
    %cst_107 = arith.constant dense<0.000000e+00> : vector<16xf32>
    %119 = vector.multi_reduction <add>, %118, %cst_107 [1] : vector<16x32xf32> to vector<16xf32>
    %120 = vector.shape_cast %119 : vector<16xf32> to vector<16x1xf32>
    %cst_108 = arith.constant 3.200000e+01 : f32
    %121 = vector.broadcast %cst_108 : f32 to vector<16x1xf32>
    %122 = arith.divf %120, %121 : vector<16x1xf32>
    %cst_109 = arith.constant 9.99999996E-13 : f32
    %123 = vector.broadcast %cst_109 : f32 to vector<16x1xf32>
    %124 = arith.addf %122, %123 : vector<16x1xf32>
    %125 = math.rsqrt %124 : vector<16x1xf32>
    %126 = vector.broadcast %125 : vector<16x1xf32> to vector<16x32xf32>
    %127 = arith.mulf %117, %126 : vector<16x32xf32>
    %128 = vector.broadcast %109 : vector<1x32xf32> to vector<16x32xf32>
    %129 = arith.mulf %127, %128 : vector<16x32xf32>
    %130 = vector.broadcast %111 : vector<1x32xf32> to vector<16x32xf32>
    %131 = arith.addf %129, %130 : vector<16x32xf32>
    %c0_110 = arith.constant 0 : index
    %c0_111 = arith.constant 0 : index
    %c0_112 = arith.constant 0 : index
    %132 = vector.load %arg10[%c0_110, %c0_111, %c0_112] : memref<2x32x64xf32, #tpu.memory_space<vmem>>, vector<1x32x64xf32>
    %133 = vector.shape_cast %132 : vector<1x32x64xf32> to vector<32x64xf32>
    %cst_113 = arith.constant dense<0.000000e+00> : vector<16x64xf32>
    %134 = tpu.matmul %131, %133, %cst_113 {dimension_numbers = #tpu.dot_dimension_numbers<[1], [0], [0], [1], [0, 0, 1, 1], [], []>} : vector<16x32xf32>, vector<32x64xf32>, vector<16x64xf32> -> vector<16x64xf32>
    %c0_114 = arith.constant 0 : index
    %c0_115 = arith.constant 0 : index
    %c0_116 = arith.constant 0 : index
    %135 = vector.load %arg11[%c0_114, %c0_115, %c0_116] : memref<2x1x64xf32, #tpu.memory_space<vmem>>, vector<1x1x64xf32>
    %136 = vector.shape_cast %135 : vector<1x1x64xf32> to vector<1x64xf32>
    %137 = vector.broadcast %136 : vector<1x64xf32> to vector<16x64xf32>
    %138 = arith.addf %134, %137 : vector<16x64xf32>
    %cst_117 = arith.constant 5.000000e-01 : f32
    %139 = vector.broadcast %cst_117 : f32 to vector<16x64xf32>
    %140 = arith.mulf %139, %138 : vector<16x64xf32>
    %cst_118 = arith.constant 0.707106769 : f32
    %141 = vector.broadcast %cst_118 : f32 to vector<16x64xf32>
    %142 = arith.mulf %138, %141 : vector<16x64xf32>
    %143 = math.erf %142 : vector<16x64xf32>
    %cst_119 = arith.constant 1.000000e+00 : f32
    %144 = vector.broadcast %cst_119 : f32 to vector<16x64xf32>
    %145 = arith.addf %144, %143 : vector<16x64xf32>
    %146 = arith.mulf %140, %145 : vector<16x64xf32>
    %c0_120 = arith.constant 0 : index
    %c0_121 = arith.constant 0 : index
    %c0_122 = arith.constant 0 : index
    %147 = vector.load %arg12[%c0_120, %c0_121, %c0_122] : memref<2x64x32xf32, #tpu.memory_space<vmem>>, vector<1x64x32xf32>
    %148 = vector.shape_cast %147 : vector<1x64x32xf32> to vector<64x32xf32>
    %cst_123 = arith.constant dense<0.000000e+00> : vector<16x32xf32>
    %149 = tpu.matmul %146, %148, %cst_123 {dimension_numbers = #tpu.dot_dimension_numbers<[1], [0], [0], [1], [0, 0, 1, 1], [], []>} : vector<16x64xf32>, vector<64x32xf32>, vector<16x32xf32> -> vector<16x32xf32>
    %c0_124 = arith.constant 0 : index
    %c0_125 = arith.constant 0 : index
    %c0_126 = arith.constant 0 : index
    %150 = vector.load %arg13[%c0_124, %c0_125, %c0_126] : memref<2x1x32xf32, #tpu.memory_space<vmem>>, vector<1x1x32xf32>
    %151 = vector.shape_cast %150 : vector<1x1x32xf32> to vector<1x32xf32>
    %152 = vector.broadcast %151 : vector<1x32xf32> to vector<16x32xf32>
    %153 = arith.addf %149, %152 : vector<16x32xf32>
    %154 = arith.addf %131, %153 : vector<16x32xf32>
    %c0_127 = arith.constant 0 : index
    %c0_128 = arith.constant 0 : index
    %c0_129 = arith.constant 0 : index
    %155 = vector.load %arg14[%c0_127, %c0_128, %c0_129] : memref<2x1x32xf32, #tpu.memory_space<vmem>>, vector<1x1x32xf32>
    %156 = vector.shape_cast %155 : vector<1x1x32xf32> to vector<1x32xf32>
    %c0_130 = arith.constant 0 : index
    %c0_131 = arith.constant 0 : index
    %c0_132 = arith.constant 0 : index
    %157 = vector.load %arg15[%c0_130, %c0_131, %c0_132] : memref<2x1x32xf32, #tpu.memory_space<vmem>>, vector<1x1x32xf32>
    %158 = vector.shape_cast %157 : vector<1x1x32xf32> to vector<1x32xf32>
    %cst_133 = arith.constant dense<0.000000e+00> : vector<16xf32>
    %159 = vector.multi_reduction <add>, %154, %cst_133 [1] : vector<16x32xf32> to vector<16xf32>
    %160 = vector.shape_cast %159 : vector<16xf32> to vector<16x1xf32>
    %cst_134 = arith.constant 3.200000e+01 : f32
    %161 = vector.broadcast %cst_134 : f32 to vector<16x1xf32>
    %162 = arith.divf %160, %161 : vector<16x1xf32>
    %163 = vector.broadcast %162 : vector<16x1xf32> to vector<16x32xf32>
    %164 = arith.subf %154, %163 : vector<16x32xf32>
    %165 = arith.mulf %164, %164 : vector<16x32xf32>
    %cst_135 = arith.constant dense<0.000000e+00> : vector<16xf32>
    %166 = vector.multi_reduction <add>, %165, %cst_135 [1] : vector<16x32xf32> to vector<16xf32>
    %167 = vector.shape_cast %166 : vector<16xf32> to vector<16x1xf32>
    %cst_136 = arith.constant 3.200000e+01 : f32
    %168 = vector.broadcast %cst_136 : f32 to vector<16x1xf32>
    %169 = arith.divf %167, %168 : vector<16x1xf32>
    %cst_137 = arith.constant 9.99999996E-13 : f32
    %170 = vector.broadcast %cst_137 : f32 to vector<16x1xf32>
    %171 = arith.addf %169, %170 : vector<16x1xf32>
    %172 = math.rsqrt %171 : vector<16x1xf32>
    %173 = vector.broadcast %172 : vector<16x1xf32> to vector<16x32xf32>
    %174 = arith.mulf %164, %173 : vector<16x32xf32>
    %175 = vector.broadcast %156 : vector<1x32xf32> to vector<16x32xf32>
    %176 = arith.mulf %174, %175 : vector<16x32xf32>
    %177 = vector.broadcast %158 : vector<1x32xf32> to vector<16x32xf32>
    %178 = arith.addf %176, %177 : vector<16x32xf32>
    %cst_138 = arith.constant 0.000000e+00 : f32
    %179 = vector.broadcast %cst_138 : f32 to vector<16x32xf32>
    %c1_139 = arith.constant 1 : index
    %c0_140 = arith.constant 0 : index
    %c0_141 = arith.constant 0 : index
    %c0_142 = arith.constant 0 : index
    %c0_143 = arith.constant 0 : index
    %180 = vector.load %arg4[%c1_139, %c0_140, %c0_141, %c0_142, %c0_143] : memref<2x3x2x32x16xf32, #tpu.memory_space<vmem>>, vector<1x1x1x32x16xf32>
    %181 = vector.shape_cast %180 : vector<1x1x1x32x16xf32> to vector<32x16xf32>
    %cst_144 = arith.constant dense<0.000000e+00> : vector<16x16xf32>
    %182 = tpu.matmul %178, %181, %cst_144 {dimension_numbers = #tpu.dot_dimension_numbers<[1], [0], [0], [1], [0, 0, 1, 1], [], []>} : vector<16x32xf32>, vector<32x16xf32>, vector<16x16xf32> -> vector<16x16xf32>
    %c1_145 = arith.constant 1 : index
    %c0_146 = arith.constant 0 : index
    %c0_147 = arith.constant 0 : index
    %c0_148 = arith.constant 0 : index
    %c0_149 = arith.constant 0 : index
    %183 = vector.load %arg5[%c1_145, %c0_146, %c0_147, %c0_148, %c0_149] : memref<2x3x2x1x16xf32, #tpu.memory_space<vmem>>, vector<1x1x1x1x16xf32>
    %184 = vector.shape_cast %183 : vector<1x1x1x1x16xf32> to vector<1x16xf32>
    %185 = vector.broadcast %184 : vector<1x16xf32> to vector<16x16xf32>
    %186 = arith.addf %182, %185 : vector<16x16xf32>
    %c1_150 = arith.constant 1 : index
    %c1_151 = arith.constant 1 : index
    %c0_152 = arith.constant 0 : index
    %c0_153 = arith.constant 0 : index
    %c0_154 = arith.constant 0 : index
    %187 = vector.load %arg4[%c1_150, %c1_151, %c0_152, %c0_153, %c0_154] : memref<2x3x2x32x16xf32, #tpu.memory_space<vmem>>, vector<1x1x1x32x16xf32>
    %188 = vector.shape_cast %187 : vector<1x1x1x32x16xf32> to vector<32x16xf32>
    %cst_155 = arith.constant dense<0.000000e+00> : vector<16x16xf32>
    %189 = tpu.matmul %178, %188, %cst_155 {dimension_numbers = #tpu.dot_dimension_numbers<[1], [0], [0], [1], [0, 0, 1, 1], [], []>} : vector<16x32xf32>, vector<32x16xf32>, vector<16x16xf32> -> vector<16x16xf32>
    %c1_156 = arith.constant 1 : index
    %c1_157 = arith.constant 1 : index
    %c0_158 = arith.constant 0 : index
    %c0_159 = arith.constant 0 : index
    %c0_160 = arith.constant 0 : index
    %190 = vector.load %arg5[%c1_156, %c1_157, %c0_158, %c0_159, %c0_160] : memref<2x3x2x1x16xf32, #tpu.memory_space<vmem>>, vector<1x1x1x1x16xf32>
    %191 = vector.shape_cast %190 : vector<1x1x1x1x16xf32> to vector<1x16xf32>
    %192 = vector.broadcast %191 : vector<1x16xf32> to vector<16x16xf32>
    %193 = arith.addf %189, %192 : vector<16x16xf32>
    %c1_161 = arith.constant 1 : index
    %c2_162 = arith.constant 2 : index
    %c0_163 = arith.constant 0 : index
    %c0_164 = arith.constant 0 : index
    %c0_165 = arith.constant 0 : index
    %194 = vector.load %arg4[%c1_161, %c2_162, %c0_163, %c0_164, %c0_165] : memref<2x3x2x32x16xf32, #tpu.memory_space<vmem>>, vector<1x1x1x32x16xf32>
    %195 = vector.shape_cast %194 : vector<1x1x1x32x16xf32> to vector<32x16xf32>
    %cst_166 = arith.constant dense<0.000000e+00> : vector<16x16xf32>
    %196 = tpu.matmul %178, %195, %cst_166 {dimension_numbers = #tpu.dot_dimension_numbers<[1], [0], [0], [1], [0, 0, 1, 1], [], []>} : vector<16x32xf32>, vector<32x16xf32>, vector<16x16xf32> -> vector<16x16xf32>
    %c1_167 = arith.constant 1 : index
    %c2_168 = arith.constant 2 : index
    %c0_169 = arith.constant 0 : index
    %c0_170 = arith.constant 0 : index
    %c0_171 = arith.constant 0 : index
    %197 = vector.load %arg5[%c1_167, %c2_168, %c0_169, %c0_170, %c0_171] : memref<2x3x2x1x16xf32, #tpu.memory_space<vmem>>, vector<1x1x1x1x16xf32>
    %198 = vector.shape_cast %197 : vector<1x1x1x1x16xf32> to vector<1x16xf32>
    %199 = vector.broadcast %198 : vector<1x16xf32> to vector<16x16xf32>
    %200 = arith.addf %196, %199 : vector<16x16xf32>
    %cst_172 = arith.constant dense<0.000000e+00> : vector<16x16xf32>
    %201 = tpu.matmul %186, %193, %cst_172 {dimension_numbers = #tpu.dot_dimension_numbers<[1], [1], [0], [0], [0, 0, 1, 0], [], []>} : vector<16x16xf32>, vector<16x16xf32>, vector<16x16xf32> -> vector<16x16xf32>
    %cst_173 = arith.constant 2.500000e-01 : f32
    %202 = vector.broadcast %cst_173 : f32 to vector<16x16xf32>
    %203 = arith.mulf %201, %202 : vector<16x16xf32>
    %204 = arith.addf %203, %0 : vector<16x16xf32>
    %cst_174 = arith.constant dense<0xFF800000> : vector<16xf32>
    %205 = vector.multi_reduction <maximumf>, %204, %cst_174 [1] : vector<16x16xf32> to vector<16xf32>
    %206 = vector.shape_cast %205 : vector<16xf32> to vector<16x1xf32>
    %207 = vector.broadcast %206 : vector<16x1xf32> to vector<16x16xf32>
    %208 = arith.subf %204, %207 : vector<16x16xf32>
    %209 = math.exp %208 : vector<16x16xf32>
    %cst_175 = arith.constant dense<0.000000e+00> : vector<16xf32>
    %210 = vector.multi_reduction <add>, %209, %cst_175 [1] : vector<16x16xf32> to vector<16xf32>
    %211 = vector.shape_cast %210 : vector<16xf32> to vector<16x1xf32>
    %212 = vector.broadcast %211 : vector<16x1xf32> to vector<16x16xf32>
    %213 = arith.divf %209, %212 : vector<16x16xf32>
    %cst_176 = arith.constant dense<0.000000e+00> : vector<16x16xf32>
    %214 = tpu.matmul %213, %200, %cst_176 {dimension_numbers = #tpu.dot_dimension_numbers<[1], [0], [0], [1], [0, 0, 1, 1], [], []>} : vector<16x16xf32>, vector<16x16xf32>, vector<16x16xf32> -> vector<16x16xf32>
    %c1_177 = arith.constant 1 : index
    %c0_178 = arith.constant 0 : index
    %c0_179 = arith.constant 0 : index
    %c0_180 = arith.constant 0 : index
    %215 = vector.load %arg6[%c1_177, %c0_178, %c0_179, %c0_180] : memref<2x2x16x32xf32, #tpu.memory_space<vmem>>, vector<1x1x16x32xf32>
    %216 = vector.shape_cast %215 : vector<1x1x16x32xf32> to vector<16x32xf32>
    %cst_181 = arith.constant dense<0.000000e+00> : vector<16x32xf32>
    %217 = tpu.matmul %214, %216, %cst_181 {dimension_numbers = #tpu.dot_dimension_numbers<[1], [0], [0], [1], [0, 0, 1, 1], [], []>} : vector<16x16xf32>, vector<16x32xf32>, vector<16x32xf32> -> vector<16x32xf32>
    %218 = arith.addf %179, %217 : vector<16x32xf32>
    %c1_182 = arith.constant 1 : index
    %c0_183 = arith.constant 0 : index
    %c1_184 = arith.constant 1 : index
    %c0_185 = arith.constant 0 : index
    %c0_186 = arith.constant 0 : index
    %219 = vector.load %arg4[%c1_182, %c0_183, %c1_184, %c0_185, %c0_186] : memref<2x3x2x32x16xf32, #tpu.memory_space<vmem>>, vector<1x1x1x32x16xf32>
    %220 = vector.shape_cast %219 : vector<1x1x1x32x16xf32> to vector<32x16xf32>
    %cst_187 = arith.constant dense<0.000000e+00> : vector<16x16xf32>
    %221 = tpu.matmul %178, %220, %cst_187 {dimension_numbers = #tpu.dot_dimension_numbers<[1], [0], [0], [1], [0, 0, 1, 1], [], []>} : vector<16x32xf32>, vector<32x16xf32>, vector<16x16xf32> -> vector<16x16xf32>
    %c1_188 = arith.constant 1 : index
    %c0_189 = arith.constant 0 : index
    %c1_190 = arith.constant 1 : index
    %c0_191 = arith.constant 0 : index
    %c0_192 = arith.constant 0 : index
    %222 = vector.load %arg5[%c1_188, %c0_189, %c1_190, %c0_191, %c0_192] : memref<2x3x2x1x16xf32, #tpu.memory_space<vmem>>, vector<1x1x1x1x16xf32>
    %223 = vector.shape_cast %222 : vector<1x1x1x1x16xf32> to vector<1x16xf32>
    %224 = vector.broadcast %223 : vector<1x16xf32> to vector<16x16xf32>
    %225 = arith.addf %221, %224 : vector<16x16xf32>
    %c1_193 = arith.constant 1 : index
    %c1_194 = arith.constant 1 : index
    %c1_195 = arith.constant 1 : index
    %c0_196 = arith.constant 0 : index
    %c0_197 = arith.constant 0 : index
    %226 = vector.load %arg4[%c1_193, %c1_194, %c1_195, %c0_196, %c0_197] : memref<2x3x2x32x16xf32, #tpu.memory_space<vmem>>, vector<1x1x1x32x16xf32>
    %227 = vector.shape_cast %226 : vector<1x1x1x32x16xf32> to vector<32x16xf32>
    %cst_198 = arith.constant dense<0.000000e+00> : vector<16x16xf32>
    %228 = tpu.matmul %178, %227, %cst_198 {dimension_numbers = #tpu.dot_dimension_numbers<[1], [0], [0], [1], [0, 0, 1, 1], [], []>} : vector<16x32xf32>, vector<32x16xf32>, vector<16x16xf32> -> vector<16x16xf32>
    %c1_199 = arith.constant 1 : index
    %c1_200 = arith.constant 1 : index
    %c1_201 = arith.constant 1 : index
    %c0_202 = arith.constant 0 : index
    %c0_203 = arith.constant 0 : index
    %229 = vector.load %arg5[%c1_199, %c1_200, %c1_201, %c0_202, %c0_203] : memref<2x3x2x1x16xf32, #tpu.memory_space<vmem>>, vector<1x1x1x1x16xf32>
    %230 = vector.shape_cast %229 : vector<1x1x1x1x16xf32> to vector<1x16xf32>
    %231 = vector.broadcast %230 : vector<1x16xf32> to vector<16x16xf32>
    %232 = arith.addf %228, %231 : vector<16x16xf32>
    %c1_204 = arith.constant 1 : index
    %c2_205 = arith.constant 2 : index
    %c1_206 = arith.constant 1 : index
    %c0_207 = arith.constant 0 : index
    %c0_208 = arith.constant 0 : index
    %233 = vector.load %arg4[%c1_204, %c2_205, %c1_206, %c0_207, %c0_208] : memref<2x3x2x32x16xf32, #tpu.memory_space<vmem>>, vector<1x1x1x32x16xf32>
    %234 = vector.shape_cast %233 : vector<1x1x1x32x16xf32> to vector<32x16xf32>
    %cst_209 = arith.constant dense<0.000000e+00> : vector<16x16xf32>
    %235 = tpu.matmul %178, %234, %cst_209 {dimension_numbers = #tpu.dot_dimension_numbers<[1], [0], [0], [1], [0, 0, 1, 1], [], []>} : vector<16x32xf32>, vector<32x16xf32>, vector<16x16xf32> -> vector<16x16xf32>
    %c1_210 = arith.constant 1 : index
    %c2_211 = arith.constant 2 : index
    %c1_212 = arith.constant 1 : index
    %c0_213 = arith.constant 0 : index
    %c0_214 = arith.constant 0 : index
    %236 = vector.load %arg5[%c1_210, %c2_211, %c1_212, %c0_213, %c0_214] : memref<2x3x2x1x16xf32, #tpu.memory_space<vmem>>, vector<1x1x1x1x16xf32>
    %237 = vector.shape_cast %236 : vector<1x1x1x1x16xf32> to vector<1x16xf32>
    %238 = vector.broadcast %237 : vector<1x16xf32> to vector<16x16xf32>
    %239 = arith.addf %235, %238 : vector<16x16xf32>
    %cst_215 = arith.constant dense<0.000000e+00> : vector<16x16xf32>
    %240 = tpu.matmul %225, %232, %cst_215 {dimension_numbers = #tpu.dot_dimension_numbers<[1], [1], [0], [0], [0, 0, 1, 0], [], []>} : vector<16x16xf32>, vector<16x16xf32>, vector<16x16xf32> -> vector<16x16xf32>
    %cst_216 = arith.constant 2.500000e-01 : f32
    %241 = vector.broadcast %cst_216 : f32 to vector<16x16xf32>
    %242 = arith.mulf %240, %241 : vector<16x16xf32>
    %243 = arith.addf %242, %0 : vector<16x16xf32>
    %cst_217 = arith.constant dense<0xFF800000> : vector<16xf32>
    %244 = vector.multi_reduction <maximumf>, %243, %cst_217 [1] : vector<16x16xf32> to vector<16xf32>
    %245 = vector.shape_cast %244 : vector<16xf32> to vector<16x1xf32>
    %246 = vector.broadcast %245 : vector<16x1xf32> to vector<16x16xf32>
    %247 = arith.subf %243, %246 : vector<16x16xf32>
    %248 = math.exp %247 : vector<16x16xf32>
    %cst_218 = arith.constant dense<0.000000e+00> : vector<16xf32>
    %249 = vector.multi_reduction <add>, %248, %cst_218 [1] : vector<16x16xf32> to vector<16xf32>
    %250 = vector.shape_cast %249 : vector<16xf32> to vector<16x1xf32>
    %251 = vector.broadcast %250 : vector<16x1xf32> to vector<16x16xf32>
    %252 = arith.divf %248, %251 : vector<16x16xf32>
    %cst_219 = arith.constant dense<0.000000e+00> : vector<16x16xf32>
    %253 = tpu.matmul %252, %239, %cst_219 {dimension_numbers = #tpu.dot_dimension_numbers<[1], [0], [0], [1], [0, 0, 1, 1], [], []>} : vector<16x16xf32>, vector<16x16xf32>, vector<16x16xf32> -> vector<16x16xf32>
    %c1_220 = arith.constant 1 : index
    %c1_221 = arith.constant 1 : index
    %c0_222 = arith.constant 0 : index
    %c0_223 = arith.constant 0 : index
    %254 = vector.load %arg6[%c1_220, %c1_221, %c0_222, %c0_223] : memref<2x2x16x32xf32, #tpu.memory_space<vmem>>, vector<1x1x16x32xf32>
    %255 = vector.shape_cast %254 : vector<1x1x16x32xf32> to vector<16x32xf32>
    %cst_224 = arith.constant dense<0.000000e+00> : vector<16x32xf32>
    %256 = tpu.matmul %253, %255, %cst_224 {dimension_numbers = #tpu.dot_dimension_numbers<[1], [0], [0], [1], [0, 0, 1, 1], [], []>} : vector<16x16xf32>, vector<16x32xf32>, vector<16x32xf32> -> vector<16x32xf32>
    %257 = arith.addf %218, %256 : vector<16x32xf32>
    %c1_225 = arith.constant 1 : index
    %c0_226 = arith.constant 0 : index
    %c0_227 = arith.constant 0 : index
    %258 = vector.load %arg7[%c1_225, %c0_226, %c0_227] : memref<2x1x32xf32, #tpu.memory_space<vmem>>, vector<1x1x32xf32>
    %259 = vector.shape_cast %258 : vector<1x1x32xf32> to vector<1x32xf32>
    %260 = vector.broadcast %259 : vector<1x32xf32> to vector<16x32xf32>
    %261 = arith.addf %257, %260 : vector<16x32xf32>
    %262 = arith.addf %178, %261 : vector<16x32xf32>
    %c1_228 = arith.constant 1 : index
    %c0_229 = arith.constant 0 : index
    %c0_230 = arith.constant 0 : index
    %263 = vector.load %arg8[%c1_228, %c0_229, %c0_230] : memref<2x1x32xf32, #tpu.memory_space<vmem>>, vector<1x1x32xf32>
    %264 = vector.shape_cast %263 : vector<1x1x32xf32> to vector<1x32xf32>
    %c1_231 = arith.constant 1 : index
    %c0_232 = arith.constant 0 : index
    %c0_233 = arith.constant 0 : index
    %265 = vector.load %arg9[%c1_231, %c0_232, %c0_233] : memref<2x1x32xf32, #tpu.memory_space<vmem>>, vector<1x1x32xf32>
    %266 = vector.shape_cast %265 : vector<1x1x32xf32> to vector<1x32xf32>
    %cst_234 = arith.constant dense<0.000000e+00> : vector<16xf32>
    %267 = vector.multi_reduction <add>, %262, %cst_234 [1] : vector<16x32xf32> to vector<16xf32>
    %268 = vector.shape_cast %267 : vector<16xf32> to vector<16x1xf32>
    %cst_235 = arith.constant 3.200000e+01 : f32
    %269 = vector.broadcast %cst_235 : f32 to vector<16x1xf32>
    %270 = arith.divf %268, %269 : vector<16x1xf32>
    %271 = vector.broadcast %270 : vector<16x1xf32> to vector<16x32xf32>
    %272 = arith.subf %262, %271 : vector<16x32xf32>
    %273 = arith.mulf %272, %272 : vector<16x32xf32>
    %cst_236 = arith.constant dense<0.000000e+00> : vector<16xf32>
    %274 = vector.multi_reduction <add>, %273, %cst_236 [1] : vector<16x32xf32> to vector<16xf32>
    %275 = vector.shape_cast %274 : vector<16xf32> to vector<16x1xf32>
    %cst_237 = arith.constant 3.200000e+01 : f32
    %276 = vector.broadcast %cst_237 : f32 to vector<16x1xf32>
    %277 = arith.divf %275, %276 : vector<16x1xf32>
    %cst_238 = arith.constant 9.99999996E-13 : f32
    %278 = vector.broadcast %cst_238 : f32 to vector<16x1xf32>
    %279 = arith.addf %277, %278 : vector<16x1xf32>
    %280 = math.rsqrt %279 : vector<16x1xf32>
    %281 = vector.broadcast %280 : vector<16x1xf32> to vector<16x32xf32>
    %282 = arith.mulf %272, %281 : vector<16x32xf32>
    %283 = vector.broadcast %264 : vector<1x32xf32> to vector<16x32xf32>
    %284 = arith.mulf %282, %283 : vector<16x32xf32>
    %285 = vector.broadcast %266 : vector<1x32xf32> to vector<16x32xf32>
    %286 = arith.addf %284, %285 : vector<16x32xf32>
    %c1_239 = arith.constant 1 : index
    %c0_240 = arith.constant 0 : index
    %c0_241 = arith.constant 0 : index
    %287 = vector.load %arg10[%c1_239, %c0_240, %c0_241] : memref<2x32x64xf32, #tpu.memory_space<vmem>>, vector<1x32x64xf32>
    %288 = vector.shape_cast %287 : vector<1x32x64xf32> to vector<32x64xf32>
    %cst_242 = arith.constant dense<0.000000e+00> : vector<16x64xf32>
    %289 = tpu.matmul %286, %288, %cst_242 {dimension_numbers = #tpu.dot_dimension_numbers<[1], [0], [0], [1], [0, 0, 1, 1], [], []>} : vector<16x32xf32>, vector<32x64xf32>, vector<16x64xf32> -> vector<16x64xf32>
    %c1_243 = arith.constant 1 : index
    %c0_244 = arith.constant 0 : index
    %c0_245 = arith.constant 0 : index
    %290 = vector.load %arg11[%c1_243, %c0_244, %c0_245] : memref<2x1x64xf32, #tpu.memory_space<vmem>>, vector<1x1x64xf32>
    %291 = vector.shape_cast %290 : vector<1x1x64xf32> to vector<1x64xf32>
    %292 = vector.broadcast %291 : vector<1x64xf32> to vector<16x64xf32>
    %293 = arith.addf %289, %292 : vector<16x64xf32>
    %cst_246 = arith.constant 5.000000e-01 : f32
    %294 = vector.broadcast %cst_246 : f32 to vector<16x64xf32>
    %295 = arith.mulf %294, %293 : vector<16x64xf32>
    %cst_247 = arith.constant 0.707106769 : f32
    %296 = vector.broadcast %cst_247 : f32 to vector<16x64xf32>
    %297 = arith.mulf %293, %296 : vector<16x64xf32>
    %298 = math.erf %297 : vector<16x64xf32>
    %cst_248 = arith.constant 1.000000e+00 : f32
    %299 = vector.broadcast %cst_248 : f32 to vector<16x64xf32>
    %300 = arith.addf %299, %298 : vector<16x64xf32>
    %301 = arith.mulf %295, %300 : vector<16x64xf32>
    %c1_249 = arith.constant 1 : index
    %c0_250 = arith.constant 0 : index
    %c0_251 = arith.constant 0 : index
    %302 = vector.load %arg12[%c1_249, %c0_250, %c0_251] : memref<2x64x32xf32, #tpu.memory_space<vmem>>, vector<1x64x32xf32>
    %303 = vector.shape_cast %302 : vector<1x64x32xf32> to vector<64x32xf32>
    %cst_252 = arith.constant dense<0.000000e+00> : vector<16x32xf32>
    %304 = tpu.matmul %301, %303, %cst_252 {dimension_numbers = #tpu.dot_dimension_numbers<[1], [0], [0], [1], [0, 0, 1, 1], [], []>} : vector<16x64xf32>, vector<64x32xf32>, vector<16x32xf32> -> vector<16x32xf32>
    %c1_253 = arith.constant 1 : index
    %c0_254 = arith.constant 0 : index
    %c0_255 = arith.constant 0 : index
    %305 = vector.load %arg13[%c1_253, %c0_254, %c0_255] : memref<2x1x32xf32, #tpu.memory_space<vmem>>, vector<1x1x32xf32>
    %306 = vector.shape_cast %305 : vector<1x1x32xf32> to vector<1x32xf32>
    %307 = vector.broadcast %306 : vector<1x32xf32> to vector<16x32xf32>
    %308 = arith.addf %304, %307 : vector<16x32xf32>
    %309 = arith.addf %286, %308 : vector<16x32xf32>
    %c1_256 = arith.constant 1 : index
    %c0_257 = arith.constant 0 : index
    %c0_258 = arith.constant 0 : index
    %310 = vector.load %arg14[%c1_256, %c0_257, %c0_258] : memref<2x1x32xf32, #tpu.memory_space<vmem>>, vector<1x1x32xf32>
    %311 = vector.shape_cast %310 : vector<1x1x32xf32> to vector<1x32xf32>
    %c1_259 = arith.constant 1 : index
    %c0_260 = arith.constant 0 : index
    %c0_261 = arith.constant 0 : index
    %312 = vector.load %arg15[%c1_259, %c0_260, %c0_261] : memref<2x1x32xf32, #tpu.memory_space<vmem>>, vector<1x1x32xf32>
    %313 = vector.shape_cast %312 : vector<1x1x32xf32> to vector<1x32xf32>
    %cst_262 = arith.constant dense<0.000000e+00> : vector<16xf32>
    %314 = vector.multi_reduction <add>, %309, %cst_262 [1] : vector<16x32xf32> to vector<16xf32>
    %315 = vector.shape_cast %314 : vector<16xf32> to vector<16x1xf32>
    %cst_263 = arith.constant 3.200000e+01 : f32
    %316 = vector.broadcast %cst_263 : f32 to vector<16x1xf32>
    %317 = arith.divf %315, %316 : vector<16x1xf32>
    %318 = vector.broadcast %317 : vector<16x1xf32> to vector<16x32xf32>
    %319 = arith.subf %309, %318 : vector<16x32xf32>
    %320 = arith.mulf %319, %319 : vector<16x32xf32>
    %cst_264 = arith.constant dense<0.000000e+00> : vector<16xf32>
    %321 = vector.multi_reduction <add>, %320, %cst_264 [1] : vector<16x32xf32> to vector<16xf32>
    %322 = vector.shape_cast %321 : vector<16xf32> to vector<16x1xf32>
    %cst_265 = arith.constant 3.200000e+01 : f32
    %323 = vector.broadcast %cst_265 : f32 to vector<16x1xf32>
    %324 = arith.divf %322, %323 : vector<16x1xf32>
    %cst_266 = arith.constant 9.99999996E-13 : f32
    %325 = vector.broadcast %cst_266 : f32 to vector<16x1xf32>
    %326 = arith.addf %324, %325 : vector<16x1xf32>
    %327 = math.rsqrt %326 : vector<16x1xf32>
    %328 = vector.broadcast %327 : vector<16x1xf32> to vector<16x32xf32>
    %329 = arith.mulf %319, %328 : vector<16x32xf32>
    %330 = vector.broadcast %311 : vector<1x32xf32> to vector<16x32xf32>
    %331 = arith.mulf %329, %330 : vector<16x32xf32>
    %332 = vector.broadcast %313 : vector<1x32xf32> to vector<16x32xf32>
    %333 = arith.addf %331, %332 : vector<16x32xf32>
    %c0_267 = arith.constant 0 : index
    %c0_268 = arith.constant 0 : index
    %334 = vector.load %arg16[%c0_267, %c0_268] : memref<32x128xf32, #tpu.memory_space<vmem>>, vector<32x128xf32>
    %cst_269 = arith.constant dense<0.000000e+00> : vector<16x128xf32>
    %335 = tpu.matmul %333, %334, %cst_269 {dimension_numbers = #tpu.dot_dimension_numbers<[1], [0], [0], [1], [0, 0, 1, 1], [], []>} : vector<16x32xf32>, vector<32x128xf32>, vector<16x128xf32> -> vector<16x128xf32>
    %c0_270 = arith.constant 0 : index
    %c0_271 = arith.constant 0 : index
    %336 = vector.load %arg17[%c0_270, %c0_271] : memref<1x128xf32, #tpu.memory_space<vmem>>, vector<1x128xf32>
    %337 = vector.broadcast %336 : vector<1x128xf32> to vector<16x128xf32>
    %338 = arith.addf %335, %337 : vector<16x128xf32>
    %c0_272 = arith.constant 0 : index
    %c0_273 = arith.constant 0 : index
    %339 = vector.load %arg18[%c0_272, %c0_273] : memref<16x128xf32, #tpu.memory_space<vmem>>, vector<16x128xf32>
    tpu.vector_store %arg18[%c0_272, %c0_273], %338 {strides = array<i32>} : memref<16x128xf32, #tpu.memory_space<vmem>>, vector<16x128xf32>,
    return
  }
}

</mosaic_0001>

<llo_original>
// kernel: bert_class_forward.3
$region0: #{bert_class_forward.3}
  #allocation0 [shape = 'u32[]', space=smem, size = 0x4, offset = 0x4, fixed_abs, tag = 'smem constant byte address 0x4 - core index']
  #allocation1 [shape = 'u32[144,128]{1,0:T(1,128)}', space=vmem, size = 0x12000, scoped, tag = 'internal scratch']
  %s0 = inlined_call_operand.vmem [shape: f32[16,128], index: 0, kind: input, shape index: {}]
  %s1 = inlined_call_operand.vmem [shape: f32[16,128], index: 1, kind: input, shape index: {}]
  %s2 = inlined_call_operand.hbm [shape: f32[1,128], index: 2, kind: output, shape index: {}]
  %s3 = sld [smem:[#allocation0]]
  $region18: #{bert_class_forward.3} parent=0
    _
  %s5 = ssub.s32 1, %s3
  %s6 = scalar_select 0, %s5, %s3
  $region1: #{bert_class_forward.3} parent=0
    #allocation2 [shape = 'u8[512]{0}', space=vmem, size = 0x400, scoped, tag = 'output window, operand 0, single buffered']
    #allocation3 [shape = 's32[1]{0}', space=sflag, size = 0x4, scoped, tag = 'scoped memory for bert_class_forward.3']
    %7 = vsyncpa [#allocation3], 0
    // Predicated region
    $region2: #{bert_class_forward.3} parent=1 // pred_check
      _
    $region3: #{bert_class_forward.3} parent=1 // pred_check_branch
      %9 = sbr.rel (0) target = $region5
    $region4: #{bert_class_forward.3} parent=1 // pred_region
      _
    $region5: #{bert_class_forward.3} parent=1 // pred_fallthru
      _
    // Predicated region
    $region6: #{bert_class_forward.3} parent=1 // pred_check
      _
    $region7: #{bert_class_forward.3} parent=1 // pred_check_branch
      %11 = sbr.rel (0) target = $region9
    $region8: #{bert_class_forward.3} parent=1 // pred_region
      _
    $region9: #{bert_class_forward.3} parent=1 // pred_fallthru
      _
    %v12 = vld [vmem:[%s0] sm:$0xff]
    %v13 = vld [vmem:[%s0 + $0x8] sm:$0xff]
    %v14 = vlaneseq
    %v15 = vand.u32 %v14, 127
    %vm16 = vcmp.lt.s32.totalorder %v15, 5
    %v17 = vsel %vm16, %v12, -1e+09
    %v18 = vsel %vm16, %v13, -1e+09
    %19 = vmax.xlane.f32.xlu0 %v17
    %v20 = vpop.xlane.xlu0 %19
    %21 = vmax.xlane.f32.xlu0 %v18
    %v22 = vpop.xlane.xlu0 %21
    %v23 = vsub.f32 %v17, %v20
    %v24 = vsub.f32 %v18, %v22
    %v25 = vmul.f32 %v23, 1.442695
    %v26 = vpow.pop %v25
    %v27 = vmul.f32 %v24, 1.442695
    %v28 = vpow.pop %v27
    %29 = vadd.xlane.f32.xlu0 %v26
    %v30 = vpop.xlane.xlu0 %29
    %31 = vadd.xlane.f32.xlu0 %v28
    %v32 = vpop.xlane.xlu0 %31
    %v33 = vlog2.pop %v30
    %v34 = vmul.f32 %v33, 0.6931472
    %v35 = vlog2.pop %v32
    %v36 = vmul.f32 %v35, 0.6931472
    %v37 = vadd.f32 %v20, %v34
    %v38 = vadd.f32 %v22, %v36
    %v39 = vld [vmem:[%s1] sm:$0xff]
    %v40 = vld [vmem:[%s1 + $0x8] sm:$0xff]
    %v41 = vsub.f32 %v37, %v17
    %v42 = vsub.f32 %v38, %v18
    %v43 = vmul.f32 %v39, %v41
    %v44 = vmul.f32 %v40, %v42
    %45 = vadd.xlane.f32.xlu0 %v43
    %v46 = vpop.xlane.xlu0 %45
    %47 = vadd.xlane.f32.xlu0 %v44
    %v48 = vpop.xlane.xlu0 %47
    %v49 = vadd.f32 %v46, %v48
    %v50 = vrot.slane %v49, 4
    %v51 = vadd.f32 %v49, %v50
    %v52 = vrot.slane %v51, 2
    %v53 = vadd.f32 %v51, %v52
    %v54 = vrot.slane %v53, 1
    %v55 = vadd.f32 %v53, %v54
    %v56 = vrcp.pop 16.0
    %v57 = vmul.f32 %v55, %v56
    %58 = vst [vmem:[#allocation2] sm:$0x1] %v57
    // Predicated region
    $region10: #{bert_class_forward.3} parent=1 // pred_check
      _
    $region11: #{bert_class_forward.3} parent=1 // pred_check_branch
      %60 = sbr.rel (0) target = $region13
    $region12: #{bert_class_forward.3} parent=1 // pred_region
      %s62 = ssub.s32 16, 16
      %63 = vsyncadd [#allocation3], %s62
      %s65 = sshll.u32 [#allocation2], 4
      %s66 = int_to_ptr.vmem [resolvable:$true] %s65
      %68 = dma.vmem_to_hbm [thread:$0]  %s66, 16, %s2, [#allocation3]
    $region13: #{bert_class_forward.3} parent=1 // pred_fallthru
      _
    // Predicated region
    $region14: #{bert_class_forward.3} parent=1 // pred_check
      _
    $region15: #{bert_class_forward.3} parent=1 // pred_check_branch
      %70 = sbr.rel (0) target = $region17
    $region16: #{bert_class_forward.3} parent=1 // pred_region
      %71 = dma.done [#allocation3], 16
    $region17: #{bert_class_forward.3} parent=1 // pred_fallthru
      _
    %72 = vsyncpa [#allocation3], 1

// kernel: bert_class_forward.2
$region0: #{bert_class_forward.2}
  #allocation0 [shape = 'u32[]', space=smem, size = 0x4, offset = 0x4, fixed_abs, tag = 'smem constant byte address 0x4 - core index']
  #allocation1 [shape = 'u32[144,128]{1,0:T(1,128)}', space=vmem, size = 0x12000, scoped, tag = 'internal scratch']
  %s0 = inlined_call_operand.vmem [shape: f32[16,32], index: 0, kind: input, shape index: {}]
  %s1 = inlined_call_operand.vmem [shape: f32[16,16], index: 1, kind: input, shape index: {}]
  %s2 = inlined_call_operand.vmem [shape: f32[1,32], index: 2, kind: input, shape index: {}]
  %s3 = inlined_call_operand.vmem [shape: f32[1,32], index: 3, kind: input, shape index: {}]
  %s4 = inlined_call_operand.vmem [shape: f32[2,3,2,32,16], index: 4, kind: input, shape index: {}]
  %s5 = inlined_call_operand.vmem [shape: f32[2,3,2,1,16], index: 5, kind: input, shape index: {}]
  %s6 = inlined_call_operand.vmem [shape: f32[2,2,16,32], index: 6, kind: input, shape index: {}]
  %s7 = inlined_call_operand.vmem [shape: f32[2,1,32], index: 7, kind: input, shape index: {}]
  %s8 = inlined_call_operand.vmem [shape: f32[2,1,32], index: 8, kind: input, shape index: {}]
  %s9 = inlined_call_operand.vmem [shape: f32[2,1,32], index: 9, kind: input, shape index: {}]
  %s10 = inlined_call_operand.vmem [shape: f32[2,32,64], index: 10, kind: input, shape index: {}]
  %s11 = inlined_call_operand.vmem [shape: f32[2,1,64], index: 11, kind: input, shape index: {}]
  %s12 = inlined_call_operand.vmem [shape: f32[2,64,32], index: 12, kind: input, shape index: {}]
  %s13 = inlined_call_operand.vmem [shape: f32[2,1,32], index: 13, kind: input, shape index: {}]
  %s14 = inlined_call_operand.vmem [shape: f32[2,1,32], index: 14, kind: input, shape index: {}]
  %s15 = inlined_call_operand.vmem [shape: f32[2,1,32], index: 15, kind: input, shape index: {}]
  %s16 = inlined_call_operand.vmem [shape: f32[32,128], index: 16, kind: input, shape index: {}]
  %s17 = inlined_call_operand.vmem [shape: f32[1,128], index: 17, kind: input, shape index: {}]
  %s18 = inlined_call_operand.vmem [shape: f32[16,128], index: 18, kind: output, shape index: {}]
  %s19 = sld [smem:[#allocation0]]
  $region82: #{bert_class_forward.2} parent=0
    _
  %s21 = ssub.s32 1, %s19
  %s22 = scalar_select 0, %s21, %s19
  // Predicated region
  $region2: #{bert_class_forward.2} parent=0 // pred_check
    _
  $region3: #{bert_class_forward.2} parent=0 // pred_check_branch
    %24 = sbr.rel (0) target = $region5
  $region4: #{bert_class_forward.2} parent=0 // pred_region
    _
  $region5: #{bert_class_forward.2} parent=0 // pred_fallthru
    _
  // Predicated region
  $region6: #{bert_class_forward.2} parent=0 // pred_check
    _
  $region7: #{bert_class_forward.2} parent=0 // pred_check_branch
    %26 = sbr.rel (0) target = $region9
  $region8: #{bert_class_forward.2} parent=0 // pred_region
    _
  $region9: #{bert_class_forward.2} parent=0 // pred_fallthru
    _
  // Predicated region
  $region10: #{bert_class_forward.2} parent=0 // pred_check
    _
  $region11: #{bert_class_forward.2} parent=0 // pred_check_branch
    %28 = sbr.rel (0) target = $region13
  $region12: #{bert_class_forward.2} parent=0 // pred_region
    _
  $region13: #{bert_class_forward.2} parent=0 // pred_fallthru
    _
  // Predicated region
  $region14: #{bert_class_forward.2} parent=0 // pred_check
    _
  $region15: #{bert_class_forward.2} parent=0 // pred_check_branch
    %30 = sbr.rel (0) target = $region17
  $region16: #{bert_class_forward.2} parent=0 // pred_region
    _
  $region17: #{bert_class_forward.2} parent=0 // pred_fallthru
    _
  // Predicated region
  $region18: #{bert_class_forward.2} parent=0 // pred_check
    _
  $region19: #{bert_class_forward.2} parent=0 // pred_check_branch
    %32 = sbr.rel (0) target = $region21
  $region20: #{bert_class_forward.2} parent=0 // pred_region
    _
  $region21: #{bert_class_forward.2} parent=0 // pred_fallthru
    _
  // Predicated region
  $region22: #{bert_class_forward.2} parent=0 // pred_check
    _
  $region23: #{bert_class_forward.2} parent=0 // pred_check_branch
    %34 = sbr.rel (0) target = $region25
  $region24: #{bert_class_forward.2} parent=0 // pred_region
    _
  $region25: #{bert_class_forward.2} parent=0 // pred_fallthru
    _
  // Predicated region
  $region26: #{bert_class_forward.2} parent=0 // pred_check
    _
  $region27: #{bert_class_forward.2} parent=0 // pred_check_branch
    %36 = sbr.rel (0) target = $region29
  $region28: #{bert_class_forward.2} parent=0 // pred_region
    _
  $region29: #{bert_class_forward.2} parent=0 // pred_fallthru
    _
  // Predicated region
  $region30: #{bert_class_forward.2} parent=0 // pred_check
    _
  $region31: #{bert_class_forward.2} parent=0 // pred_check_branch
    %38 = sbr.rel (0) target = $region33
  $region32: #{bert_class_forward.2} parent=0 // pred_region
    _
  $region33: #{bert_class_forward.2} parent=0 // pred_fallthru
    _
  // Predicated region
  $region34: #{bert_class_forward.2} parent=0 // pred_check
    _
  $region35: #{bert_class_forward.2} parent=0 // pred_check_branch
    %40 = sbr.rel (0) target = $region37
  $region36: #{bert_class_forward.2} parent=0 // pred_region
    _
  $region37: #{bert_class_forward.2} parent=0 // pred_fallthru
    _
  // Predicated region
  $region38: #{bert_class_forward.2} parent=0 // pred_check
    _
  $region39: #{bert_class_forward.2} parent=0 // pred_check_branch
    %42 = sbr.rel (0) target = $region41
  $region40: #{bert_class_forward.2} parent=0 // pred_region
    _
  $region41: #{bert_class_forward.2} parent=0 // pred_fallthru
    _
  // Predicated region
  $region42: #{bert_class_forward.2} parent=0 // pred_check
    _
  $region43: #{bert_class_forward.2} parent=0 // pred_check_branch
    %44 = sbr.rel (0) target = $region45
  $region44: #{bert_class_forward.2} parent=0 // pred_region
    _
  $region45: #{bert_class_forward.2} parent=0 // pred_fallthru
    _
  // Predicated region
  $region46: #{bert_class_forward.2} parent=0 // pred_check
    _
  $region47: #{bert_class_forward.2} parent=0 // pred_check_branch
    %46 = sbr.rel (0) target = $region49
  $region48: #{bert_class_forward.2} parent=0 // pred_region
    _
  $region49: #{bert_class_forward.2} parent=0 // pred_fallthru
    _
  // Predicated region
  $region50: #{bert_class_forward.2} parent=0 // pred_check
    _
  $region51: #{bert_class_forward.2} parent=0 // pred_check_branch
    %48 = sbr.rel (0) target = $region53
  $region52: #{bert_class_forward.2} parent=0 // pred_region
    _
  $region53: #{bert_class_forward.2} parent=0 // pred_fallthru
    _
  // Predicated region
  $region54: #{bert_class_forward.2} parent=0 // pred_check
    _
  $region55: #{bert_class_forward.2} parent=0 // pred_check_branch
    %50 = sbr.rel (0) target = $region57
  $region56: #{bert_class_forward.2} parent=0 // pred_region
    _
  $region57: #{bert_class_forward.2} parent=0 // pred_fallthru
    _
  // Predicated region
  $region58: #{bert_class_forward.2} parent=0 // pred_check
    _
  $region59: #{bert_class_forward.2} parent=0 // pred_check_branch
    %52 = sbr.rel (0) target = $region61
  $region60: #{bert_class_forward.2} parent=0 // pred_region
    _
  $region61: #{bert_class_forward.2} parent=0 // pred_fallthru
    _
  // Predicated region
  $region62: #{bert_class_forward.2} parent=0 // pred_check
    _
  $region63: #{bert_class_forward.2} parent=0 // pred_check_branch
    %54 = sbr.rel (0) target = $region65
  $region64: #{bert_class_forward.2} parent=0 // pred_region
    _
  $region65: #{bert_class_forward.2} parent=0 // pred_fallthru
    _
  // Predicated region
  $region66: #{bert_class_forward.2} parent=0 // pred_check
    _
  $region67: #{bert_class_forward.2} parent=0 // pred_check_branch
    %56 = sbr.rel (0) target = $region69
  $region68: #{bert_class_forward.2} parent=0 // pred_region
    _
  $region69: #{bert_class_forward.2} parent=0 // pred_fallthru
    _
  // Predicated region
  $region70: #{bert_class_forward.2} parent=0 // pred_check
    _
  $region71: #{bert_class_forward.2} parent=0 // pred_check_branch
    %58 = sbr.rel (0) target = $region73
  $region72: #{bert_class_forward.2} parent=0 // pred_region
    _
  $region73: #{bert_class_forward.2} parent=0 // pred_fallthru
    _
  %v59 = vld [vmem:[%s1] sm:$0xff]
  %v60 = vld [vmem:[%s1 + $0x8] sm:$0xff]
  %v61 = vld [vmem:[%s0] sm:$0xff]
  %v62 = vld [vmem:[%s0 + $0x8] sm:$0xff]
  %v63 = vld [vmem:[%s2] sm:$0x1]
  %v64 = vld [vmem:[%s3] sm:$0x1]
  %vm65 = vcmask 261120
  %v66 = vsel %vm65, %v61, 0.0
  %67 = vadd.xlane.f32.xlu0 %v66
  %v68 = vpop.xlane.xlu0 %67
  %v69 = vsel %vm65, %v62, 0.0
  %70 = vadd.xlane.f32.xlu0 %v69
  %v71 = vpop.xlane.xlu0 %70
  %v72 = vrcp.pop 32.0
  %v73 = vmul.f32 %v68, %v72
  %v74 = vmul.f32 %v71, %v72
  %v75 = vsub.f32 %v61, %v73
  %v76 = vsub.f32 %v62, %v74
  %v77 = vmul.f32 %v75, %v75
  %v78 = vmul.f32 %v76, %v76
  %v79 = vsel %vm65, %v77, 0.0
  %80 = vadd.xlane.f32.xlu0 %v79
  %v81 = vpop.xlane.xlu0 %80
  %v82 = vsel %vm65, %v78, 0.0
  %83 = vadd.xlane.f32.xlu0 %v82
  %v84 = vpop.xlane.xlu0 %83
  %v85 = vmul.f32 %v81, %v72
  %v86 = vmul.f32 %v84, %v72
  %v87 = vadd.f32 %v85, 1e-12
  %v88 = vadd.f32 %v86, 1e-12
  %v89 = vrsqrt.pop %v87
  %v90 = vrsqrt.pop %v88
  %v91 = vmul.f32 %v75, %v89
  %v92 = vmul.f32 %v76, %v90
  %v94 = vlaneseq
  %v95 = vshrl.u32 %v94, 7
  %v96 = vsub.s32 0, %v95
  %v97 = vrot.slane %v63, %v96
  %v99 = vmul.f32 %v91, %v97
  %v100 = vmul.f32 %v92, %v97
  %v102 = vlaneseq
  %v103 = vshrl.u32 %v102, 7
  %v104 = vsub.s32 0, %v103
  %v105 = vrot.slane %v64, %v104
  %v107 = vadd.f32 %v99, %v105
  %v108 = vadd.f32 %v100, %v105
  %v109 = vld [vmem:[%s4] sm:$0xff]
  %v110 = vld [vmem:[%s4 + $0x8] sm:$0xff]
  %v111 = vld [vmem:[%s4 + $0x10] sm:$0xff]
  %v112 = vld [vmem:[%s4 + $0x18] sm:$0xff]
  %v113 = vld [vmem:[%s5] sm:$0x1]
  %v115 = vlaneseq
  %v116 = vshrl.u32 %v115, 7
  %v117 = vsub.s32 0, %v116
  %v118 = vrot.slane %v113, %v117
  %v121 = vsel %vm65, %v107, 0
  %v124 = vsel %vm65, %v108, 0
  %126 = vmatprep.subr.mxu0 0.0
  %127 = vmatpush1.msra.mxu0 %v109
  %128 = vmatprep.subr.mxu0 0.0
  %129 = vmatpush1.msra.mxu0 %v110
  %130 = vmatprep.subr.mxu0 0.0
  %131 = vmatpush1.msra.mxu0 %v111
  %132 = vmatprep.subr.mxu0 0.0
  %133 = vmatpush1.msra.mxu0 %v112
  %134 = vmatprep.subr.mxu0 0.0
  %135 = vmatpush1.msra.mxu0 0.0
  %136 = vmatprep.subr.mxu0 0.0
  %137 = vmatpush1.msra.mxu0 0.0
  %138 = vmatprep.subr.mxu0 0.0
  %139 = vmatpush1.msra.mxu0 0.0
  %140 = vmatprep.subr.mxu0 0.0
  %141 = vmatpush1.msra.mxu0 0.0
  %142 = vmatprep.subr.mxu0 0.0
  %143 = vmatpush1.msra.mxu0 0.0
  %144 = vmatprep.subr.mxu0 0.0
  %145 = vmatpush1.msra.mxu0 0.0
  %146 = vmatprep.subr.mxu0 0.0
  %147 = vmatpush1.msra.mxu0 0.0
  %148 = vmatprep.subr.mxu0 0.0
  %149 = vmatpush1.msra.mxu0 0.0
  %150 = vmatprep.subr.mxu0 0.0
  %151 = vmatpush1.msra.mxu0 0.0
  %152 = vmatprep.subr.mxu0 0.0
  %153 = vmatpush1.msra.mxu0 0.0
  %154 = vmatprep.subr.mxu0 0.0
  %155 = vmatpush1.msra.mxu0 0.0
  %156 = vmatprep.subr.mxu0 0.0
  %157 = vmatpush1.msra.mxu0 0.0
  %158 = vmatprep.subr.mxu0 0.0
  %159 = vmatpush1.msra.mxu0 0.0
  %160 = vmatprep.subr.mxu0 0.0
  %161 = vmatpush1.msra.mxu0 0.0
  %162 = vmatprep.subr.mxu0 0.0
  %163 = vmatpush1.msra.mxu0 0.0
  %164 = vmatprep.subr.mxu0 0.0
  %165 = vmatpush1.msra.mxu0 0.0
  %166 = vmatprep.subr.mxu0 0.0
  %167 = vmatpush1.msra.mxu0 0.0
  %168 = vmatprep.subr.mxu0 0.0
  %169 = vmatpush1.msra.mxu0 0.0
  %170 = vmatprep.subr.mxu0 0.0
  %171 = vmatpush1.msra.mxu0 0.0
  %172 = vmatprep.subr.mxu0 0.0
  %173 = vmatpush1.msra.mxu0 0.0
  %174 = vmatprep.subr.mxu0 0.0
  %175 = vmatpush1.msra.mxu0 0.0
  %176 = vmatprep.subr.mxu0 0.0
  %177 = vmatpush1.msra.mxu0 0.0
  %178 = vmatprep.subr.mxu0 0.0
  %179 = vmatpush1.msra.mxu0 0.0
  %180 = vmatprep.subr.mxu0 0.0
  %181 = vmatpush1.msra.mxu0 0.0
  %182 = vmatprep.subr.mxu0 0.0
  %183 = vmatpush1.msra.mxu0 0.0
  %184 = vmatprep.subr.mxu0 0.0
  %185 = vmatpush1.msra.mxu0 0.0
  %186 = vmatprep.subr.mxu0 0.0
  %187 = vmatpush1.msra.mxu0 0.0
  %188 = vmatprep.subr.mxu0 0.0
  %189 = vmatpush1.msra.mxu0 0.0
  %190 = vmatprep.mubr.f32.mxu0 0.0
  %191 = vmatmul.mubr.f32.gmra.mrb[0].mxu0 %v121
  %v192 = vpop.f32.mrb[0].mxu0
  %v193 = vadd.f32 %v118, %v192
  %v194 = vpop.f32.mrb[0].mxu0
  %195 = vmatprep.mubr.f32.mxu0 0.0
  %196 = vmatmul.mubr.f32.gmra.mrb[0].mxu0 %v124
  %v197 = vpop.f32.mrb[0].mxu0
  %v198 = vadd.f32 %v118, %v197
  %v199 = vpop.f32.mrb[0].mxu0
  %200 = vdwg.mxu0
  %s201 = scalar_lea.vmem %s4, 64
  %v202 = vld [vmem:[%s201] sm:$0xff]
  %v203 = vld [vmem:[%s201 + $0x8] sm:$0xff]
  %v204 = vld [vmem:[%s201 + $0x10] sm:$0xff]
  %v205 = vld [vmem:[%s201 + $0x18] sm:$0xff]
  %s206 = scalar_lea.vmem %s5, 2
  %v207 = vld [vmem:[%s206] sm:$0x1]
  %v209 = vlaneseq
  %v210 = vshrl.u32 %v209, 7
  %v211 = vsub.s32 0, %v210
  %v212 = vrot.slane %v207, %v211
  %214 = vmatprep.subr.mxu0 0.0
  %215 = vmatpush1.msra.mxu0 %v202
  %216 = vmatprep.subr.mxu0 0.0
  %217 = vmatpush1.msra.mxu0 %v203
  %218 = vmatprep.subr.mxu0 0.0
  %219 = vmatpush1.msra.mxu0 %v204
  %220 = vmatprep.subr.mxu0 0.0
  %221 = vmatpush1.msra.mxu0 %v205
  %222 = vmatprep.subr.mxu0 0.0
  %223 = vmatpush1.msra.mxu0 0.0
  %224 = vmatprep.subr.mxu0 0.0
  %225 = vmatpush1.msra.mxu0 0.0
  %226 = vmatprep.subr.mxu0 0.0
  %227 = vmatpush1.msra.mxu0 0.0
  %228 = vmatprep.subr.mxu0 0.0
  %229 = vmatpush1.msra.mxu0 0.0
  %230 = vmatprep.subr.mxu0 0.0
  %231 = vmatpush1.msra.mxu0 0.0
  %232 = vmatprep.subr.mxu0 0.0
  %233 = vmatpush1.msra.mxu0 0.0
  %234 = vmatprep.subr.mxu0 0.0
  %235 = vmatpush1.msra.mxu0 0.0
  %236 = vmatprep.subr.mxu0 0.0
  %237 = vmatpush1.msra.mxu0 0.0
  %238 = vmatprep.subr.mxu0 0.0
  %239 = vmatpush1.msra.mxu0 0.0
  %240 = vmatprep.subr.mxu0 0.0
  %241 = vmatpush1.msra.mxu0 0.0
  %242 = vmatprep.subr.mxu0 0.0
  %243 = vmatpush1.msra.mxu0 0.0
  %244 = vmatprep.subr.mxu0 0.0
  %245 = vmatpush1.msra.mxu0 0.0
  %246 = vmatprep.subr.mxu0 0.0
  %247 = vmatpush1.msra.mxu0 0.0
  %248 = vmatprep.subr.mxu0 0.0
  %249 = vmatpush1.msra.mxu0 0.0
  %250 = vmatprep.subr.mxu0 0.0
  %251 = vmatpush1.msra.mxu0 0.0
  %252 = vmatprep.subr.mxu0 0.0
  %253 = vmatpush1.msra.mxu0 0.0
  %254 = vmatprep.subr.mxu0 0.0
  %255 = vmatpush1.msra.mxu0 0.0
  %256 = vmatprep.subr.mxu0 0.0
  %257 = vmatpush1.msra.mxu0 0.0
  %258 = vmatprep.subr.mxu0 0.0
  %259 = vmatpush1.msra.mxu0 0.0
  %260 = vmatprep.subr.mxu0 0.0
  %261 = vmatpush1.msra.mxu0 0.0
  %262 = vmatprep.subr.mxu0 0.0
  %263 = vmatpush1.msra.mxu0 0.0
  %264 = vmatprep.subr.mxu0 0.0
  %265 = vmatpush1.msra.mxu0 0.0
  %266 = vmatprep.subr.mxu0 0.0
  %267 = vmatpush1.msra.mxu0 0.0
  %268 = vmatprep.subr.mxu0 0.0
  %269 = vmatpush1.msra.mxu0 0.0
  %270 = vmatprep.subr.mxu0 0.0
  %271 = vmatpush1.msra.mxu0 0.0
  %272 = vmatprep.subr.mxu0 0.0
  %273 = vmatpush1.msra.mxu0 0.0
  %274 = vmatprep.subr.mxu0 0.0
  %275 = vmatpush1.msra.mxu0 0.0
  %276 = vmatprep.subr.mxu0 0.0
  %277 = vmatpush1.msra.mxu0 0.0
  %278 = vmatprep.mubr.f32.mxu0 0.0
  %279 = vmatmul.mubr.f32.gmra.mrb[0].mxu0 %v121
  %v280 = vpop.f32.mrb[0].mxu0
  %v281 = vadd.f32 %v212, %v280
  %v282 = vpop.f32.mrb[0].mxu0
  %283 = vmatprep.mubr.f32.mxu0 0.0
  %284 = vmatmul.mubr.f32.gmra.mrb[0].mxu0 %v124
  %v285 = vpop.f32.mrb[0].mxu0
  %v286 = vadd.f32 %v212, %v285
  %v287 = vpop.f32.mrb[0].mxu0
  %288 = vdwg.mxu0
  %s289 = scalar_lea.vmem %s4, 128
  %v290 = vld [vmem:[%s289] sm:$0xff]
  %v291 = vld [vmem:[%s289 + $0x8] sm:$0xff]
  %v292 = vld [vmem:[%s289 + $0x10] sm:$0xff]
  %v293 = vld [vmem:[%s289 + $0x18] sm:$0xff]
  %s294 = scalar_lea.vmem %s5, 4
  %v295 = vld [vmem:[%s294] sm:$0x1]
  %v297 = vlaneseq
  %v298 = vshrl.u32 %v297, 7
  %v299 = vsub.s32 0, %v298
  %v300 = vrot.slane %v295, %v299
  %302 = vmatprep.subr.mxu0 0.0
  %303 = vmatpush1.msra.mxu0 %v290
  %304 = vmatprep.subr.mxu0 0.0
  %305 = vmatpush1.msra.mxu0 %v291
  %306 = vmatprep.subr.mxu0 0.0
  %307 = vmatpush1.msra.mxu0 %v292
  %308 = vmatprep.subr.mxu0 0.0
  %309 = vmatpush1.msra.mxu0 %v293
  %310 = vmatprep.subr.mxu0 0.0
  %311 = vmatpush1.msra.mxu0 0.0
  %312 = vmatprep.subr.mxu0 0.0
  %313 = vmatpush1.msra.mxu0 0.0
  %314 = vmatprep.subr.mxu0 0.0
  %315 = vmatpush1.msra.mxu0 0.0
  %316 = vmatprep.subr.mxu0 0.0
  %317 = vmatpush1.msra.mxu0 0.0
  %318 = vmatprep.subr.mxu0 0.0
  %319 = vmatpush1.msra.mxu0 0.0
  %320 = vmatprep.subr.mxu0 0.0
  %321 = vmatpush1.msra.mxu0 0.0
  %322 = vmatprep.subr.mxu0 0.0
  %323 = vmatpush1.msra.mxu0 0.0
  %324 = vmatprep.subr.mxu0 0.0
  %325 = vmatpush1.msra.mxu0 0.0
  %326 = vmatprep.subr.mxu0 0.0
  %327 = vmatpush1.msra.mxu0 0.0
  %328 = vmatprep.subr.mxu0 0.0
  %329 = vmatpush1.msra.mxu0 0.0
  %330 = vmatprep.subr.mxu0 0.0
  %331 = vmatpush1.msra.mxu0 0.0
  %332 = vmatprep.subr.mxu0 0.0
  %333 = vmatpush1.msra.mxu0 0.0
  %334 = vmatprep.subr.mxu0 0.0
  %335 = vmatpush1.msra.mxu0 0.0
  %336 = vmatprep.subr.mxu0 0.0
  %337 = vmatpush1.msra.mxu0 0.0
  %338 = vmatprep.subr.mxu0 0.0
  %339 = vmatpush1.msra.mxu0 0.0
  %340 = vmatprep.subr.mxu0 0.0
  %341 = vmatpush1.msra.mxu0 0.0
  %342 = vmatprep.subr.mxu0 0.0
  %343 = vmatpush1.msra.mxu0 0.0
  %344 = vmatprep.subr.mxu0 0.0
  %345 = vmatpush1.msra.mxu0 0.0
  %346 = vmatprep.subr.mxu0 0.0
  %347 = vmatpush1.msra.mxu0 0.0
  %348 = vmatprep.subr.mxu0 0.0
  %349 = vmatpush1.msra.mxu0 0.0
  %350 = vmatprep.subr.mxu0 0.0
  %351 = vmatpush1.msra.mxu0 0.0
  %352 = vmatprep.subr.mxu0 0.0
  %353 = vmatpush1.msra.mxu0 0.0
  %354 = vmatprep.subr.mxu0 0.0
  %355 = vmatpush1.msra.mxu0 0.0
  %356 = vmatprep.subr.mxu0 0.0
  %357 = vmatpush1.msra.mxu0 0.0
  %358 = vmatprep.subr.mxu0 0.0
  %359 = vmatpush1.msra.mxu0 0.0
  %360 = vmatprep.subr.mxu0 0.0
  %361 = vmatpush1.msra.mxu0 0.0
  %362 = vmatprep.subr.mxu0 0.0
  %363 = vmatpush1.msra.mxu0 0.0
  %364 = vmatprep.subr.mxu0 0.0
  %365 = vmatpush1.msra.mxu0 0.0
  %366 = vmatprep.mubr.f32.mxu0 0.0
  %367 = vmatmul.mubr.f32.gmra.mrb[0].mxu0 %v121
  %v368 = vpop.f32.mrb[0].mxu0
  %v369 = vadd.f32 %v300, %v368
  %v370 = vpop.f32.mrb[0].mxu0
  %371 = vmatprep.mubr.f32.mxu0 0.0
  %372 = vmatmul.mubr.f32.gmra.mrb[0].mxu0 %v124
  %v373 = vpop.f32.mrb[0].mxu0
  %v374 = vadd.f32 %v300, %v373
  %v375 = vpop.f32.mrb[0].mxu0
  %376 = vdwg.mxu0
  %vm377 = vcmask 130048
  %v379 = vsel %vm377, %v193, 0
  %v382 = vsel %vm377, %v198, 0
  %v385 = vsel %vm377, %v281, 0
  %v388 = vsel %vm377, %v286, 0
  %390 = vmatprep.subr.mxu0 0.0
  %391 = vmatpush1.xpose.msra.mxu0 %v385
  %392 = vmatprep.subr.mxu0 0.0
  %393 = vmatpush1.xpose.msra.mxu0 %v388
  %394 = vmatprep.subr.mxu0 0.0
  %395 = vmatpush1.xpose.msra.mxu0 0.0
  %396 = vmatprep.subr.mxu0 0.0
  %397 = vmatpush1.xpose.msra.mxu0 0.0
  %398 = vmatprep.subr.mxu0 0.0
  %399 = vmatpush1.xpose.msra.mxu0 0.0
  %400 = vmatprep.subr.mxu0 0.0
  %401 = vmatpush1.xpose.msra.mxu0 0.0
  %402 = vmatprep.subr.mxu0 0.0
  %403 = vmatpush1.xpose.msra.mxu0 0.0
  %404 = vmatprep.subr.mxu0 0.0
  %405 = vmatpush1.xpose.msra.mxu0 0.0
  %406 = vmatprep.subr.mxu0 0.0
  %407 = vmatpush1.xpose.msra.mxu0 0.0
  %408 = vmatprep.subr.mxu0 0.0
  %409 = vmatpush1.xpose.msra.mxu0 0.0
  %410 = vmatprep.subr.mxu0 0.0
  %411 = vmatpush1.xpose.msra.mxu0 0.0
  %412 = vmatprep.subr.mxu0 0.0
  %413 = vmatpush1.xpose.msra.mxu0 0.0
  %414 = vmatprep.subr.mxu0 0.0
  %415 = vmatpush1.xpose.msra.mxu0 0.0
  %416 = vmatprep.subr.mxu0 0.0
  %417 = vmatpush1.xpose.msra.mxu0 0.0
  %418 = vmatprep.subr.mxu0 0.0
  %419 = vmatpush1.xpose.msra.mxu0 0.0
  %420 = vmatprep.subr.mxu0 0.0
  %421 = vmatpush1.xpose.msra.mxu0 0.0
  %422 = vmatprep.subr.mxu0 0.0
  %423 = vmatpush1.xpose.msra.mxu0 0.0
  %424 = vmatprep.subr.mxu0 0.0
  %425 = vmatpush1.xpose.msra.mxu0 0.0
  %426 = vmatprep.subr.mxu0 0.0
  %427 = vmatpush1.xpose.msra.mxu0 0.0
  %428 = vmatprep.subr.mxu0 0.0
  %429 = vmatpush1.xpose.msra.mxu0 0.0
  %430 = vmatprep.subr.mxu0 0.0
  %431 = vmatpush1.xpose.msra.mxu0 0.0
  %432 = vmatprep.subr.mxu0 0.0
  %433 = vmatpush1.xpose.msra.mxu0 0.0
  %434 = vmatprep.subr.mxu0 0.0
  %435 = vmatpush1.xpose.msra.mxu0 0.0
  %436 = vmatprep.subr.mxu0 0.0
  %437 = vmatpush1.xpose.msra.mxu0 0.0
  %438 = vmatprep.subr.mxu0 0.0
  %439 = vmatpush1.xpose.msra.mxu0 0.0
  %440 = vmatprep.subr.mxu0 0.0
  %441 = vmatpush1.xpose.msra.mxu0 0.0
  %442 = vmatprep.subr.mxu0 0.0
  %443 = vmatpush1.xpose.msra.mxu0 0.0
  %444 = vmatprep.subr.mxu0 0.0
  %445 = vmatpush1.xpose.msra.mxu0 0.0
  %446 = vmatprep.subr.mxu0 0.0
  %447 = vmatpush1.xpose.msra.mxu0 0.0
  %448 = vmatprep.subr.mxu0 0.0
  %449 = vmatpush1.xpose.msra.mxu0 0.0
  %450 = vmatprep.subr.mxu0 0.0
  %451 = vmatpush1.xpose.msra.mxu0 0.0
  %452 = vmatprep.subr.mxu0 0.0
  %453 = vmatpush1.xpose.msra.mxu0 0.0
  %454 = vmatprep.mubr.f32.mxu0 0.0
  %455 = vmatmul.mubr.f32.gmra.mrb[0].mxu0 %v379
  %v456 = vpop.f32.mrb[0].mxu0
  %v457 = vadd.f32 0.0, %v456
  %v458 = vpop.f32.mrb[0].mxu0
  %459 = vmatprep.mubr.f32.mxu0 0.0
  %460 = vmatmul.mubr.f32.gmra.mrb[0].mxu0 %v382
  %v461 = vpop.f32.mrb[0].mxu0
  %v462 = vadd.f32 0.0, %v461
  %v463 = vpop.f32.mrb[0].mxu0
  %464 = vdwg.mxu0
  %v465 = vmul.f32 %v457, 0.25
  %v466 = vmul.f32 %v462, 0.25
  %v467 = vadd.f32 %v465, %v59
  %v468 = vadd.f32 %v466, %v60
  %v469 = vsel %vm377, %v467, -inf
  %470 = vmax.xlane.f32.xlu0 %v469
  %v471 = vpop.xlane.xlu0 %470
  %v472 = vsel %vm377, %v468, -inf
  %473 = vmax.xlane.f32.xlu0 %v472
  %v474 = vpop.xlane.xlu0 %473
  %v475 = vsub.f32 %v467, %v471
  %v476 = vsub.f32 %v468, %v474
  %v477 = vmul.f32 %v475, 1.442695
  %v478 = vpow.pop %v477
  %v479 = vmul.f32 %v476, 1.442695
  %v480 = vpow.pop %v479
  %v481 = vsel %vm377, %v478, 0.0
  %482 = vadd.xlane.f32.xlu0 %v481
  %v483 = vpop.xlane.xlu0 %482
  %v484 = vsel %vm377, %v480, 0.0
  %485 = vadd.xlane.f32.xlu0 %v484
  %v486 = vpop.xlane.xlu0 %485
  %v487 = vrcp.pop %v483
  %v488 = vmul.f32 %v478, %v487
  %v489 = vrcp.pop %v486
  %v490 = vmul.f32 %v480, %v489
  %v492 = vsel %vm377, %v488, 0
  %v495 = vsel %vm377, %v490, 0
  %497 = vmatprep.subr.mxu0 0.0
  %498 = vmatpush1.msra.mxu0 %v369
  %499 = vmatprep.subr.mxu0 0.0
  %500 = vmatpush1.msra.mxu0 %v374
  %501 = vmatprep.subr.mxu0 0.0
  %502 = vmatpush1.msra.mxu0 0.0
  %503 = vmatprep.subr.mxu0 0.0
  %504 = vmatpush1.msra.mxu0 0.0
  %505 = vmatprep.subr.mxu0 0.0
  %506 = vmatpush1.msra.mxu0 0.0
  %507 = vmatprep.subr.mxu0 0.0
  %508 = vmatpush1.msra.mxu0 0.0
  %509 = vmatprep.subr.mxu0 0.0
  %510 = vmatpush1.msra.mxu0 0.0
  %511 = vmatprep.subr.mxu0 0.0
  %512 = vmatpush1.msra.mxu0 0.0
  %513 = vmatprep.subr.mxu0 0.0
  %514 = vmatpush1.msra.mxu0 0.0
  %515 = vmatprep.subr.mxu0 0.0
  %516 = vmatpush1.msra.mxu0 0.0
  %517 = vmatprep.subr.mxu0 0.0
  %518 = vmatpush1.msra.mxu0 0.0
  %519 = vmatprep.subr.mxu0 0.0
  %520 = vmatpush1.msra.mxu0 0.0
  %521 = vmatprep.subr.mxu0 0.0
  %522 = vmatpush1.msra.mxu0 0.0
  %523 = vmatprep.subr.mxu0 0.0
  %524 = vmatpush1.msra.mxu0 0.0
  %525 = vmatprep.subr.mxu0 0.0
  %526 = vmatpush1.msra.mxu0 0.0
  %527 = vmatprep.subr.mxu0 0.0
  %528 = vmatpush1.msra.mxu0 0.0
  %529 = vmatprep.subr.mxu0 0.0
  %530 = vmatpush1.msra.mxu0 0.0
  %531 = vmatprep.subr.mxu0 0.0
  %532 = vmatpush1.msra.mxu0 0.0
  %533 = vmatprep.subr.mxu0 0.0
  %534 = vmatpush1.msra.mxu0 0.0
  %535 = vmatprep.subr.mxu0 0.0
  %536 = vmatpush1.msra.mxu0 0.0
  %537 = vmatprep.subr.mxu0 0.0
  %538 = vmatpush1.msra.mxu0 0.0
  %539 = vmatprep.subr.mxu0 0.0
  %540 = vmatpush1.msra.mxu0 0.0
  %541 = vmatprep.subr.mxu0 0.0
  %542 = vmatpush1.msra.mxu0 0.0
  %543 = vmatprep.subr.mxu0 0.0
  %544 = vmatpush1.msra.mxu0 0.0
  %545 = vmatprep.subr.mxu0 0.0
  %546 = vmatpush1.msra.mxu0 0.0
  %547 = vmatprep.subr.mxu0 0.0
  %548 = vmatpush1.msra.mxu0 0.0
  %549 = vmatprep.subr.mxu0 0.0
  %550 = vmatpush1.msra.mxu0 0.0
  %551 = vmatprep.subr.mxu0 0.0
  %552 = vmatpush1.msra.mxu0 0.0
  %553 = vmatprep.subr.mxu0 0.0
  %554 = vmatpush1.msra.mxu0 0.0
  %555 = vmatprep.subr.mxu0 0.0
  %556 = vmatpush1.msra.mxu0 0.0
  %557 = vmatprep.subr.mxu0 0.0
  %558 = vmatpush1.msra.mxu0 0.0
  %559 = vmatprep.subr.mxu0 0.0
  %560 = vmatpush1.msra.mxu0 0.0
  %561 = vmatprep.mubr.f32.mxu0 0.0
  %562 = vmatmul.mubr.f32.gmra.mrb[0].mxu0 %v492
  %v563 = vpop.f32.mrb[0].mxu0
  %v564 = vadd.f32 0.0, %v563
  %v565 = vpop.f32.mrb[0].mxu0
  %566 = vmatprep.mubr.f32.mxu0 0.0
  %567 = vmatmul.mubr.f32.gmra.mrb[0].mxu0 %v495
  %v568 = vpop.f32.mrb[0].mxu0
  %v569 = vadd.f32 0.0, %v568
  %v570 = vpop.f32.mrb[0].mxu0
  %571 = vdwg.mxu0
  %v572 = vld [vmem:[%s6] sm:$0xff]
  %v573 = vld [vmem:[%s6 + $0x8] sm:$0xff]
  %s574 = scalar_lea.vmem %s4, 32
  %v575 = vld [vmem:[%s574] sm:$0xff]
  %v576 = vld [vmem:[%s574 + $0x8] sm:$0xff]
  %v577 = vld [vmem:[%s574 + $0x10] sm:$0xff]
  %v578 = vld [vmem:[%s574 + $0x18] sm:$0xff]
  %s579 = scalar_lea.vmem %s5, 1
  %v580 = vld [vmem:[%s579] sm:$0x1]
  %v582 = vlaneseq
  %v583 = vshrl.u32 %v582, 7
  %v584 = vsub.s32 0, %v583
  %v585 = vrot.slane %v580, %v584
  %587 = vmatprep.subr.mxu0 0.0
  %588 = vmatpush1.msra.mxu0 %v575
  %589 = vmatprep.subr.mxu0 0.0
  %590 = vmatpush1.msra.mxu0 %v576
  %591 = vmatprep.subr.mxu0 0.0
  %592 = vmatpush1.msra.mxu0 %v577
  %593 = vmatprep.subr.mxu0 0.0
  %594 = vmatpush1.msra.mxu0 %v578
  %595 = vmatprep.subr.mxu0 0.0
  %596 = vmatpush1.msra.mxu0 0.0
  %597 = vmatprep.subr.mxu0 0.0
  %598 = vmatpush1.msra.mxu0 0.0
  %599 = vmatprep.subr.mxu0 0.0
  %600 = vmatpush1.msra.mxu0 0.0
  %601 = vmatprep.subr.mxu0 0.0
  %602 = vmatpush1.msra.mxu0 0.0
  %603 = vmatprep.subr.mxu0 0.0
  %604 = vmatpush1.msra.mxu0 0.0
  %605 = vmatprep.subr.mxu0 0.0
  %606 = vmatpush1.msra.mxu0 0.0
  %607 = vmatprep.subr.mxu0 0.0
  %608 = vmatpush1.msra.mxu0 0.0
  %609 = vmatprep.subr.mxu0 0.0
  %610 = vmatpush1.msra.mxu0 0.0
  %611 = vmatprep.subr.mxu0 0.0
  %612 = vmatpush1.msra.mxu0 0.0
  %613 = vmatprep.subr.mxu0 0.0
  %614 = vmatpush1.msra.mxu0 0.0
  %615 = vmatprep.subr.mxu0 0.0
  %616 = vmatpush1.msra.mxu0 0.0
  %617 = vmatprep.subr.mxu0 0.0
  %618 = vmatpush1.msra.mxu0 0.0
  %619 = vmatprep.subr.mxu0 0.0
  %620 = vmatpush1.msra.mxu0 0.0
  %621 = vmatprep.subr.mxu0 0.0
  %622 = vmatpush1.msra.mxu0 0.0
  %623 = vmatprep.subr.mxu0 0.0
  %624 = vmatpush1.msra.mxu0 0.0
  %625 = vmatprep.subr.mxu0 0.0
  %626 = vmatpush1.msra.mxu0 0.0
  %627 = vmatprep.subr.mxu0 0.0
  %628 = vmatpush1.msra.mxu0 0.0
  %629 = vmatprep.subr.mxu0 0.0
  %630 = vmatpush1.msra.mxu0 0.0
  %631 = vmatprep.subr.mxu0 0.0
  %632 = vmatpush1.msra.mxu0 0.0
  %633 = vmatprep.subr.mxu0 0.0
  %634 = vmatpush1.msra.mxu0 0.0
  %635 = vmatprep.subr.mxu0 0.0
  %636 = vmatpush1.msra.mxu0 0.0
  %637 = vmatprep.subr.mxu0 0.0
  %638 = vmatpush1.msra.mxu0 0.0
  %639 = vmatprep.subr.mxu0 0.0
  %640 = vmatpush1.msra.mxu0 0.0
  %641 = vmatprep.subr.mxu0 0.0
  %642 = vmatpush1.msra.mxu0 0.0
  %643 = vmatprep.subr.mxu0 0.0
  %644 = vmatpush1.msra.mxu0 0.0
  %645 = vmatprep.subr.mxu0 0.0
  %646 = vmatpush1.msra.mxu0 0.0
  %647 = vmatprep.subr.mxu0 0.0
  %648 = vmatpush1.msra.mxu0 0.0
  %649 = vmatprep.subr.mxu0 0.0
  %650 = vmatpush1.msra.mxu0 0.0
  %651 = vmatprep.mubr.f32.mxu0 0.0
  %652 = vmatmul.mubr.f32.gmra.mrb[0].mxu0 %v121
  %v653 = vpop.f32.mrb[0].mxu0
  %v654 = vadd.f32 %v585, %v653
  %v655 = vpop.f32.mrb[0].mxu0
  %656 = vmatprep.mubr.f32.mxu0 0.0
  %657 = vmatmul.mubr.f32.gmra.mrb[0].mxu0 %v124
  %v658 = vpop.f32.mrb[0].mxu0
  %v659 = vadd.f32 %v585, %v658
  %v660 = vpop.f32.mrb[0].mxu0
  %661 = vdwg.mxu0
  %s662 = scalar_lea.vmem %s4, 96
  %v663 = vld [vmem:[%s662] sm:$0xff]
  %v664 = vld [vmem:[%s662 + $0x8] sm:$0xff]
  %v665 = vld [vmem:[%s662 + $0x10] sm:$0xff]
  %v666 = vld [vmem:[%s662 + $0x18] sm:$0xff]
  %s667 = scalar_lea.vmem %s5, 3
  %v668 = vld [vmem:[%s667] sm:$0x1]
  %v670 = vlaneseq
  %v671 = vshrl.u32 %v670, 7
  %v672 = vsub.s32 0, %v671
  %v673 = vrot.slane %v668, %v672
  %675 = vmatprep.subr.mxu0 0.0
  %676 = vmatpush1.msra.mxu0 %v663
  %677 = vmatprep.subr.mxu0 0.0
  %678 = vmatpush1.msra.mxu0 %v664
  %679 = vmatprep.subr.mxu0 0.0
  %680 = vmatpush1.msra.mxu0 %v665
  %681 = vmatprep.subr.mxu0 0.0
  %682 = vmatpush1.msra.mxu0 %v666
  %683 = vmatprep.subr.mxu0 0.0
  %684 = vmatpush1.msra.mxu0 0.0
  %685 = vmatprep.subr.mxu0 0.0
  %686 = vmatpush1.msra.mxu0 0.0
  %687 = vmatprep.subr.mxu0 0.0
  %688 = vmatpush1.msra.mxu0 0.0
  %689 = vmatprep.subr.mxu0 0.0
  %690 = vmatpush1.msra.mxu0 0.0
  %691 = vmatprep.subr.mxu0 0.0
  %692 = vmatpush1.msra.mxu0 0.0
  %693 = vmatprep.subr.mxu0 0.0
  %694 = vmatpush1.msra.mxu0 0.0
  %695 = vmatprep.subr.mxu0 0.0
  %696 = vmatpush1.msra.mxu0 0.0
  %697 = vmatprep.subr.mxu0 0.0
  %698 = vmatpush1.msra.mxu0 0.0
  %699 = vmatprep.subr.mxu0 0.0
  %700 = vmatpush1.msra.mxu0 0.0
  %701 = vmatprep.subr.mxu0 0.0
  %702 = vmatpush1.msra.mxu0 0.0
  %703 = vmatprep.subr.mxu0 0.0
  %704 = vmatpush1.msra.mxu0 0.0
  %705 = vmatprep.subr.mxu0 0.0
  %706 = vmatpush1.msra.mxu0 0.0
  %707 = vmatprep.subr.mxu0 0.0
  %708 = vmatpush1.msra.mxu0 0.0
  %709 = vmatprep.subr.mxu0 0.0
  %710 = vmatpush1.msra.mxu0 0.0
  %711 = vmatprep.subr.mxu0 0.0
  %712 = vmatpush1.msra.mxu0 0.0
  %713 = vmatprep.subr.mxu0 0.0
  %714 = vmatpush1.msra.mxu0 0.0
  %715 = vmatprep.subr.mxu0 0.0
  %716 = vmatpush1.msra.mxu0 0.0
  %717 = vmatprep.subr.mxu0 0.0
  %718 = vmatpush1.msra.mxu0 0.0
  %719 = vmatprep.subr.mxu0 0.0
  %720 = vmatpush1.msra.mxu0 0.0
  %721 = vmatprep.subr.mxu0 0.0
  %722 = vmatpush1.msra.mxu0 0.0
  %723 = vmatprep.subr.mxu0 0.0
  %724 = vmatpush1.msra.mxu0 0.0
  %725 = vmatprep.subr.mxu0 0.0
  %726 = vmatpush1.msra.mxu0 0.0
  %727 = vmatprep.subr.mxu0 0.0
  %728 = vmatpush1.msra.mxu0 0.0
  %729 = vmatprep.subr.mxu0 0.0
  %730 = vmatpush1.msra.mxu0 0.0
  %731 = vmatprep.subr.mxu0 0.0
  %732 = vmatpush1.msra.mxu0 0.0
  %733 = vmatprep.subr.mxu0 0.0
  %734 = vmatpush1.msra.mxu0 0.0
  %735 = vmatprep.subr.mxu0 0.0
  %736 = vmatpush1.msra.mxu0 0.0
  %737 = vmatprep.subr.mxu0 0.0
  %738 = vmatpush1.msra.mxu0 0.0
  %739 = vmatprep.mubr.f32.mxu0 0.0
  %740 = vmatmul.mubr.f32.gmra.mrb[0].mxu0 %v121
  %v741 = vpop.f32.mrb[0].mxu0
  %v742 = vadd.f32 %v673, %v741
  %v743 = vpop.f32.mrb[0].mxu0
  %744 = vmatprep.mubr.f32.mxu0 0.0
  %745 = vmatmul.mubr.f32.gmra.mrb[0].mxu0 %v124
  %v746 = vpop.f32.mrb[0].mxu0
  %v747 = vadd.f32 %v673, %v746
  %v748 = vpop.f32.mrb[0].mxu0
  %749 = vdwg.mxu0
  %s750 = scalar_lea.vmem %s4, 160
  %v751 = vld [vmem:[%s750] sm:$0xff]
  %v752 = vld [vmem:[%s750 + $0x8] sm:$0xff]
  %v753 = vld [vmem:[%s750 + $0x10] sm:$0xff]
  %v754 = vld [vmem:[%s750 + $0x18] sm:$0xff]
  %s755 = scalar_lea.vmem %s5, 5
  %v756 = vld [vmem:[%s755] sm:$0x1]
  %v758 = vlaneseq
  %v759 = vshrl.u32 %v758, 7
  %v760 = vsub.s32 0, %v759
  %v761 = vrot.slane %v756, %v760
  %763 = vmatprep.subr.mxu0 0.0
  %764 = vmatpush1.msra.mxu0 %v751
  %765 = vmatprep.subr.mxu0 0.0
  %766 = vmatpush1.msra.mxu0 %v752
  %767 = vmatprep.subr.mxu0 0.0
  %768 = vmatpush1.msra.mxu0 %v753
  %769 = vmatprep.subr.mxu0 0.0
  %770 = vmatpush1.msra.mxu0 %v754
  %771 = vmatprep.subr.mxu0 0.0
  %772 = vmatpush1.msra.mxu0 0.0
  %773 = vmatprep.subr.mxu0 0.0
  %774 = vmatpush1.msra.mxu0 0.0
  %775 = vmatprep.subr.mxu0 0.0
  %776 = vmatpush1.msra.mxu0 0.0
  %777 = vmatprep.subr.mxu0 0.0
  %778 = vmatpush1.msra.mxu0 0.0
  %779 = vmatprep.subr.mxu0 0.0
  %780 = vmatpush1.msra.mxu0 0.0
  %781 = vmatprep.subr.mxu0 0.0
  %782 = vmatpush1.msra.mxu0 0.0
  %783 = vmatprep.subr.mxu0 0.0
  %784 = vmatpush1.msra.mxu0 0.0
  %785 = vmatprep.subr.mxu0 0.0
  %786 = vmatpush1.msra.mxu0 0.0
  %787 = vmatprep.subr.mxu0 0.0
  %788 = vmatpush1.msra.mxu0 0.0
  %789 = vmatprep.subr.mxu0 0.0
  %790 = vmatpush1.msra.mxu0 0.0
  %791 = vmatprep.subr.mxu0 0.0
  %792 = vmatpush1.msra.mxu0 0.0
  %793 = vmatprep.subr.mxu0 0.0
  %794 = vmatpush1.msra.mxu0 0.0
  %795 = vmatprep.subr.mxu0 0.0
  %796 = vmatpush1.msra.mxu0 0.0
  %797 = vmatprep.subr.mxu0 0.0
  %798 = vmatpush1.msra.mxu0 0.0
  %799 = vmatprep.subr.mxu0 0.0
  %800 = vmatpush1.msra.mxu0 0.0
  %801 = vmatprep.subr.mxu0 0.0
  %802 = vmatpush1.msra.mxu0 0.0
  %803 = vmatprep.subr.mxu0 0.0
  %804 = vmatpush1.msra.mxu0 0.0
  %805 = vmatprep.subr.mxu0 0.0
  %806 = vmatpush1.msra.mxu0 0.0
  %807 = vmatprep.subr.mxu0 0.0
  %808 = vmatpush1.msra.mxu0 0.0
  %809 = vmatprep.subr.mxu0 0.0
  %810 = vmatpush1.msra.mxu0 0.0
  %811 = vmatprep.subr.mxu0 0.0
  %812 = vmatpush1.msra.mxu0 0.0
  %813 = vmatprep.subr.mxu0 0.0
  %814 = vmatpush1.msra.mxu0 0.0
  %815 = vmatprep.subr.mxu0 0.0
  %816 = vmatpush1.msra.mxu0 0.0
  %817 = vmatprep.subr.mxu0 0.0
  %818 = vmatpush1.msra.mxu0 0.0
  %819 = vmatprep.subr.mxu0 0.0
  %820 = vmatpush1.msra.mxu0 0.0
  %821 = vmatprep.subr.mxu0 0.0
  %822 = vmatpush1.msra.mxu0 0.0
  %823 = vmatprep.subr.mxu0 0.0
  %824 = vmatpush1.msra.mxu0 0.0
  %825 = vmatprep.subr.mxu0 0.0
  %826 = vmatpush1.msra.mxu0 0.0
  %827 = vmatprep.mubr.f32.mxu0 0.0
  %828 = vmatmul.mubr.f32.gmra.mrb[0].mxu0 %v121
  %v829 = vpop.f32.mrb[0].mxu0
  %v830 = vadd.f32 %v761, %v829
  %v831 = vpop.f32.mrb[0].mxu0
  %832 = vmatprep.mubr.f32.mxu0 0.0
  %833 = vmatmul.mubr.f32.gmra.mrb[0].mxu0 %v124
  %v834 = vpop.f32.mrb[0].mxu0
  %v835 = vadd.f32 %v761, %v834
  %v836 = vpop.f32.mrb[0].mxu0
  %837 = vdwg.mxu0
  %v839 = vsel %vm377, %v654, 0
  %v842 = vsel %vm377, %v659, 0
  %v845 = vsel %vm377, %v742, 0
  %v848 = vsel %vm377, %v747, 0
  %850 = vmatprep.subr.mxu0 0.0
  %851 = vmatpush1.xpose.msra.mxu0 %v845
  %852 = vmatprep.subr.mxu0 0.0
  %853 = vmatpush1.xpose.msra.mxu0 %v848
  %854 = vmatprep.subr.mxu0 0.0
  %855 = vmatpush1.xpose.msra.mxu0 0.0
  %856 = vmatprep.subr.mxu0 0.0
  %857 = vmatpush1.xpose.msra.mxu0 0.0
  %858 = vmatprep.subr.mxu0 0.0
  %859 = vmatpush1.xpose.msra.mxu0 0.0
  %860 = vmatprep.subr.mxu0 0.0
  %861 = vmatpush1.xpose.msra.mxu0 0.0
  %862 = vmatprep.subr.mxu0 0.0
  %863 = vmatpush1.xpose.msra.mxu0 0.0
  %864 = vmatprep.subr.mxu0 0.0
  %865 = vmatpush1.xpose.msra.mxu0 0.0
  %866 = vmatprep.subr.mxu0 0.0
  %867 = vmatpush1.xpose.msra.mxu0 0.0
  %868 = vmatprep.subr.mxu0 0.0
  %869 = vmatpush1.xpose.msra.mxu0 0.0
  %870 = vmatprep.subr.mxu0 0.0
  %871 = vmatpush1.xpose.msra.mxu0 0.0
  %872 = vmatprep.subr.mxu0 0.0
  %873 = vmatpush1.xpose.msra.mxu0 0.0
  %874 = vmatprep.subr.mxu0 0.0
  %875 = vmatpush1.xpose.msra.mxu0 0.0
  %876 = vmatprep.subr.mxu0 0.0
  %877 = vmatpush1.xpose.msra.mxu0 0.0
  %878 = vmatprep.subr.mxu0 0.0
  %879 = vmatpush1.xpose.msra.mxu0 0.0
  %880 = vmatprep.subr.mxu0 0.0
  %881 = vmatpush1.xpose.msra.mxu0 0.0
  %882 = vmatprep.subr.mxu0 0.0
  %883 = vmatpush1.xpose.msra.mxu0 0.0
  %884 = vmatprep.subr.mxu0 0.0
  %885 = vmatpush1.xpose.msra.mxu0 0.0
  %886 = vmatprep.subr.mxu0 0.0
  %887 = vmatpush1.xpose.msra.mxu0 0.0
  %888 = vmatprep.subr.mxu0 0.0
  %889 = vmatpush1.xpose.msra.mxu0 0.0
  %890 = vmatprep.subr.mxu0 0.0
  %891 = vmatpush1.xpose.msra.mxu0 0.0
  %892 = vmatprep.subr.mxu0 0.0
  %893 = vmatpush1.xpose.msra.mxu0 0.0
  %894 = vmatprep.subr.mxu0 0.0
  %895 = vmatpush1.xpose.msra.mxu0 0.0
  %896 = vmatprep.subr.mxu0 0.0
  %897 = vmatpush1.xpose.msra.mxu0 0.0
  %898 = vmatprep.subr.mxu0 0.0
  %899 = vmatpush1.xpose.msra.mxu0 0.0
  %900 = vmatprep.subr.mxu0 0.0
  %901 = vmatpush1.xpose.msra.mxu0 0.0
  %902 = vmatprep.subr.mxu0 0.0
  %903 = vmatpush1.xpose.msra.mxu0 0.0
  %904 = vmatprep.subr.mxu0 0.0
  %905 = vmatpush1.xpose.msra.mxu0 0.0
  %906 = vmatprep.subr.mxu0 0.0
  %907 = vmatpush1.xpose.msra.mxu0 0.0
  %908 = vmatprep.subr.mxu0 0.0
  %909 = vmatpush1.xpose.msra.mxu0 0.0
  %910 = vmatprep.subr.mxu0 0.0
  %911 = vmatpush1.xpose.msra.mxu0 0.0
  %912 = vmatprep.subr.mxu0 0.0
  %913 = vmatpush1.xpose.msra.mxu0 0.0
  %914 = vmatprep.mubr.f32.mxu0 0.0
  %915 = vmatmul.mubr.f32.gmra.mrb[0].mxu0 %v839
  %v916 = vpop.f32.mrb[0].mxu0
  %v917 = vadd.f32 0.0, %v916
  %v918 = vpop.f32.mrb[0].mxu0
  %919 = vmatprep.mubr.f32.mxu0 0.0
  %920 = vmatmul.mubr.f32.gmra.mrb[0].mxu0 %v842
  %v921 = vpop.f32.mrb[0].mxu0
  %v922 = vadd.f32 0.0, %v921
  %v923 = vpop.f32.mrb[0].mxu0
  %924 = vdwg.mxu0
  %v925 = vmul.f32 %v917, 0.25
  %v926 = vmul.f32 %v922, 0.25
  %v927 = vadd.f32 %v925, %v59
  %v928 = vadd.f32 %v926, %v60
  %v929 = vsel %vm377, %v927, -inf
  %930 = vmax.xlane.f32.xlu0 %v929
  %v931 = vpop.xlane.xlu0 %930
  %v932 = vsel %vm377, %v928, -inf
  %933 = vmax.xlane.f32.xlu0 %v932
  %v934 = vpop.xlane.xlu0 %933
  %v935 = vsub.f32 %v927, %v931
  %v936 = vsub.f32 %v928, %v934
  %v937 = vmul.f32 %v935, 1.442695
  %v938 = vpow.pop %v937
  %v939 = vmul.f32 %v936, 1.442695
  %v940 = vpow.pop %v939
  %v941 = vsel %vm377, %v938, 0.0
  %942 = vadd.xlane.f32.xlu0 %v941
  %v943 = vpop.xlane.xlu0 %942
  %v944 = vsel %vm377, %v940, 0.0
  %945 = vadd.xlane.f32.xlu0 %v944
  %v946 = vpop.xlane.xlu0 %945
  %v947 = vrcp.pop %v943
  %v948 = vmul.f32 %v938, %v947
  %v949 = vrcp.pop %v946
  %v950 = vmul.f32 %v940, %v949
  %v952 = vsel %vm377, %v948, 0
  %v955 = vsel %vm377, %v950, 0
  %957 = vmatprep.subr.mxu0 0.0
  %958 = vmatpush1.msra.mxu0 %v830
  %959 = vmatprep.subr.mxu0 0.0
  %960 = vmatpush1.msra.mxu0 %v835
  %961 = vmatprep.subr.mxu0 0.0
  %962 = vmatpush1.msra.mxu0 0.0
  %963 = vmatprep.subr.mxu0 0.0
  %964 = vmatpush1.msra.mxu0 0.0
  %965 = vmatprep.subr.mxu0 0.0
  %966 = vmatpush1.msra.mxu0 0.0
  %967 = vmatprep.subr.mxu0 0.0
  %968 = vmatpush1.msra.mxu0 0.0
  %969 = vmatprep.subr.mxu0 0.0
  %970 = vmatpush1.msra.mxu0 0.0
  %971 = vmatprep.subr.mxu0 0.0
  %972 = vmatpush1.msra.mxu0 0.0
  %973 = vmatprep.subr.mxu0 0.0
  %974 = vmatpush1.msra.mxu0 0.0
  %975 = vmatprep.subr.mxu0 0.0
  %976 = vmatpush1.msra.mxu0 0.0
  %977 = vmatprep.subr.mxu0 0.0
  %978 = vmatpush1.msra.mxu0 0.0
  %979 = vmatprep.subr.mxu0 0.0
  %980 = vmatpush1.msra.mxu0 0.0
  %981 = vmatprep.subr.mxu0 0.0
  %982 = vmatpush1.msra.mxu0 0.0
  %983 = vmatprep.subr.mxu0 0.0
  %984 = vmatpush1.msra.mxu0 0.0
  %985 = vmatprep.subr.mxu0 0.0
  %986 = vmatpush1.msra.mxu0 0.0
  %987 = vmatprep.subr.mxu0 0.0
  %988 = vmatpush1.msra.mxu0 0.0
  %989 = vmatprep.subr.mxu0 0.0
  %990 = vmatpush1.msra.mxu0 0.0
  %991 = vmatprep.subr.mxu0 0.0
  %992 = vmatpush1.msra.mxu0 0.0
  %993 = vmatprep.subr.mxu0 0.0
  %994 = vmatpush1.msra.mxu0 0.0
  %995 = vmatprep.subr.mxu0 0.0
  %996 = vmatpush1.msra.mxu0 0.0
  %997 = vmatprep.subr.mxu0 0.0
  %998 = vmatpush1.msra.mxu0 0.0
  %999 = vmatprep.subr.mxu0 0.0
  %1000 = vmatpush1.msra.mxu0 0.0
  %1001 = vmatprep.subr.mxu0 0.0
  %1002 = vmatpush1.msra.mxu0 0.0
  %1003 = vmatprep.subr.mxu0 0.0
  %1004 = vmatpush1.msra.mxu0 0.0
  %1005 = vmatprep.subr.mxu0 0.0
  %1006 = vmatpush1.msra.mxu0 0.0
  %1007 = vmatprep.subr.mxu0 0.0
  %1008 = vmatpush1.msra.mxu0 0.0
  %1009 = vmatprep.subr.mxu0 0.0
  %1010 = vmatpush1.msra.mxu0 0.0
  %1011 = vmatprep.subr.mxu0 0.0
  %1012 = vmatpush1.msra.mxu0 0.0
  %1013 = vmatprep.subr.mxu0 0.0
  %1014 = vmatpush1.msra.mxu0 0.0
  %1015 = vmatprep.subr.mxu0 0.0
  %1016 = vmatpush1.msra.mxu0 0.0
  %1017 = vmatprep.subr.mxu0 0.0
  %1018 = vmatpush1.msra.mxu0 0.0
  %1019 = vmatprep.subr.mxu0 0.0
  %1020 = vmatpush1.msra.mxu0 0.0
  %1021 = vmatprep.mubr.f32.mxu0 0.0
  %1022 = vmatmul.mubr.f32.gmra.mrb[0].mxu0 %v952
  %v1023 = vpop.f32.mrb[0].mxu0
  %v1024 = vadd.f32 0.0, %v1023
  %v1025 = vpop.f32.mrb[0].mxu0
  %1026 = vmatprep.mubr.f32.mxu0 0.0
  %1027 = vmatmul.mubr.f32.gmra.mrb[0].mxu0 %v955
  %v1028 = vpop.f32.mrb[0].mxu0
  %v1029 = vadd.f32 0.0, %v1028
  %v1030 = vpop.f32.mrb[0].mxu0
  %1031 = vdwg.mxu0
  %s1032 = scalar_lea.vmem %s6, 16
  %v1033 = vld [vmem:[%s1032] sm:$0xff]
  %v1034 = vld [vmem:[%s1032 + $0x8] sm:$0xff]
  %v1036 = vsel %vm377, %v1024, 0
  %v1039 = vsel %vm377, %v1029, 0
  %1041 = vmatprep.subr.mxu0 0.0
  %1042 = vmatpush1.msra.mxu0 %v1033
  %1043 = vmatprep.subr.mxu0 0.0
  %1044 = vmatpush1.msra.mxu0 %v1034
  %1045 = vmatprep.subr.mxu0 0.0
  %1046 = vmatpush1.msra.mxu0 0.0
  %1047 = vmatprep.subr.mxu0 0.0
  %1048 = vmatpush1.msra.mxu0 0.0
  %1049 = vmatprep.subr.mxu0 0.0
  %1050 = vmatpush1.msra.mxu0 0.0
  %1051 = vmatprep.subr.mxu0 0.0
  %1052 = vmatpush1.msra.mxu0 0.0
  %1053 = vmatprep.subr.mxu0 0.0
  %1054 = vmatpush1.msra.mxu0 0.0
  %1055 = vmatprep.subr.mxu0 0.0
  %1056 = vmatpush1.msra.mxu0 0.0
  %1057 = vmatprep.subr.mxu0 0.0
  %1058 = vmatpush1.msra.mxu0 0.0
  %1059 = vmatprep.subr.mxu0 0.0
  %1060 = vmatpush1.msra.mxu0 0.0
  %1061 = vmatprep.subr.mxu0 0.0
  %1062 = vmatpush1.msra.mxu0 0.0
  %1063 = vmatprep.subr.mxu0 0.0
  %1064 = vmatpush1.msra.mxu0 0.0
  %1065 = vmatprep.subr.mxu0 0.0
  %1066 = vmatpush1.msra.mxu0 0.0
  %1067 = vmatprep.subr.mxu0 0.0
  %1068 = vmatpush1.msra.mxu0 0.0
  %1069 = vmatprep.subr.mxu0 0.0
  %1070 = vmatpush1.msra.mxu0 0.0
  %1071 = vmatprep.subr.mxu0 0.0
  %1072 = vmatpush1.msra.mxu0 0.0
  %1073 = vmatprep.subr.mxu0 0.0
  %1074 = vmatpush1.msra.mxu0 0.0
  %1075 = vmatprep.subr.mxu0 0.0
  %1076 = vmatpush1.msra.mxu0 0.0
  %1077 = vmatprep.subr.mxu0 0.0
  %1078 = vmatpush1.msra.mxu0 0.0
  %1079 = vmatprep.subr.mxu0 0.0
  %1080 = vmatpush1.msra.mxu0 0.0
  %1081 = vmatprep.subr.mxu0 0.0
  %1082 = vmatpush1.msra.mxu0 0.0
  %1083 = vmatprep.subr.mxu0 0.0
  %1084 = vmatpush1.msra.mxu0 0.0
  %1085 = vmatprep.subr.mxu0 0.0
  %1086 = vmatpush1.msra.mxu0 0.0
  %1087 = vmatprep.subr.mxu0 0.0
  %1088 = vmatpush1.msra.mxu0 0.0
  %1089 = vmatprep.subr.mxu0 0.0
  %1090 = vmatpush1.msra.mxu0 0.0
  %1091 = vmatprep.subr.mxu0 0.0
  %1092 = vmatpush1.msra.mxu0 0.0
  %1093 = vmatprep.subr.mxu0 0.0
  %1094 = vmatpush1.msra.mxu0 0.0
  %1095 = vmatprep.subr.mxu0 0.0
  %1096 = vmatpush1.msra.mxu0 0.0
  %1097 = vmatprep.subr.mxu0 0.0
  %1098 = vmatpush1.msra.mxu0 0.0
  %1099 = vmatprep.subr.mxu0 0.0
  %1100 = vmatpush1.msra.mxu0 0.0
  %1101 = vmatprep.subr.mxu0 0.0
  %1102 = vmatpush1.msra.mxu0 0.0
  %1103 = vmatprep.subr.mxu0 0.0
  %1104 = vmatpush1.msra.mxu0 0.0
  %1105 = vmatprep.mubr.f32.mxu0 0.0
  %1106 = vmatmul.mubr.f32.gmra.mrb[0].mxu0 %v1036
  %v1107 = vpop.f32.mrb[0].mxu0
  %v1108 = vadd.f32 0.0, %v1107
  %v1109 = vpop.f32.mrb[0].mxu0
  %1110 = vmatprep.mubr.f32.mxu0 0.0
  %1111 = vmatmul.mubr.f32.gmra.mrb[0].mxu0 %v1039
  %v1112 = vpop.f32.mrb[0].mxu0
  %v1113 = vadd.f32 0.0, %v1112
  %v1114 = vpop.f32.mrb[0].mxu0
  %1115 = vdwg.mxu0
  %v1117 = vsel %vm377, %v564, 0
  %v1120 = vsel %vm377, %v569, 0
  %1122 = vmatprep.subr.mxu0 0.0
  %1123 = vmatpush1.msra.mxu0 %v572
  %1124 = vmatprep.subr.mxu0 0.0
  %1125 = vmatpush1.msra.mxu0 %v573
  %1126 = vmatprep.subr.mxu0 0.0
  %1127 = vmatpush1.msra.mxu0 0.0
  %1128 = vmatprep.subr.mxu0 0.0
  %1129 = vmatpush1.msra.mxu0 0.0
  %1130 = vmatprep.subr.mxu0 0.0
  %1131 = vmatpush1.msra.mxu0 0.0
  %1132 = vmatprep.subr.mxu0 0.0
  %1133 = vmatpush1.msra.mxu0 0.0
  %1134 = vmatprep.subr.mxu0 0.0
  %1135 = vmatpush1.msra.mxu0 0.0
  %1136 = vmatprep.subr.mxu0 0.0
  %1137 = vmatpush1.msra.mxu0 0.0
  %1138 = vmatprep.subr.mxu0 0.0
  %1139 = vmatpush1.msra.mxu0 0.0
  %1140 = vmatprep.subr.mxu0 0.0
  %1141 = vmatpush1.msra.mxu0 0.0
  %1142 = vmatprep.subr.mxu0 0.0
  %1143 = vmatpush1.msra.mxu0 0.0
  %1144 = vmatprep.subr.mxu0 0.0
  %1145 = vmatpush1.msra.mxu0 0.0
  %1146 = vmatprep.subr.mxu0 0.0
  %1147 = vmatpush1.msra.mxu0 0.0
  %1148 = vmatprep.subr.mxu0 0.0
  %1149 = vmatpush1.msra.mxu0 0.0
  %1150 = vmatprep.subr.mxu0 0.0
  %1151 = vmatpush1.msra.mxu0 0.0
  %1152 = vmatprep.subr.mxu0 0.0
  %1153 = vmatpush1.msra.mxu0 0.0
  %1154 = vmatprep.subr.mxu0 0.0
  %1155 = vmatpush1.msra.mxu0 0.0
  %1156 = vmatprep.subr.mxu0 0.0
  %1157 = vmatpush1.msra.mxu0 0.0
  %1158 = vmatprep.subr.mxu0 0.0
  %1159 = vmatpush1.msra.mxu0 0.0
  %1160 = vmatprep.subr.mxu0 0.0
  %1161 = vmatpush1.msra.mxu0 0.0
  %1162 = vmatprep.subr.mxu0 0.0
  %1163 = vmatpush1.msra.mxu0 0.0
  %1164 = vmatprep.subr.mxu0 0.0
  %1165 = vmatpush1.msra.mxu0 0.0
  %1166 = vmatprep.subr.mxu0 0.0
  %1167 = vmatpush1.msra.mxu0 0.0
  %1168 = vmatprep.subr.mxu0 0.0
  %1169 = vmatpush1.msra.mxu0 0.0
  %1170 = vmatprep.subr.mxu0 0.0
  %1171 = vmatpush1.msra.mxu0 0.0
  %1172 = vmatprep.subr.mxu0 0.0
  %1173 = vmatpush1.msra.mxu0 0.0
  %1174 = vmatprep.subr.mxu0 0.0
  %1175 = vmatpush1.msra.mxu0 0.0
  %1176 = vmatprep.subr.mxu0 0.0
  %1177 = vmatpush1.msra.mxu0 0.0
  %1178 = vmatprep.subr.mxu0 0.0
  %1179 = vmatpush1.msra.mxu0 0.0
  %1180 = vmatprep.subr.mxu0 0.0
  %1181 = vmatpush1.msra.mxu0 0.0
  %1182 = vmatprep.subr.mxu0 0.0
  %1183 = vmatpush1.msra.mxu0 0.0
  %1184 = vmatprep.subr.mxu0 0.0
  %1185 = vmatpush1.msra.mxu0 0.0
  %1186 = vmatprep.mubr.f32.mxu0 0.0
  %1187 = vmatmul.mubr.f32.gmra.mrb[0].mxu0 %v1117
  %v1188 = vpop.f32.mrb[0].mxu0
  %v1189 = vadd.f32 %v1108, %v1188
  %v1190 = vpop.f32.mrb[0].mxu0
  %1191 = vmatprep.mubr.f32.mxu0 0.0
  %1192 = vmatmul.mubr.f32.gmra.mrb[0].mxu0 %v1120
  %v1193 = vpop.f32.mrb[0].mxu0
  %v1194 = vadd.f32 %v1113, %v1193
  %v1195 = vpop.f32.mrb[0].mxu0
  %1196 = vdwg.mxu0
  %v1197 = vld [vmem:[%s7] sm:$0x1]
  %v1199 = vlaneseq
  %v1200 = vshrl.u32 %v1199, 7
  %v1201 = vsub.s32 0, %v1200
  %v1202 = vrot.slane %v1197, %v1201
  %v1204 = vadd.f32 %v1189, %v1202
  %v1205 = vadd.f32 %v1194, %v1202
  %v1206 = vadd.f32 %v107, %v1204
  %v1207 = vadd.f32 %v108, %v1205
  %v1208 = vld [vmem:[%s8] sm:$0x1]
  %v1209 = vld [vmem:[%s9] sm:$0x1]
  %v1210 = vsel %vm65, %v1206, 0.0
  %1211 = vadd.xlane.f32.xlu0 %v1210
  %v1212 = vpop.xlane.xlu0 %1211
  %v1213 = vsel %vm65, %v1207, 0.0
  %1214 = vadd.xlane.f32.xlu0 %v1213
  %v1215 = vpop.xlane.xlu0 %1214
  %v1216 = vmul.f32 %v1212, %v72
  %v1217 = vmul.f32 %v1215, %v72
  %v1218 = vsub.f32 %v1206, %v1216
  %v1219 = vsub.f32 %v1207, %v1217
  %v1220 = vmul.f32 %v1218, %v1218
  %v1221 = vmul.f32 %v1219, %v1219
  %v1222 = vsel %vm65, %v1220, 0.0
  %1223 = vadd.xlane.f32.xlu0 %v1222
  %v1224 = vpop.xlane.xlu0 %1223
  %v1225 = vsel %vm65, %v1221, 0.0
  %1226 = vadd.xlane.f32.xlu0 %v1225
  %v1227 = vpop.xlane.xlu0 %1226
  %v1228 = vmul.f32 %v1224, %v72
  %v1229 = vmul.f32 %v1227, %v72
  %v1230 = vadd.f32 %v1228, 1e-12
  %v1231 = vadd.f32 %v1229, 1e-12
  %v1232 = vrsqrt.pop %v1230
  %v1233 = vrsqrt.pop %v1231
  %v1234 = vmul.f32 %v1218, %v1232
  %v1235 = vmul.f32 %v1219, %v1233
  %v1237 = vlaneseq
  %v1238 = vshrl.u32 %v1237, 7
  %v1239 = vsub.s32 0, %v1238
  %v1240 = vrot.slane %v1208, %v1239
  %v1242 = vmul.f32 %v1234, %v1240
  %v1243 = vmul.f32 %v1235, %v1240
  %v1245 = vlaneseq
  %v1246 = vshrl.u32 %v1245, 7
  %v1247 = vsub.s32 0, %v1246
  %v1248 = vrot.slane %v1209, %v1247
  %v1250 = vadd.f32 %v1242, %v1248
  %v1251 = vadd.f32 %v1243, %v1248
  %v1252 = vld [vmem:[%s10] sm:$0xff]
  %v1253 = vld [vmem:[%s10 + $0x8] sm:$0xff]
  %v1254 = vld [vmem:[%s10 + $0x10] sm:$0xff]
  %v1255 = vld [vmem:[%s10 + $0x18] sm:$0xff]
  %v1256 = vld [vmem:[%s11] sm:$0x1]
  %v1258 = vlaneseq
  %v1259 = vshrl.u32 %v1258, 7
  %v1260 = vsub.s32 0, %v1259
  %v1261 = vrot.slane %v1256, %v1260
  %v1264 = vsel %vm65, %v1250, 0
  %v1267 = vsel %vm65, %v1251, 0
  %1269 = vmatprep.subr.mxu0 0.0
  %1270 = vmatpush1.msra.mxu0 %v1252
  %1271 = vmatprep.subr.mxu0 0.0
  %1272 = vmatpush1.msra.mxu0 %v1253
  %1273 = vmatprep.subr.mxu0 0.0
  %1274 = vmatpush1.msra.mxu0 %v1254
  %1275 = vmatprep.subr.mxu0 0.0
  %1276 = vmatpush1.msra.mxu0 %v1255
  %1277 = vmatprep.subr.mxu0 0.0
  %1278 = vmatpush1.msra.mxu0 0.0
  %1279 = vmatprep.subr.mxu0 0.0
  %1280 = vmatpush1.msra.mxu0 0.0
  %1281 = vmatprep.subr.mxu0 0.0
  %1282 = vmatpush1.msra.mxu0 0.0
  %1283 = vmatprep.subr.mxu0 0.0
  %1284 = vmatpush1.msra.mxu0 0.0
  %1285 = vmatprep.subr.mxu0 0.0
  %1286 = vmatpush1.msra.mxu0 0.0
  %1287 = vmatprep.subr.mxu0 0.0
  %1288 = vmatpush1.msra.mxu0 0.0
  %1289 = vmatprep.subr.mxu0 0.0
  %1290 = vmatpush1.msra.mxu0 0.0
  %1291 = vmatprep.subr.mxu0 0.0
  %1292 = vmatpush1.msra.mxu0 0.0
  %1293 = vmatprep.subr.mxu0 0.0
  %1294 = vmatpush1.msra.mxu0 0.0
  %1295 = vmatprep.subr.mxu0 0.0
  %1296 = vmatpush1.msra.mxu0 0.0
  %1297 = vmatprep.subr.mxu0 0.0
  %1298 = vmatpush1.msra.mxu0 0.0
  %1299 = vmatprep.subr.mxu0 0.0
  %1300 = vmatpush1.msra.mxu0 0.0
  %1301 = vmatprep.subr.mxu0 0.0
  %1302 = vmatpush1.msra.mxu0 0.0
  %1303 = vmatprep.subr.mxu0 0.0
  %1304 = vmatpush1.msra.mxu0 0.0
  %1305 = vmatprep.subr.mxu0 0.0
  %1306 = vmatpush1.msra.mxu0 0.0
  %1307 = vmatprep.subr.mxu0 0.0
  %1308 = vmatpush1.msra.mxu0 0.0
  %1309 = vmatprep.subr.mxu0 0.0
  %1310 = vmatpush1.msra.mxu0 0.0
  %1311 = vmatprep.subr.mxu0 0.0
  %1312 = vmatpush1.msra.mxu0 0.0
  %1313 = vmatprep.subr.mxu0 0.0
  %1314 = vmatpush1.msra.mxu0 0.0
  %1315 = vmatprep.subr.mxu0 0.0
  %1316 = vmatpush1.msra.mxu0 0.0
  %1317 = vmatprep.subr.mxu0 0.0
  %1318 = vmatpush1.msra.mxu0 0.0
  %1319 = vmatprep.subr.mxu0 0.0
  %1320 = vmatpush1.msra.mxu0 0.0
  %1321 = vmatprep.subr.mxu0 0.0
  %1322 = vmatpush1.msra.mxu0 0.0
  %1323 = vmatprep.subr.mxu0 0.0
  %1324 = vmatpush1.msra.mxu0 0.0
  %1325 = vmatprep.subr.mxu0 0.0
  %1326 = vmatpush1.msra.mxu0 0.0
  %1327 = vmatprep.subr.mxu0 0.0
  %1328 = vmatpush1.msra.mxu0 0.0
  %1329 = vmatprep.subr.mxu0 0.0
  %1330 = vmatpush1.msra.mxu0 0.0
  %1331 = vmatprep.subr.mxu0 0.0
  %1332 = vmatpush1.msra.mxu0 0.0
  %1333 = vmatprep.mubr.f32.mxu0 0.0
  %1334 = vmatmul.mubr.f32.gmra.mrb[0].mxu0 %v1264
  %v1335 = vpop.f32.mrb[0].mxu0
  %v1336 = vadd.f32 %v1261, %v1335
  %v1337 = vpop.f32.mrb[0].mxu0
  %1338 = vmatprep.mubr.f32.mxu0 0.0
  %1339 = vmatmul.mubr.f32.gmra.mrb[0].mxu0 %v1267
  %v1340 = vpop.f32.mrb[0].mxu0
  %v1341 = vadd.f32 %v1261, %v1340
  %v1342 = vpop.f32.mrb[0].mxu0
  %1343 = vdwg.mxu0
  %v1344 = vmul.f32 %v1336, 0.5
  %v1345 = vmul.f32 %v1341, 0.5
  %v1346 = vmul.f32 %v1336, 0.70710677
  %v1347 = vmul.f32 %v1341, 0.70710677
  %v1348 = verf.f32.pop %v1346
  %v1349 = verf.f32.pop %v1347
  %v1350 = vadd.f32 %v1348, 1.0
  %v1351 = vadd.f32 %v1349, 1.0
  %v1352 = vmul.f32 %v1344, %v1350
  %v1353 = vmul.f32 %v1345, %v1351
  %v1354 = vld [vmem:[%s12] sm:$0xff]
  %v1355 = vld [vmem:[%s12 + $0x8] sm:$0xff]
  %v1356 = vld [vmem:[%s12 + $0x10] sm:$0xff]
  %v1357 = vld [vmem:[%s12 + $0x18] sm:$0xff]
  %v1358 = vld [vmem:[%s12 + $0x20] sm:$0xff]
  %v1359 = vld [vmem:[%s12 + $0x28] sm:$0xff]
  %v1360 = vld [vmem:[%s12 + $0x30] sm:$0xff]
  %v1361 = vld [vmem:[%s12 + $0x38] sm:$0xff]
  %v1362 = vld [vmem:[%s13] sm:$0x1]
  %v1364 = vlaneseq
  %v1365 = vshrl.u32 %v1364, 7
  %v1366 = vsub.s32 0, %v1365
  %v1367 = vrot.slane %v1362, %v1366
  %vm1369 = vcmask 523264
  %v1371 = vsel %vm1369, %v1352, 0
  %v1374 = vsel %vm1369, %v1353, 0
  %1376 = vmatprep.subr.mxu0 0.0
  %1377 = vmatpush1.msra.mxu0 %v1354
  %1378 = vmatprep.subr.mxu0 0.0
  %1379 = vmatpush1.msra.mxu0 %v1355
  %1380 = vmatprep.subr.mxu0 0.0
  %1381 = vmatpush1.msra.mxu0 %v1356
  %1382 = vmatprep.subr.mxu0 0.0
  %1383 = vmatpush1.msra.mxu0 %v1357
  %1384 = vmatprep.subr.mxu0 0.0
  %1385 = vmatpush1.msra.mxu0 %v1358
  %1386 = vmatprep.subr.mxu0 0.0
  %1387 = vmatpush1.msra.mxu0 %v1359
  %1388 = vmatprep.subr.mxu0 0.0
  %1389 = vmatpush1.msra.mxu0 %v1360
  %1390 = vmatprep.subr.mxu0 0.0
  %1391 = vmatpush1.msra.mxu0 %v1361
  %1392 = vmatprep.subr.mxu0 0.0
  %1393 = vmatpush1.msra.mxu0 0.0
  %1394 = vmatprep.subr.mxu0 0.0
  %1395 = vmatpush1.msra.mxu0 0.0
  %1396 = vmatprep.subr.mxu0 0.0
  %1397 = vmatpush1.msra.mxu0 0.0
  %1398 = vmatprep.subr.mxu0 0.0
  %1399 = vmatpush1.msra.mxu0 0.0
  %1400 = vmatprep.subr.mxu0 0.0
  %1401 = vmatpush1.msra.mxu0 0.0
  %1402 = vmatprep.subr.mxu0 0.0
  %1403 = vmatpush1.msra.mxu0 0.0
  %1404 = vmatprep.subr.mxu0 0.0
  %1405 = vmatpush1.msra.mxu0 0.0
  %1406 = vmatprep.subr.mxu0 0.0
  %1407 = vmatpush1.msra.mxu0 0.0
  %1408 = vmatprep.subr.mxu0 0.0
  %1409 = vmatpush1.msra.mxu0 0.0
  %1410 = vmatprep.subr.mxu0 0.0
  %1411 = vmatpush1.msra.mxu0 0.0
  %1412 = vmatprep.subr.mxu0 0.0
  %1413 = vmatpush1.msra.mxu0 0.0
  %1414 = vmatprep.subr.mxu0 0.0
  %1415 = vmatpush1.msra.mxu0 0.0
  %1416 = vmatprep.subr.mxu0 0.0
  %1417 = vmatpush1.msra.mxu0 0.0
  %1418 = vmatprep.subr.mxu0 0.0
  %1419 = vmatpush1.msra.mxu0 0.0
  %1420 = vmatprep.subr.mxu0 0.0
  %1421 = vmatpush1.msra.mxu0 0.0
  %1422 = vmatprep.subr.mxu0 0.0
  %1423 = vmatpush1.msra.mxu0 0.0
  %1424 = vmatprep.subr.mxu0 0.0
  %1425 = vmatpush1.msra.mxu0 0.0
  %1426 = vmatprep.subr.mxu0 0.0
  %1427 = vmatpush1.msra.mxu0 0.0
  %1428 = vmatprep.subr.mxu0 0.0
  %1429 = vmatpush1.msra.mxu0 0.0
  %1430 = vmatprep.subr.mxu0 0.0
  %1431 = vmatpush1.msra.mxu0 0.0
  %1432 = vmatprep.subr.mxu0 0.0
  %1433 = vmatpush1.msra.mxu0 0.0
  %1434 = vmatprep.subr.mxu0 0.0
  %1435 = vmatpush1.msra.mxu0 0.0
  %1436 = vmatprep.subr.mxu0 0.0
  %1437 = vmatpush1.msra.mxu0 0.0
  %1438 = vmatprep.subr.mxu0 0.0
  %1439 = vmatpush1.msra.mxu0 0.0
  %1440 = vmatprep.mubr.f32.mxu0 0.0
  %1441 = vmatmul.mubr.f32.gmra.mrb[0].mxu0 %v1371
  %v1442 = vpop.f32.mrb[0].mxu0
  %v1443 = vadd.f32 %v1367, %v1442
  %v1444 = vpop.f32.mrb[0].mxu0
  %1445 = vmatprep.mubr.f32.mxu0 0.0
  %1446 = vmatmul.mubr.f32.gmra.mrb[0].mxu0 %v1374
  %v1447 = vpop.f32.mrb[0].mxu0
  %v1448 = vadd.f32 %v1367, %v1447
  %v1449 = vpop.f32.mrb[0].mxu0
  %1450 = vdwg.mxu0
  %v1451 = vadd.f32 %v1250, %v1443
  %v1452 = vadd.f32 %v1251, %v1448
  %v1453 = vld [vmem:[%s14] sm:$0x1]
  %v1454 = vld [vmem:[%s15] sm:$0x1]
  %v1455 = vsel %vm65, %v1451, 0.0
  %1456 = vadd.xlane.f32.xlu0 %v1455
  %v1457 = vpop.xlane.xlu0 %1456
  %v1458 = vsel %vm65, %v1452, 0.0
  %1459 = vadd.xlane.f32.xlu0 %v1458
  %v1460 = vpop.xlane.xlu0 %1459
  %v1461 = vmul.f32 %v1457, %v72
  %v1462 = vmul.f32 %v1460, %v72
  %v1463 = vsub.f32 %v1451, %v1461
  %v1464 = vsub.f32 %v1452, %v1462
  %v1465 = vmul.f32 %v1463, %v1463
  %v1466 = vmul.f32 %v1464, %v1464
  %v1467 = vsel %vm65, %v1465, 0.0
  %1468 = vadd.xlane.f32.xlu0 %v1467
  %v1469 = vpop.xlane.xlu0 %1468
  %v1470 = vsel %vm65, %v1466, 0.0
  %1471 = vadd.xlane.f32.xlu0 %v1470
  %v1472 = vpop.xlane.xlu0 %1471
  %v1473 = vmul.f32 %v1469, %v72
  %v1474 = vmul.f32 %v1472, %v72
  %v1475 = vadd.f32 %v1473, 1e-12
  %v1476 = vadd.f32 %v1474, 1e-12
  %v1477 = vrsqrt.pop %v1475
  %v1478 = vrsqrt.pop %v1476
  %v1479 = vmul.f32 %v1463, %v1477
  %v1480 = vmul.f32 %v1464, %v1478
  %v1482 = vlaneseq
  %v1483 = vshrl.u32 %v1482, 7
  %v1484 = vsub.s32 0, %v1483
  %v1485 = vrot.slane %v1453, %v1484
  %v1487 = vmul.f32 %v1479, %v1485
  %v1488 = vmul.f32 %v1480, %v1485
  %v1490 = vlaneseq
  %v1491 = vshrl.u32 %v1490, 7
  %v1492 = vsub.s32 0, %v1491
  %v1493 = vrot.slane %v1454, %v1492
  %v1495 = vadd.f32 %v1487, %v1493
  %v1496 = vadd.f32 %v1488, %v1493
  %s1497 = scalar_lea.vmem %s4, 192
  %v1498 = vld [vmem:[%s1497] sm:$0xff]
  %v1499 = vld [vmem:[%s1497 + $0x8] sm:$0xff]
  %v1500 = vld [vmem:[%s1497 + $0x10] sm:$0xff]
  %v1501 = vld [vmem:[%s1497 + $0x18] sm:$0xff]
  %s1502 = scalar_lea.vmem %s5, 6
  %v1503 = vld [vmem:[%s1502] sm:$0x1]
  %v1505 = vlaneseq
  %v1506 = vshrl.u32 %v1505, 7
  %v1507 = vsub.s32 0, %v1506
  %v1508 = vrot.slane %v1503, %v1507
  %v1511 = vsel %vm65, %v1495, 0
  %v1514 = vsel %vm65, %v1496, 0
  %1516 = vmatprep.subr.mxu0 0.0
  %1517 = vmatpush1.msra.mxu0 %v1498
  %1518 = vmatprep.subr.mxu0 0.0
  %1519 = vmatpush1.msra.mxu0 %v1499
  %1520 = vmatprep.subr.mxu0 0.0
  %1521 = vmatpush1.msra.mxu0 %v1500
  %1522 = vmatprep.subr.mxu0 0.0
  %1523 = vmatpush1.msra.mxu0 %v1501
  %1524 = vmatprep.subr.mxu0 0.0
  %1525 = vmatpush1.msra.mxu0 0.0
  %1526 = vmatprep.subr.mxu0 0.0
  %1527 = vmatpush1.msra.mxu0 0.0
  %1528 = vmatprep.subr.mxu0 0.0
  %1529 = vmatpush1.msra.mxu0 0.0
  %1530 = vmatprep.subr.mxu0 0.0
  %1531 = vmatpush1.msra.mxu0 0.0
  %1532 = vmatprep.subr.mxu0 0.0
  %1533 = vmatpush1.msra.mxu0 0.0
  %1534 = vmatprep.subr.mxu0 0.0
  %1535 = vmatpush1.msra.mxu0 0.0
  %1536 = vmatprep.subr.mxu0 0.0
  %1537 = vmatpush1.msra.mxu0 0.0
  %1538 = vmatprep.subr.mxu0 0.0
  %1539 = vmatpush1.msra.mxu0 0.0
  %1540 = vmatprep.subr.mxu0 0.0
  %1541 = vmatpush1.msra.mxu0 0.0
  %1542 = vmatprep.subr.mxu0 0.0
  %1543 = vmatpush1.msra.mxu0 0.0
  %1544 = vmatprep.subr.mxu0 0.0
  %1545 = vmatpush1.msra.mxu0 0.0
  %1546 = vmatprep.subr.mxu0 0.0
  %1547 = vmatpush1.msra.mxu0 0.0
  %1548 = vmatprep.subr.mxu0 0.0
  %1549 = vmatpush1.msra.mxu0 0.0
  %1550 = vmatprep.subr.mxu0 0.0
  %1551 = vmatpush1.msra.mxu0 0.0
  %1552 = vmatprep.subr.mxu0 0.0
  %1553 = vmatpush1.msra.mxu0 0.0
  %1554 = vmatprep.subr.mxu0 0.0
  %1555 = vmatpush1.msra.mxu0 0.0
  %1556 = vmatprep.subr.mxu0 0.0
  %1557 = vmatpush1.msra.mxu0 0.0
  %1558 = vmatprep.subr.mxu0 0.0
  %1559 = vmatpush1.msra.mxu0 0.0
  %1560 = vmatprep.subr.mxu0 0.0
  %1561 = vmatpush1.msra.mxu0 0.0
  %1562 = vmatprep.subr.mxu0 0.0
  %1563 = vmatpush1.msra.mxu0 0.0
  %1564 = vmatprep.subr.mxu0 0.0
  %1565 = vmatpush1.msra.mxu0 0.0
  %1566 = vmatprep.subr.mxu0 0.0
  %1567 = vmatpush1.msra.mxu0 0.0
  %1568 = vmatprep.subr.mxu0 0.0
  %1569 = vmatpush1.msra.mxu0 0.0
  %1570 = vmatprep.subr.mxu0 0.0
  %1571 = vmatpush1.msra.mxu0 0.0
  %1572 = vmatprep.subr.mxu0 0.0
  %1573 = vmatpush1.msra.mxu0 0.0
  %1574 = vmatprep.subr.mxu0 0.0
  %1575 = vmatpush1.msra.mxu0 0.0
  %1576 = vmatprep.subr.mxu0 0.0
  %1577 = vmatpush1.msra.mxu0 0.0
  %1578 = vmatprep.subr.mxu0 0.0
  %1579 = vmatpush1.msra.mxu0 0.0
  %1580 = vmatprep.mubr.f32.mxu0 0.0
  %1581 = vmatmul.mubr.f32.gmra.mrb[0].mxu0 %v1511
  %v1582 = vpop.f32.mrb[0].mxu0
  %v1583 = vadd.f32 %v1508, %v1582
  %v1584 = vpop.f32.mrb[0].mxu0
  %1585 = vmatprep.mubr.f32.mxu0 0.0
  %1586 = vmatmul.mubr.f32.gmra.mrb[0].mxu0 %v1514
  %v1587 = vpop.f32.mrb[0].mxu0
  %v1588 = vadd.f32 %v1508, %v1587
  %v1589 = vpop.f32.mrb[0].mxu0
  %1590 = vdwg.mxu0
  %s1591 = scalar_lea.vmem %s4, 256
  %v1592 = vld [vmem:[%s1591] sm:$0xff]
  %v1593 = vld [vmem:[%s1591 + $0x8] sm:$0xff]
  %v1594 = vld [vmem:[%s1591 + $0x10] sm:$0xff]
  %v1595 = vld [vmem:[%s1591 + $0x18] sm:$0xff]
  %s1596 = scalar_lea.vmem %s5, 8
  %v1597 = vld [vmem:[%s1596] sm:$0x1]
  %v1599 = vlaneseq
  %v1600 = vshrl.u32 %v1599, 7
  %v1601 = vsub.s32 0, %v1600
  %v1602 = vrot.slane %v1597, %v1601
  %1604 = vmatprep.subr.mxu0 0.0
  %1605 = vmatpush1.msra.mxu0 %v1592
  %1606 = vmatprep.subr.mxu0 0.0
  %1607 = vmatpush1.msra.mxu0 %v1593
  %1608 = vmatprep.subr.mxu0 0.0
  %1609 = vmatpush1.msra.mxu0 %v1594
  %1610 = vmatprep.subr.mxu0 0.0
  %1611 = vmatpush1.msra.mxu0 %v1595
  %1612 = vmatprep.subr.mxu0 0.0
  %1613 = vmatpush1.msra.mxu0 0.0
  %1614 = vmatprep.subr.mxu0 0.0
  %1615 = vmatpush1.msra.mxu0 0.0
  %1616 = vmatprep.subr.mxu0 0.0
  %1617 = vmatpush1.msra.mxu0 0.0
  %1618 = vmatprep.subr.mxu0 0.0
  %1619 = vmatpush1.msra.mxu0 0.0
  %1620 = vmatprep.subr.mxu0 0.0
  %1621 = vmatpush1.msra.mxu0 0.0
  %1622 = vmatprep.subr.mxu0 0.0
  %1623 = vmatpush1.msra.mxu0 0.0
  %1624 = vmatprep.subr.mxu0 0.0
  %1625 = vmatpush1.msra.mxu0 0.0
  %1626 = vmatprep.subr.mxu0 0.0
  %1627 = vmatpush1.msra.mxu0 0.0
  %1628 = vmatprep.subr.mxu0 0.0
  %1629 = vmatpush1.msra.mxu0 0.0
  %1630 = vmatprep.subr.mxu0 0.0
  %1631 = vmatpush1.msra.mxu0 0.0
  %1632 = vmatprep.subr.mxu0 0.0
  %1633 = vmatpush1.msra.mxu0 0.0
  %1634 = vmatprep.subr.mxu0 0.0
  %1635 = vmatpush1.msra.mxu0 0.0
  %1636 = vmatprep.subr.mxu0 0.0
  %1637 = vmatpush1.msra.mxu0 0.0
  %1638 = vmatprep.subr.mxu0 0.0
  %1639 = vmatpush1.msra.mxu0 0.0
  %1640 = vmatprep.subr.mxu0 0.0
  %1641 = vmatpush1.msra.mxu0 0.0
  %1642 = vmatprep.subr.mxu0 0.0
  %1643 = vmatpush1.msra.mxu0 0.0
  %1644 = vmatprep.subr.mxu0 0.0
  %1645 = vmatpush1.msra.mxu0 0.0
  %1646 = vmatprep.subr.mxu0 0.0
  %1647 = vmatpush1.msra.mxu0 0.0
  %1648 = vmatprep.subr.mxu0 0.0
  %1649 = vmatpush1.msra.mxu0 0.0
  %1650 = vmatprep.subr.mxu0 0.0
  %1651 = vmatpush1.msra.mxu0 0.0
  %1652 = vmatprep.subr.mxu0 0.0
  %1653 = vmatpush1.msra.mxu0 0.0
  %1654 = vmatprep.subr.mxu0 0.0
  %1655 = vmatpush1.msra.mxu0 0.0
  %1656 = vmatprep.subr.mxu0 0.0
  %1657 = vmatpush1.msra.mxu0 0.0
  %1658 = vmatprep.subr.mxu0 0.0
  %1659 = vmatpush1.msra.mxu0 0.0
  %1660 = vmatprep.subr.mxu0 0.0
  %1661 = vmatpush1.msra.mxu0 0.0
  %1662 = vmatprep.subr.mxu0 0.0
  %1663 = vmatpush1.msra.mxu0 0.0
  %1664 = vmatprep.subr.mxu0 0.0
  %1665 = vmatpush1.msra.mxu0 0.0
  %1666 = vmatprep.subr.mxu0 0.0
  %1667 = vmatpush1.msra.mxu0 0.0
  %1668 = vmatprep.mubr.f32.mxu0 0.0
  %1669 = vmatmul.mubr.f32.gmra.mrb[0].mxu0 %v1511
  %v1670 = vpop.f32.mrb[0].mxu0
  %v1671 = vadd.f32 %v1602, %v1670
  %v1672 = vpop.f32.mrb[0].mxu0
  %1673 = vmatprep.mubr.f32.mxu0 0.0
  %1674 = vmatmul.mubr.f32.gmra.mrb[0].mxu0 %v1514
  %v1675 = vpop.f32.mrb[0].mxu0
  %v1676 = vadd.f32 %v1602, %v1675
  %v1677 = vpop.f32.mrb[0].mxu0
  %1678 = vdwg.mxu0
  %s1679 = scalar_lea.vmem %s4, 320
  %v1680 = vld [vmem:[%s1679] sm:$0xff]
  %v1681 = vld [vmem:[%s1679 + $0x8] sm:$0xff]
  %v1682 = vld [vmem:[%s1679 + $0x10] sm:$0xff]
  %v1683 = vld [vmem:[%s1679 + $0x18] sm:$0xff]
  %s1684 = scalar_lea.vmem %s5, 10
  %v1685 = vld [vmem:[%s1684] sm:$0x1]
  %v1687 = vlaneseq
  %v1688 = vshrl.u32 %v1687, 7
  %v1689 = vsub.s32 0, %v1688
  %v1690 = vrot.slane %v1685, %v1689
  %1692 = vmatprep.subr.mxu0 0.0
  %1693 = vmatpush1.msra.mxu0 %v1680
  %1694 = vmatprep.subr.mxu0 0.0
  %1695 = vmatpush1.msra.mxu0 %v1681
  %1696 = vmatprep.subr.mxu0 0.0
  %1697 = vmatpush1.msra.mxu0 %v1682
  %1698 = vmatprep.subr.mxu0 0.0
  %1699 = vmatpush1.msra.mxu0 %v1683
  %1700 = vmatprep.subr.mxu0 0.0
  %1701 = vmatpush1.msra.mxu0 0.0
  %1702 = vmatprep.subr.mxu0 0.0
  %1703 = vmatpush1.msra.mxu0 0.0
  %1704 = vmatprep.subr.mxu0 0.0
  %1705 = vmatpush1.msra.mxu0 0.0
  %1706 = vmatprep.subr.mxu0 0.0
  %1707 = vmatpush1.msra.mxu0 0.0
  %1708 = vmatprep.subr.mxu0 0.0
  %1709 = vmatpush1.msra.mxu0 0.0
  %1710 = vmatprep.subr.mxu0 0.0
  %1711 = vmatpush1.msra.mxu0 0.0
  %1712 = vmatprep.subr.mxu0 0.0
  %1713 = vmatpush1.msra.mxu0 0.0
  %1714 = vmatprep.subr.mxu0 0.0
  %1715 = vmatpush1.msra.mxu0 0.0
  %1716 = vmatprep.subr.mxu0 0.0
  %1717 = vmatpush1.msra.mxu0 0.0
  %1718 = vmatprep.subr.mxu0 0.0
  %1719 = vmatpush1.msra.mxu0 0.0
  %1720 = vmatprep.subr.mxu0 0.0
  %1721 = vmatpush1.msra.mxu0 0.0
  %1722 = vmatprep.subr.mxu0 0.0
  %1723 = vmatpush1.msra.mxu0 0.0
  %1724 = vmatprep.subr.mxu0 0.0
  %1725 = vmatpush1.msra.mxu0 0.0
  %1726 = vmatprep.subr.mxu0 0.0
  %1727 = vmatpush1.msra.mxu0 0.0
  %1728 = vmatprep.subr.mxu0 0.0
  %1729 = vmatpush1.msra.mxu0 0.0
  %1730 = vmatprep.subr.mxu0 0.0
  %1731 = vmatpush1.msra.mxu0 0.0
  %1732 = vmatprep.subr.mxu0 0.0
  %1733 = vmatpush1.msra.mxu0 0.0
  %1734 = vmatprep.subr.mxu0 0.0
  %1735 = vmatpush1.msra.mxu0 0.0
  %1736 = vmatprep.subr.mxu0 0.0
  %1737 = vmatpush1.msra.mxu0 0.0
  %1738 = vmatprep.subr.mxu0 0.0
  %1739 = vmatpush1.msra.mxu0 0.0
  %1740 = vmatprep.subr.mxu0 0.0
  %1741 = vmatpush1.msra.mxu0 0.0
  %1742 = vmatprep.subr.mxu0 0.0
  %1743 = vmatpush1.msra.mxu0 0.0
  %1744 = vmatprep.subr.mxu0 0.0
  %1745 = vmatpush1.msra.mxu0 0.0
  %1746 = vmatprep.subr.mxu0 0.0
  %1747 = vmatpush1.msra.mxu0 0.0
  %1748 = vmatprep.subr.mxu0 0.0
  %1749 = vmatpush1.msra.mxu0 0.0
  %1750 = vmatprep.subr.mxu0 0.0
  %1751 = vmatpush1.msra.mxu0 0.0
  %1752 = vmatprep.subr.mxu0 0.0
  %1753 = vmatpush1.msra.mxu0 0.0
  %1754 = vmatprep.subr.mxu0 0.0
  %1755 = vmatpush1.msra.mxu0 0.0
  %1756 = vmatprep.mubr.f32.mxu0 0.0
  %1757 = vmatmul.mubr.f32.gmra.mrb[0].mxu0 %v1511
  %v1758 = vpop.f32.mrb[0].mxu0
  %v1759 = vadd.f32 %v1690, %v1758
  %v1760 = vpop.f32.mrb[0].mxu0
  %1761 = vmatprep.mubr.f32.mxu0 0.0
  %1762 = vmatmul.mubr.f32.gmra.mrb[0].mxu0 %v1514
  %v1763 = vpop.f32.mrb[0].mxu0
  %v1764 = vadd.f32 %v1690, %v1763
  %v1765 = vpop.f32.mrb[0].mxu0
  %1766 = vdwg.mxu0
  %v1768 = vsel %vm377, %v1583, 0
  %v1771 = vsel %vm377, %v1588, 0
  %v1774 = vsel %vm377, %v1671, 0
  %v1777 = vsel %vm377, %v1676, 0
  %1779 = vmatprep.subr.mxu0 0.0
  %1780 = vmatpush1.xpose.msra.mxu0 %v1774
  %1781 = vmatprep.subr.mxu0 0.0
  %1782 = vmatpush1.xpose.msra.mxu0 %v1777
  %1783 = vmatprep.subr.mxu0 0.0
  %1784 = vmatpush1.xpose.msra.mxu0 0.0
  %1785 = vmatprep.subr.mxu0 0.0
  %1786 = vmatpush1.xpose.msra.mxu0 0.0
  %1787 = vmatprep.subr.mxu0 0.0
  %1788 = vmatpush1.xpose.msra.mxu0 0.0
  %1789 = vmatprep.subr.mxu0 0.0
  %1790 = vmatpush1.xpose.msra.mxu0 0.0
  %1791 = vmatprep.subr.mxu0 0.0
  %1792 = vmatpush1.xpose.msra.mxu0 0.0
  %1793 = vmatprep.subr.mxu0 0.0
  %1794 = vmatpush1.xpose.msra.mxu0 0.0
  %1795 = vmatprep.subr.mxu0 0.0
  %1796 = vmatpush1.xpose.msra.mxu0 0.0
  %1797 = vmatprep.subr.mxu0 0.0
  %1798 = vmatpush1.xpose.msra.mxu0 0.0
  %1799 = vmatprep.subr.mxu0 0.0
  %1800 = vmatpush1.xpose.msra.mxu0 0.0
  %1801 = vmatprep.subr.mxu0 0.0
  %1802 = vmatpush1.xpose.msra.mxu0 0.0
  %1803 = vmatprep.subr.mxu0 0.0
  %1804 = vmatpush1.xpose.msra.mxu0 0.0
  %1805 = vmatprep.subr.mxu0 0.0
  %1806 = vmatpush1.xpose.msra.mxu0 0.0
  %1807 = vmatprep.subr.mxu0 0.0
  %1808 = vmatpush1.xpose.msra.mxu0 0.0
  %1809 = vmatprep.subr.mxu0 0.0
  %1810 = vmatpush1.xpose.msra.mxu0 0.0
  %1811 = vmatprep.subr.mxu0 0.0
  %1812 = vmatpush1.xpose.msra.mxu0 0.0
  %1813 = vmatprep.subr.mxu0 0.0
  %1814 = vmatpush1.xpose.msra.mxu0 0.0
  %1815 = vmatprep.subr.mxu0 0.0
  %1816 = vmatpush1.xpose.msra.mxu0 0.0
  %1817 = vmatprep.subr.mxu0 0.0
  %1818 = vmatpush1.xpose.msra.mxu0 0.0
  %1819 = vmatprep.subr.mxu0 0.0
  %1820 = vmatpush1.xpose.msra.mxu0 0.0
  %1821 = vmatprep.subr.mxu0 0.0
  %1822 = vmatpush1.xpose.msra.mxu0 0.0
  %1823 = vmatprep.subr.mxu0 0.0
  %1824 = vmatpush1.xpose.msra.mxu0 0.0
  %1825 = vmatprep.subr.mxu0 0.0
  %1826 = vmatpush1.xpose.msra.mxu0 0.0
  %1827 = vmatprep.subr.mxu0 0.0
  %1828 = vmatpush1.xpose.msra.mxu0 0.0
  %1829 = vmatprep.subr.mxu0 0.0
  %1830 = vmatpush1.xpose.msra.mxu0 0.0
  %1831 = vmatprep.subr.mxu0 0.0
  %1832 = vmatpush1.xpose.msra.mxu0 0.0
  %1833 = vmatprep.subr.mxu0 0.0
  %1834 = vmatpush1.xpose.msra.mxu0 0.0
  %1835 = vmatprep.subr.mxu0 0.0
  %1836 = vmatpush1.xpose.msra.mxu0 0.0
  %1837 = vmatprep.subr.mxu0 0.0
  %1838 = vmatpush1.xpose.msra.mxu0 0.0
  %1839 = vmatprep.subr.mxu0 0.0
  %1840 = vmatpush1.xpose.msra.mxu0 0.0
  %1841 = vmatprep.subr.mxu0 0.0
  %1842 = vmatpush1.xpose.msra.mxu0 0.0
  %1843 = vmatprep.mubr.f32.mxu0 0.0
  %1844 = vmatmul.mubr.f32.gmra.mrb[0].mxu0 %v1768
  %v1845 = vpop.f32.mrb[0].mxu0
  %v1846 = vadd.f32 0.0, %v1845
  %v1847 = vpop.f32.mrb[0].mxu0
  %1848 = vmatprep.mubr.f32.mxu0 0.0
  %1849 = vmatmul.mubr.f32.gmra.mrb[0].mxu0 %v1771
  %v1850 = vpop.f32.mrb[0].mxu0
  %v1851 = vadd.f32 0.0, %v1850
  %v1852 = vpop.f32.mrb[0].mxu0
  %1853 = vdwg.mxu0
  %v1854 = vmul.f32 %v1846, 0.25
  %v1855 = vmul.f32 %v1851, 0.25
  %v1856 = vadd.f32 %v1854, %v59
  %v1857 = vadd.f32 %v1855, %v60
  %v1858 = vsel %vm377, %v1856, -inf
  %1859 = vmax.xlane.f32.xlu0 %v1858
  %v1860 = vpop.xlane.xlu0 %1859
  %v1861 = vsel %vm377, %v1857, -inf
  %1862 = vmax.xlane.f32.xlu0 %v1861
  %v1863 = vpop.xlane.xlu0 %1862
  %v1864 = vsub.f32 %v1856, %v1860
  %v1865 = vsub.f32 %v1857, %v1863
  %v1866 = vmul.f32 %v1864, 1.442695
  %v1867 = vpow.pop %v1866
  %v1868 = vmul.f32 %v1865, 1.442695
  %v1869 = vpow.pop %v1868
  %v1870 = vsel %vm377, %v1867, 0.0
  %1871 = vadd.xlane.f32.xlu0 %v1870
  %v1872 = vpop.xlane.xlu0 %1871
  %v1873 = vsel %vm377, %v1869, 0.0
  %1874 = vadd.xlane.f32.xlu0 %v1873
  %v1875 = vpop.xlane.xlu0 %1874
  %v1876 = vrcp.pop %v1872
  %v1877 = vmul.f32 %v1867, %v1876
  %v1878 = vrcp.pop %v1875
  %v1879 = vmul.f32 %v1869, %v1878
  %v1881 = vsel %vm377, %v1877, 0
  %v1884 = vsel %vm377, %v1879, 0
  %1886 = vmatprep.subr.mxu0 0.0
  %1887 = vmatpush1.msra.mxu0 %v1759
  %1888 = vmatprep.subr.mxu0 0.0
  %1889 = vmatpush1.msra.mxu0 %v1764
  %1890 = vmatprep.subr.mxu0 0.0
  %1891 = vmatpush1.msra.mxu0 0.0
  %1892 = vmatprep.subr.mxu0 0.0
  %1893 = vmatpush1.msra.mxu0 0.0
  %1894 = vmatprep.subr.mxu0 0.0
  %1895 = vmatpush1.msra.mxu0 0.0
  %1896 = vmatprep.subr.mxu0 0.0
  %1897 = vmatpush1.msra.mxu0 0.0
  %1898 = vmatprep.subr.mxu0 0.0
  %1899 = vmatpush1.msra.mxu0 0.0
  %1900 = vmatprep.subr.mxu0 0.0
  %1901 = vmatpush1.msra.mxu0 0.0
  %1902 = vmatprep.subr.mxu0 0.0
  %1903 = vmatpush1.msra.mxu0 0.0
  %1904 = vmatprep.subr.mxu0 0.0
  %1905 = vmatpush1.msra.mxu0 0.0
  %1906 = vmatprep.subr.mxu0 0.0
  %1907 = vmatpush1.msra.mxu0 0.0
  %1908 = vmatprep.subr.mxu0 0.0
  %1909 = vmatpush1.msra.mxu0 0.0
  %1910 = vmatprep.subr.mxu0 0.0
  %1911 = vmatpush1.msra.mxu0 0.0
  %1912 = vmatprep.subr.mxu0 0.0
  %1913 = vmatpush1.msra.mxu0 0.0
  %1914 = vmatprep.subr.mxu0 0.0
  %1915 = vmatpush1.msra.mxu0 0.0
  %1916 = vmatprep.subr.mxu0 0.0
  %1917 = vmatpush1.msra.mxu0 0.0
  %1918 = vmatprep.subr.mxu0 0.0
  %1919 = vmatpush1.msra.mxu0 0.0
  %1920 = vmatprep.subr.mxu0 0.0
  %1921 = vmatpush1.msra.mxu0 0.0
  %1922 = vmatprep.subr.mxu0 0.0
  %1923 = vmatpush1.msra.mxu0 0.0
  %1924 = vmatprep.subr.mxu0 0.0
  %1925 = vmatpush1.msra.mxu0 0.0
  %1926 = vmatprep.subr.mxu0 0.0
  %1927 = vmatpush1.msra.mxu0 0.0
  %1928 = vmatprep.subr.mxu0 0.0
  %1929 = vmatpush1.msra.mxu0 0.0
  %1930 = vmatprep.subr.mxu0 0.0
  %1931 = vmatpush1.msra.mxu0 0.0
  %1932 = vmatprep.subr.mxu0 0.0
  %1933 = vmatpush1.msra.mxu0 0.0
  %1934 = vmatprep.subr.mxu0 0.0
  %1935 = vmatpush1.msra.mxu0 0.0
  %1936 = vmatprep.subr.mxu0 0.0
  %1937 = vmatpush1.msra.mxu0 0.0
  %1938 = vmatprep.subr.mxu0 0.0
  %1939 = vmatpush1.msra.mxu0 0.0
  %1940 = vmatprep.subr.mxu0 0.0
  %1941 = vmatpush1.msra.mxu0 0.0
  %1942 = vmatprep.subr.mxu0 0.0
  %1943 = vmatpush1.msra.mxu0 0.0
  %1944 = vmatprep.subr.mxu0 0.0
  %1945 = vmatpush1.msra.mxu0 0.0
  %1946 = vmatprep.subr.mxu0 0.0
  %1947 = vmatpush1.msra.mxu0 0.0
  %1948 = vmatprep.subr.mxu0 0.0
  %1949 = vmatpush1.msra.mxu0 0.0
  %1950 = vmatprep.mubr.f32.mxu0 0.0
  %1951 = vmatmul.mubr.f32.gmra.mrb[0].mxu0 %v1881
  %v1952 = vpop.f32.mrb[0].mxu0
  %v1953 = vadd.f32 0.0, %v1952
  %v1954 = vpop.f32.mrb[0].mxu0
  %1955 = vmatprep.mubr.f32.mxu0 0.0
  %1956 = vmatmul.mubr.f32.gmra.mrb[0].mxu0 %v1884
  %v1957 = vpop.f32.mrb[0].mxu0
  %v1958 = vadd.f32 0.0, %v1957
  %v1959 = vpop.f32.mrb[0].mxu0
  %1960 = vdwg.mxu0
  %s1961 = scalar_lea.vmem %s6, 32
  %v1962 = vld [vmem:[%s1961] sm:$0xff]
  %v1963 = vld [vmem:[%s1961 + $0x8] sm:$0xff]
  %s1964 = scalar_lea.vmem %s4, 224
  %v1965 = vld [vmem:[%s1964] sm:$0xff]
  %v1966 = vld [vmem:[%s1964 + $0x8] sm:$0xff]
  %v1967 = vld [vmem:[%s1964 + $0x10] sm:$0xff]
  %v1968 = vld [vmem:[%s1964 + $0x18] sm:$0xff]
  %s1969 = scalar_lea.vmem %s5, 7
  %v1970 = vld [vmem:[%s1969] sm:$0x1]
  %v1972 = vlaneseq
  %v1973 = vshrl.u32 %v1972, 7
  %v1974 = vsub.s32 0, %v1973
  %v1975 = vrot.slane %v1970, %v1974
  %1977 = vmatprep.subr.mxu0 0.0
  %1978 = vmatpush1.msra.mxu0 %v1965
  %1979 = vmatprep.subr.mxu0 0.0
  %1980 = vmatpush1.msra.mxu0 %v1966
  %1981 = vmatprep.subr.mxu0 0.0
  %1982 = vmatpush1.msra.mxu0 %v1967
  %1983 = vmatprep.subr.mxu0 0.0
  %1984 = vmatpush1.msra.mxu0 %v1968
  %1985 = vmatprep.subr.mxu0 0.0
  %1986 = vmatpush1.msra.mxu0 0.0
  %1987 = vmatprep.subr.mxu0 0.0
  %1988 = vmatpush1.msra.mxu0 0.0
  %1989 = vmatprep.subr.mxu0 0.0
  %1990 = vmatpush1.msra.mxu0 0.0
  %1991 = vmatprep.subr.mxu0 0.0
  %1992 = vmatpush1.msra.mxu0 0.0
  %1993 = vmatprep.subr.mxu0 0.0
  %1994 = vmatpush1.msra.mxu0 0.0
  %1995 = vmatprep.subr.mxu0 0.0
  %1996 = vmatpush1.msra.mxu0 0.0
  %1997 = vmatprep.subr.mxu0 0.0
  %1998 = vmatpush1.msra.mxu0 0.0
  %1999 = vmatprep.subr.mxu0 0.0
  %2000 = vmatpush1.msra.mxu0 0.0
  %2001 = vmatprep.subr.mxu0 0.0
  %2002 = vmatpush1.msra.mxu0 0.0
  %2003 = vmatprep.subr.mxu0 0.0
  %2004 = vmatpush1.msra.mxu0 0.0
  %2005 = vmatprep.subr.mxu0 0.0
  %2006 = vmatpush1.msra.mxu0 0.0
  %2007 = vmatprep.subr.mxu0 0.0
  %2008 = vmatpush1.msra.mxu0 0.0
  %2009 = vmatprep.subr.mxu0 0.0
  %2010 = vmatpush1.msra.mxu0 0.0
  %2011 = vmatprep.subr.mxu0 0.0
  %2012 = vmatpush1.msra.mxu0 0.0
  %2013 = vmatprep.subr.mxu0 0.0
  %2014 = vmatpush1.msra.mxu0 0.0
  %2015 = vmatprep.subr.mxu0 0.0
  %2016 = vmatpush1.msra.mxu0 0.0
  %2017 = vmatprep.subr.mxu0 0.0
  %2018 = vmatpush1.msra.mxu0 0.0
  %2019 = vmatprep.subr.mxu0 0.0
  %2020 = vmatpush1.msra.mxu0 0.0
  %2021 = vmatprep.subr.mxu0 0.0
  %2022 = vmatpush1.msra.mxu0 0.0
  %2023 = vmatprep.subr.mxu0 0.0
  %2024 = vmatpush1.msra.mxu0 0.0
  %2025 = vmatprep.subr.mxu0 0.0
  %2026 = vmatpush1.msra.mxu0 0.0
  %2027 = vmatprep.subr.mxu0 0.0
  %2028 = vmatpush1.msra.mxu0 0.0
  %2029 = vmatprep.subr.mxu0 0.0
  %2030 = vmatpush1.msra.mxu0 0.0
  %2031 = vmatprep.subr.mxu0 0.0
  %2032 = vmatpush1.msra.mxu0 0.0
  %2033 = vmatprep.subr.mxu0 0.0
  %2034 = vmatpush1.msra.mxu0 0.0
  %2035 = vmatprep.subr.mxu0 0.0
  %2036 = vmatpush1.msra.mxu0 0.0
  %2037 = vmatprep.subr.mxu0 0.0
  %2038 = vmatpush1.msra.mxu0 0.0
  %2039 = vmatprep.subr.mxu0 0.0
  %2040 = vmatpush1.msra.mxu0 0.0
  %2041 = vmatprep.mubr.f32.mxu0 0.0
  %2042 = vmatmul.mubr.f32.gmra.mrb[0].mxu0 %v1511
  %v2043 = vpop.f32.mrb[0].mxu0
  %v2044 = vadd.f32 %v1975, %v2043
  %v2045 = vpop.f32.mrb[0].mxu0
  %2046 = vmatprep.mubr.f32.mxu0 0.0
  %2047 = vmatmul.mubr.f32.gmra.mrb[0].mxu0 %v1514
  %v2048 = vpop.f32.mrb[0].mxu0
  %v2049 = vadd.f32 %v1975, %v2048
  %v2050 = vpop.f32.mrb[0].mxu0
  %2051 = vdwg.mxu0
  %s2052 = scalar_lea.vmem %s4, 288
  %v2053 = vld [vmem:[%s2052] sm:$0xff]
  %v2054 = vld [vmem:[%s2052 + $0x8] sm:$0xff]
  %v2055 = vld [vmem:[%s2052 + $0x10] sm:$0xff]
  %v2056 = vld [vmem:[%s2052 + $0x18] sm:$0xff]
  %s2057 = scalar_lea.vmem %s5, 9
  %v2058 = vld [vmem:[%s2057] sm:$0x1]
  %v2060 = vlaneseq
  %v2061 = vshrl.u32 %v2060, 7
  %v2062 = vsub.s32 0, %v2061
  %v2063 = vrot.slane %v2058, %v2062
  %2065 = vmatprep.subr.mxu0 0.0
  %2066 = vmatpush1.msra.mxu0 %v2053
  %2067 = vmatprep.subr.mxu0 0.0
  %2068 = vmatpush1.msra.mxu0 %v2054
  %2069 = vmatprep.subr.mxu0 0.0
  %2070 = vmatpush1.msra.mxu0 %v2055
  %2071 = vmatprep.subr.mxu0 0.0
  %2072 = vmatpush1.msra.mxu0 %v2056
  %2073 = vmatprep.subr.mxu0 0.0
  %2074 = vmatpush1.msra.mxu0 0.0
  %2075 = vmatprep.subr.mxu0 0.0
  %2076 = vmatpush1.msra.mxu0 0.0
  %2077 = vmatprep.subr.mxu0 0.0
  %2078 = vmatpush1.msra.mxu0 0.0
  %2079 = vmatprep.subr.mxu0 0.0
  %2080 = vmatpush1.msra.mxu0 0.0
  %2081 = vmatprep.subr.mxu0 0.0
  %2082 = vmatpush1.msra.mxu0 0.0
  %2083 = vmatprep.subr.mxu0 0.0
  %2084 = vmatpush1.msra.mxu0 0.0
  %2085 = vmatprep.subr.mxu0 0.0
  %2086 = vmatpush1.msra.mxu0 0.0
  %2087 = vmatprep.subr.mxu0 0.0
  %2088 = vmatpush1.msra.mxu0 0.0
  %2089 = vmatprep.subr.mxu0 0.0
  %2090 = vmatpush1.msra.mxu0 0.0
  %2091 = vmatprep.subr.mxu0 0.0
  %2092 = vmatpush1.msra.mxu0 0.0
  %2093 = vmatprep.subr.mxu0 0.0
  %2094 = vmatpush1.msra.mxu0 0.0
  %2095 = vmatprep.subr.mxu0 0.0
  %2096 = vmatpush1.msra.mxu0 0.0
  %2097 = vmatprep.subr.mxu0 0.0
  %2098 = vmatpush1.msra.mxu0 0.0
  %2099 = vmatprep.subr.mxu0 0.0
  %2100 = vmatpush1.msra.mxu0 0.0
  %2101 = vmatprep.subr.mxu0 0.0
  %2102 = vmatpush1.msra.mxu0 0.0
  %2103 = vmatprep.subr.mxu0 0.0
  %2104 = vmatpush1.msra.mxu0 0.0
  %2105 = vmatprep.subr.mxu0 0.0
  %2106 = vmatpush1.msra.mxu0 0.0
  %2107 = vmatprep.subr.mxu0 0.0
  %2108 = vmatpush1.msra.mxu0 0.0
  %2109 = vmatprep.subr.mxu0 0.0
  %2110 = vmatpush1.msra.mxu0 0.0
  %2111 = vmatprep.subr.mxu0 0.0
  %2112 = vmatpush1.msra.mxu0 0.0
  %2113 = vmatprep.subr.mxu0 0.0
  %2114 = vmatpush1.msra.mxu0 0.0
  %2115 = vmatprep.subr.mxu0 0.0
  %2116 = vmatpush1.msra.mxu0 0.0
  %2117 = vmatprep.subr.mxu0 0.0
  %2118 = vmatpush1.msra.mxu0 0.0
  %2119 = vmatprep.subr.mxu0 0.0
  %2120 = vmatpush1.msra.mxu0 0.0
  %2121 = vmatprep.subr.mxu0 0.0
  %2122 = vmatpush1.msra.mxu0 0.0
  %2123 = vmatprep.subr.mxu0 0.0
  %2124 = vmatpush1.msra.mxu0 0.0
  %2125 = vmatprep.subr.mxu0 0.0
  %2126 = vmatpush1.msra.mxu0 0.0
  %2127 = vmatprep.subr.mxu0 0.0
  %2128 = vmatpush1.msra.mxu0 0.0
  %2129 = vmatprep.mubr.f32.mxu0 0.0
  %2130 = vmatmul.mubr.f32.gmra.mrb[0].mxu0 %v1511
  %v2131 = vpop.f32.mrb[0].mxu0
  %v2132 = vadd.f32 %v2063, %v2131
  %v2133 = vpop.f32.mrb[0].mxu0
  %2134 = vmatprep.mubr.f32.mxu0 0.0
  %2135 = vmatmul.mubr.f32.gmra.mrb[0].mxu0 %v1514
  %v2136 = vpop.f32.mrb[0].mxu0
  %v2137 = vadd.f32 %v2063, %v2136
  %v2138 = vpop.f32.mrb[0].mxu0
  %2139 = vdwg.mxu0
  %s2140 = scalar_lea.vmem %s4, 352
  %v2141 = vld [vmem:[%s2140] sm:$0xff]
  %v2142 = vld [vmem:[%s2140 + $0x8] sm:$0xff]
  %v2143 = vld [vmem:[%s2140 + $0x10] sm:$0xff]
  %v2144 = vld [vmem:[%s2140 + $0x18] sm:$0xff]
  %s2145 = scalar_lea.vmem %s5, 11
  %v2146 = vld [vmem:[%s2145] sm:$0x1]
  %v2148 = vlaneseq
  %v2149 = vshrl.u32 %v2148, 7
  %v2150 = vsub.s32 0, %v2149
  %v2151 = vrot.slane %v2146, %v2150
  %2153 = vmatprep.subr.mxu0 0.0
  %2154 = vmatpush1.msra.mxu0 %v2141
  %2155 = vmatprep.subr.mxu0 0.0
  %2156 = vmatpush1.msra.mxu0 %v2142
  %2157 = vmatprep.subr.mxu0 0.0
  %2158 = vmatpush1.msra.mxu0 %v2143
  %2159 = vmatprep.subr.mxu0 0.0
  %2160 = vmatpush1.msra.mxu0 %v2144
  %2161 = vmatprep.subr.mxu0 0.0
  %2162 = vmatpush1.msra.mxu0 0.0
  %2163 = vmatprep.subr.mxu0 0.0
  %2164 = vmatpush1.msra.mxu0 0.0
  %2165 = vmatprep.subr.mxu0 0.0
  %2166 = vmatpush1.msra.mxu0 0.0
  %2167 = vmatprep.subr.mxu0 0.0
  %2168 = vmatpush1.msra.mxu0 0.0
  %2169 = vmatprep.subr.mxu0 0.0
  %2170 = vmatpush1.msra.mxu0 0.0
  %2171 = vmatprep.subr.mxu0 0.0
  %2172 = vmatpush1.msra.mxu0 0.0
  %2173 = vmatprep.subr.mxu0 0.0
  %2174 = vmatpush1.msra.mxu0 0.0
  %2175 = vmatprep.subr.mxu0 0.0
  %2176 = vmatpush1.msra.mxu0 0.0
  %2177 = vmatprep.subr.mxu0 0.0
  %2178 = vmatpush1.msra.mxu0 0.0
  %2179 = vmatprep.subr.mxu0 0.0
  %2180 = vmatpush1.msra.mxu0 0.0
  %2181 = vmatprep.subr.mxu0 0.0
  %2182 = vmatpush1.msra.mxu0 0.0
  %2183 = vmatprep.subr.mxu0 0.0
  %2184 = vmatpush1.msra.mxu0 0.0
  %2185 = vmatprep.subr.mxu0 0.0
  %2186 = vmatpush1.msra.mxu0 0.0
  %2187 = vmatprep.subr.mxu0 0.0
  %2188 = vmatpush1.msra.mxu0 0.0
  %2189 = vmatprep.subr.mxu0 0.0
  %2190 = vmatpush1.msra.mxu0 0.0
  %2191 = vmatprep.subr.mxu0 0.0
  %2192 = vmatpush1.msra.mxu0 0.0
  %2193 = vmatprep.subr.mxu0 0.0
  %2194 = vmatpush1.msra.mxu0 0.0
  %2195 = vmatprep.subr.mxu0 0.0
  %2196 = vmatpush1.msra.mxu0 0.0
  %2197 = vmatprep.subr.mxu0 0.0
  %2198 = vmatpush1.msra.mxu0 0.0
  %2199 = vmatprep.subr.mxu0 0.0
  %2200 = vmatpush1.msra.mxu0 0.0
  %2201 = vmatprep.subr.mxu0 0.0
  %2202 = vmatpush1.msra.mxu0 0.0
  %2203 = vmatprep.subr.mxu0 0.0
  %2204 = vmatpush1.msra.mxu0 0.0
  %2205 = vmatprep.subr.mxu0 0.0
  %2206 = vmatpush1.msra.mxu0 0.0
  %2207 = vmatprep.subr.mxu0 0.0
  %2208 = vmatpush1.msra.mxu0 0.0
  %2209 = vmatprep.subr.mxu0 0.0
  %2210 = vmatpush1.msra.mxu0 0.0
  %2211 = vmatprep.subr.mxu0 0.0
  %2212 = vmatpush1.msra.mxu0 0.0
  %2213 = vmatprep.subr.mxu0 0.0
  %2214 = vmatpush1.msra.mxu0 0.0
  %2215 = vmatprep.subr.mxu0 0.0
  %2216 = vmatpush1.msra.mxu0 0.0
  %2217 = vmatprep.mubr.f32.mxu0 0.0
  %2218 = vmatmul.mubr.f32.gmra.mrb[0].mxu0 %v1511
  %v2219 = vpop.f32.mrb[0].mxu0
  %v2220 = vadd.f32 %v2151, %v2219
  %v2221 = vpop.f32.mrb[0].mxu0
  %2222 = vmatprep.mubr.f32.mxu0 0.0
  %2223 = vmatmul.mubr.f32.gmra.mrb[0].mxu0 %v1514
  %v2224 = vpop.f32.mrb[0].mxu0
  %v2225 = vadd.f32 %v2151, %v2224
  %v2226 = vpop.f32.mrb[0].mxu0
  %2227 = vdwg.mxu0
  %v2229 = vsel %vm377, %v2044, 0
  %v2232 = vsel %vm377, %v2049, 0
  %v2235 = vsel %vm377, %v2132, 0
  %v2238 = vsel %vm377, %v2137, 0
  %2240 = vmatprep.subr.mxu0 0.0
  %2241 = vmatpush1.xpose.msra.mxu0 %v2235
  %2242 = vmatprep.subr.mxu0 0.0
  %2243 = vmatpush1.xpose.msra.mxu0 %v2238
  %2244 = vmatprep.subr.mxu0 0.0
  %2245 = vmatpush1.xpose.msra.mxu0 0.0
  %2246 = vmatprep.subr.mxu0 0.0
  %2247 = vmatpush1.xpose.msra.mxu0 0.0
  %2248 = vmatprep.subr.mxu0 0.0
  %2249 = vmatpush1.xpose.msra.mxu0 0.0
  %2250 = vmatprep.subr.mxu0 0.0
  %2251 = vmatpush1.xpose.msra.mxu0 0.0
  %2252 = vmatprep.subr.mxu0 0.0
  %2253 = vmatpush1.xpose.msra.mxu0 0.0
  %2254 = vmatprep.subr.mxu0 0.0
  %2255 = vmatpush1.xpose.msra.mxu0 0.0
  %2256 = vmatprep.subr.mxu0 0.0
  %2257 = vmatpush1.xpose.msra.mxu0 0.0
  %2258 = vmatprep.subr.mxu0 0.0
  %2259 = vmatpush1.xpose.msra.mxu0 0.0
  %2260 = vmatprep.subr.mxu0 0.0
  %2261 = vmatpush1.xpose.msra.mxu0 0.0
  %2262 = vmatprep.subr.mxu0 0.0
  %2263 = vmatpush1.xpose.msra.mxu0 0.0
  %2264 = vmatprep.subr.mxu0 0.0
  %2265 = vmatpush1.xpose.msra.mxu0 0.0
  %2266 = vmatprep.subr.mxu0 0.0
  %2267 = vmatpush1.xpose.msra.mxu0 0.0
  %2268 = vmatprep.subr.mxu0 0.0
  %2269 = vmatpush1.xpose.msra.mxu0 0.0
  %2270 = vmatprep.subr.mxu0 0.0
  %2271 = vmatpush1.xpose.msra.mxu0 0.0
  %2272 = vmatprep.subr.mxu0 0.0
  %2273 = vmatpush1.xpose.msra.mxu0 0.0
  %2274 = vmatprep.subr.mxu0 0.0
  %2275 = vmatpush1.xpose.msra.mxu0 0.0
  %2276 = vmatprep.subr.mxu0 0.0
  %2277 = vmatpush1.xpose.msra.mxu0 0.0
  %2278 = vmatprep.subr.mxu0 0.0
  %2279 = vmatpush1.xpose.msra.mxu0 0.0
  %2280 = vmatprep.subr.mxu0 0.0
  %2281 = vmatpush1.xpose.msra.mxu0 0.0
  %2282 = vmatprep.subr.mxu0 0.0
  %2283 = vmatpush1.xpose.msra.mxu0 0.0
  %2284 = vmatprep.subr.mxu0 0.0
  %2285 = vmatpush1.xpose.msra.mxu0 0.0
  %2286 = vmatprep.subr.mxu0 0.0
  %2287 = vmatpush1.xpose.msra.mxu0 0.0
  %2288 = vmatprep.subr.mxu0 0.0
  %2289 = vmatpush1.xpose.msra.mxu0 0.0
  %2290 = vmatprep.subr.mxu0 0.0
  %2291 = vmatpush1.xpose.msra.mxu0 0.0
  %2292 = vmatprep.subr.mxu0 0.0
  %2293 = vmatpush1.xpose.msra.mxu0 0.0
  %2294 = vmatprep.subr.mxu0 0.0
  %2295 = vmatpush1.xpose.msra.mxu0 0.0
  %2296 = vmatprep.subr.mxu0 0.0
  %2297 = vmatpush1.xpose.msra.mxu0 0.0
  %2298 = vmatprep.subr.mxu0 0.0
  %2299 = vmatpush1.xpose.msra.mxu0 0.0
  %2300 = vmatprep.subr.mxu0 0.0
  %2301 = vmatpush1.xpose.msra.mxu0 0.0
  %2302 = vmatprep.subr.mxu0 0.0
  %2303 = vmatpush1.xpose.msra.mxu0 0.0
  %2304 = vmatprep.mubr.f32.mxu0 0.0
  %2305 = vmatmul.mubr.f32.gmra.mrb[0].mxu0 %v2229
  %v2306 = vpop.f32.mrb[0].mxu0
  %v2307 = vadd.f32 0.0, %v2306
  %v2308 = vpop.f32.mrb[0].mxu0
  %2309 = vmatprep.mubr.f32.mxu0 0.0
  %2310 = vmatmul.mubr.f32.gmra.mrb[0].mxu0 %v2232
  %v2311 = vpop.f32.mrb[0].mxu0
  %v2312 = vadd.f32 0.0, %v2311
  %v2313 = vpop.f32.mrb[0].mxu0
  %2314 = vdwg.mxu0
  %v2315 = vmul.f32 %v2307, 0.25
  %v2316 = vmul.f32 %v2312, 0.25
  %v2317 = vadd.f32 %v2315, %v59
  %v2318 = vadd.f32 %v2316, %v60
  %v2319 = vsel %vm377, %v2317, -inf
  %2320 = vmax.xlane.f32.xlu0 %v2319
  %v2321 = vpop.xlane.xlu0 %2320
  %v2322 = vsel %vm377, %v2318, -inf
  %2323 = vmax.xlane.f32.xlu0 %v2322
  %v2324 = vpop.xlane.xlu0 %2323
  %v2325 = vsub.f32 %v2317, %v2321
  %v2326 = vsub.f32 %v2318, %v2324
  %v2327 = vmul.f32 %v2325, 1.442695
  %v2328 = vpow.pop %v2327
  %v2329 = vmul.f32 %v2326, 1.442695
  %v2330 = vpow.pop %v2329
  %v2331 = vsel %vm377, %v2328, 0.0
  %2332 = vadd.xlane.f32.xlu0 %v2331
  %v2333 = vpop.xlane.xlu0 %2332
  %v2334 = vsel %vm377, %v2330, 0.0
  %2335 = vadd.xlane.f32.xlu0 %v2334
  %v2336 = vpop.xlane.xlu0 %2335
  %v2337 = vrcp.pop %v2333
  %v2338 = vmul.f32 %v2328, %v2337
  %v2339 = vrcp.pop %v2336
  %v2340 = vmul.f32 %v2330, %v2339
  %v2342 = vsel %vm377, %v2338, 0
  %v2345 = vsel %vm377, %v2340, 0
  %2347 = vmatprep.subr.mxu0 0.0
  %2348 = vmatpush1.msra.mxu0 %v2220
  %2349 = vmatprep.subr.mxu0 0.0
  %2350 = vmatpush1.msra.mxu0 %v2225
  %2351 = vmatprep.subr.mxu0 0.0
  %2352 = vmatpush1.msra.mxu0 0.0
  %2353 = vmatprep.subr.mxu0 0.0
  %2354 = vmatpush1.msra.mxu0 0.0
  %2355 = vmatprep.subr.mxu0 0.0
  %2356 = vmatpush1.msra.mxu0 0.0
  %2357 = vmatprep.subr.mxu0 0.0
  %2358 = vmatpush1.msra.mxu0 0.0
  %2359 = vmatprep.subr.mxu0 0.0
  %2360 = vmatpush1.msra.mxu0 0.0
  %2361 = vmatprep.subr.mxu0 0.0
  %2362 = vmatpush1.msra.mxu0 0.0
  %2363 = vmatprep.subr.mxu0 0.0
  %2364 = vmatpush1.msra.mxu0 0.0
  %2365 = vmatprep.subr.mxu0 0.0
  %2366 = vmatpush1.msra.mxu0 0.0
  %2367 = vmatprep.subr.mxu0 0.0
  %2368 = vmatpush1.msra.mxu0 0.0
  %2369 = vmatprep.subr.mxu0 0.0
  %2370 = vmatpush1.msra.mxu0 0.0
  %2371 = vmatprep.subr.mxu0 0.0
  %2372 = vmatpush1.msra.mxu0 0.0
  %2373 = vmatprep.subr.mxu0 0.0
  %2374 = vmatpush1.msra.mxu0 0.0
  %2375 = vmatprep.subr.mxu0 0.0
  %2376 = vmatpush1.msra.mxu0 0.0
  %2377 = vmatprep.subr.mxu0 0.0
  %2378 = vmatpush1.msra.mxu0 0.0
  %2379 = vmatprep.subr.mxu0 0.0
  %2380 = vmatpush1.msra.mxu0 0.0
  %2381 = vmatprep.subr.mxu0 0.0
  %2382 = vmatpush1.msra.mxu0 0.0
  %2383 = vmatprep.subr.mxu0 0.0
  %2384 = vmatpush1.msra.mxu0 0.0
  %2385 = vmatprep.subr.mxu0 0.0
  %2386 = vmatpush1.msra.mxu0 0.0
  %2387 = vmatprep.subr.mxu0 0.0
  %2388 = vmatpush1.msra.mxu0 0.0
  %2389 = vmatprep.subr.mxu0 0.0
  %2390 = vmatpush1.msra.mxu0 0.0
  %2391 = vmatprep.subr.mxu0 0.0
  %2392 = vmatpush1.msra.mxu0 0.0
  %2393 = vmatprep.subr.mxu0 0.0
  %2394 = vmatpush1.msra.mxu0 0.0
  %2395 = vmatprep.subr.mxu0 0.0
  %2396 = vmatpush1.msra.mxu0 0.0
  %2397 = vmatprep.subr.mxu0 0.0
  %2398 = vmatpush1.msra.mxu0 0.0
  %2399 = vmatprep.subr.mxu0 0.0
  %2400 = vmatpush1.msra.mxu0 0.0
  %2401 = vmatprep.subr.mxu0 0.0
  %2402 = vmatpush1.msra.mxu0 0.0
  %2403 = vmatprep.subr.mxu0 0.0
  %2404 = vmatpush1.msra.mxu0 0.0
  %2405 = vmatprep.subr.mxu0 0.0
  %2406 = vmatpush1.msra.mxu0 0.0
  %2407 = vmatprep.subr.mxu0 0.0
  %2408 = vmatpush1.msra.mxu0 0.0
  %2409 = vmatprep.subr.mxu0 0.0
  %2410 = vmatpush1.msra.mxu0 0.0
  %2411 = vmatprep.mubr.f32.mxu0 0.0
  %2412 = vmatmul.mubr.f32.gmra.mrb[0].mxu0 %v2342
  %v2413 = vpop.f32.mrb[0].mxu0
  %v2414 = vadd.f32 0.0, %v2413
  %v2415 = vpop.f32.mrb[0].mxu0
  %2416 = vmatprep.mubr.f32.mxu0 0.0
  %2417 = vmatmul.mubr.f32.gmra.mrb[0].mxu0 %v2345
  %v2418 = vpop.f32.mrb[0].mxu0
  %v2419 = vadd.f32 0.0, %v2418
  %v2420 = vpop.f32.mrb[0].mxu0
  %2421 = vdwg.mxu0
  %s2422 = scalar_lea.vmem %s6, 48
  %v2423 = vld [vmem:[%s2422] sm:$0xff]
  %v2424 = vld [vmem:[%s2422 + $0x8] sm:$0xff]
  %v2426 = vsel %vm377, %v2414, 0
  %v2429 = vsel %vm377, %v2419, 0
  %2431 = vmatprep.subr.mxu0 0.0
  %2432 = vmatpush1.msra.mxu0 %v2423
  %2433 = vmatprep.subr.mxu0 0.0
  %2434 = vmatpush1.msra.mxu0 %v2424
  %2435 = vmatprep.subr.mxu0 0.0
  %2436 = vmatpush1.msra.mxu0 0.0
  %2437 = vmatprep.subr.mxu0 0.0
  %2438 = vmatpush1.msra.mxu0 0.0
  %2439 = vmatprep.subr.mxu0 0.0
  %2440 = vmatpush1.msra.mxu0 0.0
  %2441 = vmatprep.subr.mxu0 0.0
  %2442 = vmatpush1.msra.mxu0 0.0
  %2443 = vmatprep.subr.mxu0 0.0
  %2444 = vmatpush1.msra.mxu0 0.0
  %2445 = vmatprep.subr.mxu0 0.0
  %2446 = vmatpush1.msra.mxu0 0.0
  %2447 = vmatprep.subr.mxu0 0.0
  %2448 = vmatpush1.msra.mxu0 0.0
  %2449 = vmatprep.subr.mxu0 0.0
  %2450 = vmatpush1.msra.mxu0 0.0
  %2451 = vmatprep.subr.mxu0 0.0
  %2452 = vmatpush1.msra.mxu0 0.0
  %2453 = vmatprep.subr.mxu0 0.0
  %2454 = vmatpush1.msra.mxu0 0.0
  %2455 = vmatprep.subr.mxu0 0.0
  %2456 = vmatpush1.msra.mxu0 0.0
  %2457 = vmatprep.subr.mxu0 0.0
  %2458 = vmatpush1.msra.mxu0 0.0
  %2459 = vmatprep.subr.mxu0 0.0
  %2460 = vmatpush1.msra.mxu0 0.0
  %2461 = vmatprep.subr.mxu0 0.0
  %2462 = vmatpush1.msra.mxu0 0.0
  %2463 = vmatprep.subr.mxu0 0.0
  %2464 = vmatpush1.msra.mxu0 0.0
  %2465 = vmatprep.subr.mxu0 0.0
  %2466 = vmatpush1.msra.mxu0 0.0
  %2467 = vmatprep.subr.mxu0 0.0
  %2468 = vmatpush1.msra.mxu0 0.0
  %2469 = vmatprep.subr.mxu0 0.0
  %2470 = vmatpush1.msra.mxu0 0.0
  %2471 = vmatprep.subr.mxu0 0.0
  %2472 = vmatpush1.msra.mxu0 0.0
  %2473 = vmatprep.subr.mxu0 0.0
  %2474 = vmatpush1.msra.mxu0 0.0
  %2475 = vmatprep.subr.mxu0 0.0
  %2476 = vmatpush1.msra.mxu0 0.0
  %2477 = vmatprep.subr.mxu0 0.0
  %2478 = vmatpush1.msra.mxu0 0.0
  %2479 = vmatprep.subr.mxu0 0.0
  %2480 = vmatpush1.msra.mxu0 0.0
  %2481 = vmatprep.subr.mxu0 0.0
  %2482 = vmatpush1.msra.mxu0 0.0
  %2483 = vmatprep.subr.mxu0 0.0
  %2484 = vmatpush1.msra.mxu0 0.0
  %2485 = vmatprep.subr.mxu0 0.0
  %2486 = vmatpush1.msra.mxu0 0.0
  %2487 = vmatprep.subr.mxu0 0.0
  %2488 = vmatpush1.msra.mxu0 0.0
  %2489 = vmatprep.subr.mxu0 0.0
  %2490 = vmatpush1.msra.mxu0 0.0
  %2491 = vmatprep.subr.mxu0 0.0
  %2492 = vmatpush1.msra.mxu0 0.0
  %2493 = vmatprep.subr.mxu0 0.0
  %2494 = vmatpush1.msra.mxu0 0.0
  %2495 = vmatprep.mubr.f32.mxu0 0.0
  %2496 = vmatmul.mubr.f32.gmra.mrb[0].mxu0 %v2426
  %v2497 = vpop.f32.mrb[0].mxu0
  %v2498 = vadd.f32 0.0, %v2497
  %v2499 = vpop.f32.mrb[0].mxu0
  %2500 = vmatprep.mubr.f32.mxu0 0.0
  %2501 = vmatmul.mubr.f32.gmra.mrb[0].mxu0 %v2429
  %v2502 = vpop.f32.mrb[0].mxu0
  %v2503 = vadd.f32 0.0, %v2502
  %v2504 = vpop.f32.mrb[0].mxu0
  %2505 = vdwg.mxu0
  %v2507 = vsel %vm377, %v1953, 0
  %v2510 = vsel %vm377, %v1958, 0
  %2512 = vmatprep.subr.mxu0 0.0
  %2513 = vmatpush1.msra.mxu0 %v1962
  %2514 = vmatprep.subr.mxu0 0.0
  %2515 = vmatpush1.msra.mxu0 %v1963
  %2516 = vmatprep.subr.mxu0 0.0
  %2517 = vmatpush1.msra.mxu0 0.0
  %2518 = vmatprep.subr.mxu0 0.0
  %2519 = vmatpush1.msra.mxu0 0.0
  %2520 = vmatprep.subr.mxu0 0.0
  %2521 = vmatpush1.msra.mxu0 0.0
  %2522 = vmatprep.subr.mxu0 0.0
  %2523 = vmatpush1.msra.mxu0 0.0
  %2524 = vmatprep.subr.mxu0 0.0
  %2525 = vmatpush1.msra.mxu0 0.0
  %2526 = vmatprep.subr.mxu0 0.0
  %2527 = vmatpush1.msra.mxu0 0.0
  %2528 = vmatprep.subr.mxu0 0.0
  %2529 = vmatpush1.msra.mxu0 0.0
  %2530 = vmatprep.subr.mxu0 0.0
  %2531 = vmatpush1.msra.mxu0 0.0
  %2532 = vmatprep.subr.mxu0 0.0
  %2533 = vmatpush1.msra.mxu0 0.0
  %2534 = vmatprep.subr.mxu0 0.0
  %2535 = vmatpush1.msra.mxu0 0.0
  %2536 = vmatprep.subr.mxu0 0.0
  %2537 = vmatpush1.msra.mxu0 0.0
  %2538 = vmatprep.subr.mxu0 0.0
  %2539 = vmatpush1.msra.mxu0 0.0
  %2540 = vmatprep.subr.mxu0 0.0
  %2541 = vmatpush1.msra.mxu0 0.0
  %2542 = vmatprep.subr.mxu0 0.0
  %2543 = vmatpush1.msra.mxu0 0.0
  %2544 = vmatprep.subr.mxu0 0.0
  %2545 = vmatpush1.msra.mxu0 0.0
  %2546 = vmatprep.subr.mxu0 0.0
  %2547 = vmatpush1.msra.mxu0 0.0
  %2548 = vmatprep.subr.mxu0 0.0
  %2549 = vmatpush1.msra.mxu0 0.0
  %2550 = vmatprep.subr.mxu0 0.0
  %2551 = vmatpush1.msra.mxu0 0.0
  %2552 = vmatprep.subr.mxu0 0.0
  %2553 = vmatpush1.msra.mxu0 0.0
  %2554 = vmatprep.subr.mxu0 0.0
  %2555 = vmatpush1.msra.mxu0 0.0
  %2556 = vmatprep.subr.mxu0 0.0
  %2557 = vmatpush1.msra.mxu0 0.0
  %2558 = vmatprep.subr.mxu0 0.0
  %2559 = vmatpush1.msra.mxu0 0.0
  %2560 = vmatprep.subr.mxu0 0.0
  %2561 = vmatpush1.msra.mxu0 0.0
  %2562 = vmatprep.subr.mxu0 0.0
  %2563 = vmatpush1.msra.mxu0 0.0
  %2564 = vmatprep.subr.mxu0 0.0
  %2565 = vmatpush1.msra.mxu0 0.0
  %2566 = vmatprep.subr.mxu0 0.0
  %2567 = vmatpush1.msra.mxu0 0.0
  %2568 = vmatprep.subr.mxu0 0.0
  %2569 = vmatpush1.msra.mxu0 0.0
  %2570 = vmatprep.subr.mxu0 0.0
  %2571 = vmatpush1.msra.mxu0 0.0
  %2572 = vmatprep.subr.mxu0 0.0
  %2573 = vmatpush1.msra.mxu0 0.0
  %2574 = vmatprep.subr.mxu0 0.0
  %2575 = vmatpush1.msra.mxu0 0.0
  %2576 = vmatprep.mubr.f32.mxu0 0.0
  %2577 = vmatmul.mubr.f32.gmra.mrb[0].mxu0 %v2507
  %v2578 = vpop.f32.mrb[0].mxu0
  %v2579 = vadd.f32 %v2498, %v2578
  %v2580 = vpop.f32.mrb[0].mxu0
  %2581 = vmatprep.mubr.f32.mxu0 0.0
  %2582 = vmatmul.mubr.f32.gmra.mrb[0].mxu0 %v2510
  %v2583 = vpop.f32.mrb[0].mxu0
  %v2584 = vadd.f32 %v2503, %v2583
  %v2585 = vpop.f32.mrb[0].mxu0
  %2586 = vdwg.mxu0
  %s2587 = scalar_lea.vmem %s7, 1
  %v2588 = vld [vmem:[%s2587] sm:$0x1]
  %v2590 = vlaneseq
  %v2591 = vshrl.u32 %v2590, 7
  %v2592 = vsub.s32 0, %v2591
  %v2593 = vrot.slane %v2588, %v2592
  %v2595 = vadd.f32 %v2579, %v2593
  %v2596 = vadd.f32 %v2584, %v2593
  %v2597 = vadd.f32 %v1495, %v2595
  %v2598 = vadd.f32 %v1496, %v2596
  %s2599 = scalar_lea.vmem %s8, 1
  %v2600 = vld [vmem:[%s2599] sm:$0x1]
  %s2601 = scalar_lea.vmem %s9, 1
  %v2602 = vld [vmem:[%s2601] sm:$0x1]
  %v2603 = vsel %vm65, %v2597, 0.0
  %2604 = vadd.xlane.f32.xlu0 %v2603
  %v2605 = vpop.xlane.xlu0 %2604
  %v2606 = vsel %vm65, %v2598, 0.0
  %2607 = vadd.xlane.f32.xlu0 %v2606
  %v2608 = vpop.xlane.xlu0 %2607
  %v2609 = vmul.f32 %v2605, %v72
  %v2610 = vmul.f32 %v2608, %v72
  %v2611 = vsub.f32 %v2597, %v2609
  %v2612 = vsub.f32 %v2598, %v2610
  %v2613 = vmul.f32 %v2611, %v2611
  %v2614 = vmul.f32 %v2612, %v2612
  %v2615 = vsel %vm65, %v2613, 0.0
  %2616 = vadd.xlane.f32.xlu0 %v2615
  %v2617 = vpop.xlane.xlu0 %2616
  %v2618 = vsel %vm65, %v2614, 0.0
  %2619 = vadd.xlane.f32.xlu0 %v2618
  %v2620 = vpop.xlane.xlu0 %2619
  %v2621 = vmul.f32 %v2617, %v72
  %v2622 = vmul.f32 %v2620, %v72
  %v2623 = vadd.f32 %v2621, 1e-12
  %v2624 = vadd.f32 %v2622, 1e-12
  %v2625 = vrsqrt.pop %v2623
  %v2626 = vrsqrt.pop %v2624
  %v2627 = vmul.f32 %v2611, %v2625
  %v2628 = vmul.f32 %v2612, %v2626
  %v2630 = vlaneseq
  %v2631 = vshrl.u32 %v2630, 7
  %v2632 = vsub.s32 0, %v2631
  %v2633 = vrot.slane %v2600, %v2632
  %v2635 = vmul.f32 %v2627, %v2633
  %v2636 = vmul.f32 %v2628, %v2633
  %v2638 = vlaneseq
  %v2639 = vshrl.u32 %v2638, 7
  %v2640 = vsub.s32 0, %v2639
  %v2641 = vrot.slane %v2602, %v2640
  %v2643 = vadd.f32 %v2635, %v2641
  %v2644 = vadd.f32 %v2636, %v2641
  %s2645 = scalar_lea.vmem %s10, 32
  %v2646 = vld [vmem:[%s2645] sm:$0xff]
  %v2647 = vld [vmem:[%s2645 + $0x8] sm:$0xff]
  %v2648 = vld [vmem:[%s2645 + $0x10] sm:$0xff]
  %v2649 = vld [vmem:[%s2645 + $0x18] sm:$0xff]
  %s2650 = scalar_lea.vmem %s11, 1
  %v2651 = vld [vmem:[%s2650] sm:$0x1]
  %v2653 = vlaneseq
  %v2654 = vshrl.u32 %v2653, 7
  %v2655 = vsub.s32 0, %v2654
  %v2656 = vrot.slane %v2651, %v2655
  %v2659 = vsel %vm65, %v2643, 0
  %v2662 = vsel %vm65, %v2644, 0
  %2664 = vmatprep.subr.mxu0 0.0
  %2665 = vmatpush1.msra.mxu0 %v2646
  %2666 = vmatprep.subr.mxu0 0.0
  %2667 = vmatpush1.msra.mxu0 %v2647
  %2668 = vmatprep.subr.mxu0 0.0
  %2669 = vmatpush1.msra.mxu0 %v2648
  %2670 = vmatprep.subr.mxu0 0.0
  %2671 = vmatpush1.msra.mxu0 %v2649
  %2672 = vmatprep.subr.mxu0 0.0
  %2673 = vmatpush1.msra.mxu0 0.0
  %2674 = vmatprep.subr.mxu0 0.0
  %2675 = vmatpush1.msra.mxu0 0.0
  %2676 = vmatprep.subr.mxu0 0.0
  %2677 = vmatpush1.msra.mxu0 0.0
  %2678 = vmatprep.subr.mxu0 0.0
  %2679 = vmatpush1.msra.mxu0 0.0
  %2680 = vmatprep.subr.mxu0 0.0
  %2681 = vmatpush1.msra.mxu0 0.0
  %2682 = vmatprep.subr.mxu0 0.0
  %2683 = vmatpush1.msra.mxu0 0.0
  %2684 = vmatprep.subr.mxu0 0.0
  %2685 = vmatpush1.msra.mxu0 0.0
  %2686 = vmatprep.subr.mxu0 0.0
  %2687 = vmatpush1.msra.mxu0 0.0
  %2688 = vmatprep.subr.mxu0 0.0
  %2689 = vmatpush1.msra.mxu0 0.0
  %2690 = vmatprep.subr.mxu0 0.0
  %2691 = vmatpush1.msra.mxu0 0.0
  %2692 = vmatprep.subr.mxu0 0.0
  %2693 = vmatpush1.msra.mxu0 0.0
  %2694 = vmatprep.subr.mxu0 0.0
  %2695 = vmatpush1.msra.mxu0 0.0
  %2696 = vmatprep.subr.mxu0 0.0
  %2697 = vmatpush1.msra.mxu0 0.0
  %2698 = vmatprep.subr.mxu0 0.0
  %2699 = vmatpush1.msra.mxu0 0.0
  %2700 = vmatprep.subr.mxu0 0.0
  %2701 = vmatpush1.msra.mxu0 0.0
  %2702 = vmatprep.subr.mxu0 0.0
  %2703 = vmatpush1.msra.mxu0 0.0
  %2704 = vmatprep.subr.mxu0 0.0
  %2705 = vmatpush1.msra.mxu0 0.0
  %2706 = vmatprep.subr.mxu0 0.0
  %2707 = vmatpush1.msra.mxu0 0.0
  %2708 = vmatprep.subr.mxu0 0.0
  %2709 = vmatpush1.msra.mxu0 0.0
  %2710 = vmatprep.subr.mxu0 0.0
  %2711 = vmatpush1.msra.mxu0 0.0
  %2712 = vmatprep.subr.mxu0 0.0
  %2713 = vmatpush1.msra.mxu0 0.0
  %2714 = vmatprep.subr.mxu0 0.0
  %2715 = vmatpush1.msra.mxu0 0.0
  %2716 = vmatprep.subr.mxu0 0.0
  %2717 = vmatpush1.msra.mxu0 0.0
  %2718 = vmatprep.subr.mxu0 0.0
  %2719 = vmatpush1.msra.mxu0 0.0
  %2720 = vmatprep.subr.mxu0 0.0
  %2721 = vmatpush1.msra.mxu0 0.0
  %2722 = vmatprep.subr.mxu0 0.0
  %2723 = vmatpush1.msra.mxu0 0.0
  %2724 = vmatprep.subr.mxu0 0.0
  %2725 = vmatpush1.msra.mxu0 0.0
  %2726 = vmatprep.subr.mxu0 0.0
  %2727 = vmatpush1.msra.mxu0 0.0
  %2728 = vmatprep.mubr.f32.mxu0 0.0
  %2729 = vmatmul.mubr.f32.gmra.mrb[0].mxu0 %v2659
  %v2730 = vpop.f32.mrb[0].mxu0
  %v2731 = vadd.f32 %v2656, %v2730
  %v2732 = vpop.f32.mrb[0].mxu0
  %2733 = vmatprep.mubr.f32.mxu0 0.0
  %2734 = vmatmul.mubr.f32.gmra.mrb[0].mxu0 %v2662
  %v2735 = vpop.f32.mrb[0].mxu0
  %v2736 = vadd.f32 %v2656, %v2735
  %v2737 = vpop.f32.mrb[0].mxu0
  %2738 = vdwg.mxu0
  %v2739 = vmul.f32 %v2731, 0.5
  %v2740 = vmul.f32 %v2736, 0.5
  %v2741 = vmul.f32 %v2731, 0.70710677
  %v2742 = vmul.f32 %v2736, 0.70710677
  %v2743 = verf.f32.pop %v2741
  %v2744 = verf.f32.pop %v2742
  %v2745 = vadd.f32 %v2743, 1.0
  %v2746 = vadd.f32 %v2744, 1.0
  %v2747 = vmul.f32 %v2739, %v2745
  %v2748 = vmul.f32 %v2740, %v2746
  %s2749 = scalar_lea.vmem %s12, 64
  %v2750 = vld [vmem:[%s2749] sm:$0xff]
  %v2751 = vld [vmem:[%s2749 + $0x8] sm:$0xff]
  %v2752 = vld [vmem:[%s2749 + $0x10] sm:$0xff]
  %v2753 = vld [vmem:[%s2749 + $0x18] sm:$0xff]
  %v2754 = vld [vmem:[%s2749 + $0x20] sm:$0xff]
  %v2755 = vld [vmem:[%s2749 + $0x28] sm:$0xff]
  %v2756 = vld [vmem:[%s2749 + $0x30] sm:$0xff]
  %v2757 = vld [vmem:[%s2749 + $0x38] sm:$0xff]
  %s2758 = scalar_lea.vmem %s13, 1
  %v2759 = vld [vmem:[%s2758] sm:$0x1]
  %v2761 = vlaneseq
  %v2762 = vshrl.u32 %v2761, 7
  %v2763 = vsub.s32 0, %v2762
  %v2764 = vrot.slane %v2759, %v2763
  %v2767 = vsel %vm1369, %v2747, 0
  %v2770 = vsel %vm1369, %v2748, 0
  %2772 = vmatprep.subr.mxu0 0.0
  %2773 = vmatpush1.msra.mxu0 %v2750
  %2774 = vmatprep.subr.mxu0 0.0
  %2775 = vmatpush1.msra.mxu0 %v2751
  %2776 = vmatprep.subr.mxu0 0.0
  %2777 = vmatpush1.msra.mxu0 %v2752
  %2778 = vmatprep.subr.mxu0 0.0
  %2779 = vmatpush1.msra.mxu0 %v2753
  %2780 = vmatprep.subr.mxu0 0.0
  %2781 = vmatpush1.msra.mxu0 %v2754
  %2782 = vmatprep.subr.mxu0 0.0
  %2783 = vmatpush1.msra.mxu0 %v2755
  %2784 = vmatprep.subr.mxu0 0.0
  %2785 = vmatpush1.msra.mxu0 %v2756
  %2786 = vmatprep.subr.mxu0 0.0
  %2787 = vmatpush1.msra.mxu0 %v2757
  %2788 = vmatprep.subr.mxu0 0.0
  %2789 = vmatpush1.msra.mxu0 0.0
  %2790 = vmatprep.subr.mxu0 0.0
  %2791 = vmatpush1.msra.mxu0 0.0
  %2792 = vmatprep.subr.mxu0 0.0
  %2793 = vmatpush1.msra.mxu0 0.0
  %2794 = vmatprep.subr.mxu0 0.0
  %2795 = vmatpush1.msra.mxu0 0.0
  %2796 = vmatprep.subr.mxu0 0.0
  %2797 = vmatpush1.msra.mxu0 0.0
  %2798 = vmatprep.subr.mxu0 0.0
  %2799 = vmatpush1.msra.mxu0 0.0
  %2800 = vmatprep.subr.mxu0 0.0
  %2801 = vmatpush1.msra.mxu0 0.0
  %2802 = vmatprep.subr.mxu0 0.0
  %2803 = vmatpush1.msra.mxu0 0.0
  %2804 = vmatprep.subr.mxu0 0.0
  %2805 = vmatpush1.msra.mxu0 0.0
  %2806 = vmatprep.subr.mxu0 0.0
  %2807 = vmatpush1.msra.mxu0 0.0
  %2808 = vmatprep.subr.mxu0 0.0
  %2809 = vmatpush1.msra.mxu0 0.0
  %2810 = vmatprep.subr.mxu0 0.0
  %2811 = vmatpush1.msra.mxu0 0.0
  %2812 = vmatprep.subr.mxu0 0.0
  %2813 = vmatpush1.msra.mxu0 0.0
  %2814 = vmatprep.subr.mxu0 0.0
  %2815 = vmatpush1.msra.mxu0 0.0
  %2816 = vmatprep.subr.mxu0 0.0
  %2817 = vmatpush1.msra.mxu0 0.0
  %2818 = vmatprep.subr.mxu0 0.0
  %2819 = vmatpush1.msra.mxu0 0.0
  %2820 = vmatprep.subr.mxu0 0.0
  %2821 = vmatpush1.msra.mxu0 0.0
  %2822 = vmatprep.subr.mxu0 0.0
  %2823 = vmatpush1.msra.mxu0 0.0
  %2824 = vmatprep.subr.mxu0 0.0
  %2825 = vmatpush1.msra.mxu0 0.0
  %2826 = vmatprep.subr.mxu0 0.0
  %2827 = vmatpush1.msra.mxu0 0.0
  %2828 = vmatprep.subr.mxu0 0.0
  %2829 = vmatpush1.msra.mxu0 0.0
  %2830 = vmatprep.subr.mxu0 0.0
  %2831 = vmatpush1.msra.mxu0 0.0
  %2832 = vmatprep.subr.mxu0 0.0
  %2833 = vmatpush1.msra.mxu0 0.0
  %2834 = vmatprep.subr.mxu0 0.0
  %2835 = vmatpush1.msra.mxu0 0.0
  %2836 = vmatprep.mubr.f32.mxu0 0.0
  %2837 = vmatmul.mubr.f32.gmra.mrb[0].mxu0 %v2767
  %v2838 = vpop.f32.mrb[0].mxu0
  %v2839 = vadd.f32 %v2764, %v2838
  %v2840 = vpop.f32.mrb[0].mxu0
  %2841 = vmatprep.mubr.f32.mxu0 0.0
  %2842 = vmatmul.mubr.f32.gmra.mrb[0].mxu0 %v2770
  %v2843 = vpop.f32.mrb[0].mxu0
  %v2844 = vadd.f32 %v2764, %v2843
  %v2845 = vpop.f32.mrb[0].mxu0
  %2846 = vdwg.mxu0
  %v2847 = vadd.f32 %v2643, %v2839
  %v2848 = vadd.f32 %v2644, %v2844
  %s2849 = scalar_lea.vmem %s14, 1
  %v2850 = vld [vmem:[%s2849] sm:$0x1]
  %s2851 = scalar_lea.vmem %s15, 1
  %v2852 = vld [vmem:[%s2851] sm:$0x1]
  %v2853 = vsel %vm65, %v2847, 0.0
  %2854 = vadd.xlane.f32.xlu0 %v2853
  %v2855 = vpop.xlane.xlu0 %2854
  %v2856 = vsel %vm65, %v2848, 0.0
  %2857 = vadd.xlane.f32.xlu0 %v2856
  %v2858 = vpop.xlane.xlu0 %2857
  %v2859 = vmul.f32 %v2855, %v72
  %v2860 = vmul.f32 %v2858, %v72
  %v2861 = vsub.f32 %v2847, %v2859
  %v2862 = vsub.f32 %v2848, %v2860
  %v2863 = vmul.f32 %v2861, %v2861
  %v2864 = vmul.f32 %v2862, %v2862
  %v2865 = vsel %vm65, %v2863, 0.0
  %2866 = vadd.xlane.f32.xlu0 %v2865
  %v2867 = vpop.xlane.xlu0 %2866
  %v2868 = vsel %vm65, %v2864, 0.0
  %2869 = vadd.xlane.f32.xlu0 %v2868
  %v2870 = vpop.xlane.xlu0 %2869
  %v2871 = vmul.f32 %v2867, %v72
  %v2872 = vmul.f32 %v2870, %v72
  %v2873 = vadd.f32 %v2871, 1e-12
  %v2874 = vadd.f32 %v2872, 1e-12
  %v2875 = vrsqrt.pop %v2873
  %v2876 = vrsqrt.pop %v2874
  %v2877 = vmul.f32 %v2861, %v2875
  %v2878 = vmul.f32 %v2862, %v2876
  %v2880 = vlaneseq
  %v2881 = vshrl.u32 %v2880, 7
  %v2882 = vsub.s32 0, %v2881
  %v2883 = vrot.slane %v2850, %v2882
  %v2885 = vmul.f32 %v2877, %v2883
  %v2886 = vmul.f32 %v2878, %v2883
  %v2888 = vlaneseq
  %v2889 = vshrl.u32 %v2888, 7
  %v2890 = vsub.s32 0, %v2889
  %v2891 = vrot.slane %v2852, %v2890
  %v2893 = vadd.f32 %v2885, %v2891
  %v2894 = vadd.f32 %v2886, %v2891
  %v2895 = vld [vmem:[%s16] sm:$0xff]
  %v2896 = vld [vmem:[%s16 + $0x8] sm:$0xff]
  %v2897 = vld [vmem:[%s16 + $0x10] sm:$0xff]
  %v2898 = vld [vmem:[%s16 + $0x18] sm:$0xff]
  %v2899 = vld [vmem:[%s17] sm:$0x1]
  %v2901 = vlaneseq
  %v2902 = vshrl.u32 %v2901, 7
  %v2903 = vsub.s32 0, %v2902
  %v2904 = vrot.slane %v2899, %v2903
  %v2907 = vsel %vm65, %v2893, 0
  %v2910 = vsel %vm65, %v2894, 0
  %2912 = vmatprep.subr.mxu0 0.0
  %2913 = vmatpush1.msra.mxu0 %v2895
  %2914 = vmatprep.subr.mxu0 0.0
  %2915 = vmatpush1.msra.mxu0 %v2896
  %2916 = vmatprep.subr.mxu0 0.0
  %2917 = vmatpush1.msra.mxu0 %v2897
  %2918 = vmatprep.subr.mxu0 0.0
  %2919 = vmatpush1.msra.mxu0 %v2898
  %2920 = vmatprep.subr.mxu0 0.0
  %2921 = vmatpush1.msra.mxu0 0.0
  %2922 = vmatprep.subr.mxu0 0.0
  %2923 = vmatpush1.msra.mxu0 0.0
  %2924 = vmatprep.subr.mxu0 0.0
  %2925 = vmatpush1.msra.mxu0 0.0
  %2926 = vmatprep.subr.mxu0 0.0
  %2927 = vmatpush1.msra.mxu0 0.0
  %2928 = vmatprep.subr.mxu0 0.0
  %2929 = vmatpush1.msra.mxu0 0.0
  %2930 = vmatprep.subr.mxu0 0.0
  %2931 = vmatpush1.msra.mxu0 0.0
  %2932 = vmatprep.subr.mxu0 0.0
  %2933 = vmatpush1.msra.mxu0 0.0
  %2934 = vmatprep.subr.mxu0 0.0
  %2935 = vmatpush1.msra.mxu0 0.0
  %2936 = vmatprep.subr.mxu0 0.0
  %2937 = vmatpush1.msra.mxu0 0.0
  %2938 = vmatprep.subr.mxu0 0.0
  %2939 = vmatpush1.msra.mxu0 0.0
  %2940 = vmatprep.subr.mxu0 0.0
  %2941 = vmatpush1.msra.mxu0 0.0
  %2942 = vmatprep.subr.mxu0 0.0
  %2943 = vmatpush1.msra.mxu0 0.0
  %2944 = vmatprep.subr.mxu0 0.0
  %2945 = vmatpush1.msra.mxu0 0.0
  %2946 = vmatprep.subr.mxu0 0.0
  %2947 = vmatpush1.msra.mxu0 0.0
  %2948 = vmatprep.subr.mxu0 0.0
  %2949 = vmatpush1.msra.mxu0 0.0
  %2950 = vmatprep.subr.mxu0 0.0
  %2951 = vmatpush1.msra.mxu0 0.0
  %2952 = vmatprep.subr.mxu0 0.0
  %2953 = vmatpush1.msra.mxu0 0.0
  %2954 = vmatprep.subr.mxu0 0.0
  %2955 = vmatpush1.msra.mxu0 0.0
  %2956 = vmatprep.subr.mxu0 0.0
  %2957 = vmatpush1.msra.mxu0 0.0
  %2958 = vmatprep.subr.mxu0 0.0
  %2959 = vmatpush1.msra.mxu0 0.0
  %2960 = vmatprep.subr.mxu0 0.0
  %2961 = vmatpush1.msra.mxu0 0.0
  %2962 = vmatprep.subr.mxu0 0.0
  %2963 = vmatpush1.msra.mxu0 0.0
  %2964 = vmatprep.subr.mxu0 0.0
  %2965 = vmatpush1.msra.mxu0 0.0
  %2966 = vmatprep.subr.mxu0 0.0
  %2967 = vmatpush1.msra.mxu0 0.0
  %2968 = vmatprep.subr.mxu0 0.0
  %2969 = vmatpush1.msra.mxu0 0.0
  %2970 = vmatprep.subr.mxu0 0.0
  %2971 = vmatpush1.msra.mxu0 0.0
  %2972 = vmatprep.subr.mxu0 0.0
  %2973 = vmatpush1.msra.mxu0 0.0
  %2974 = vmatprep.subr.mxu0 0.0
  %2975 = vmatpush1.msra.mxu0 0.0
  %2976 = vmatprep.mubr.f32.mxu0 0.0
  %2977 = vmatmul.mubr.f32.gmra.mrb[0].mxu0 %v2907
  %v2978 = vpop.f32.mrb[0].mxu0
  %v2979 = vadd.f32 %v2904, %v2978
  %v2980 = vpop.f32.mrb[0].mxu0
  %2981 = vmatprep.mubr.f32.mxu0 0.0
  %2982 = vmatmul.mubr.f32.gmra.mrb[0].mxu0 %v2910
  %v2983 = vpop.f32.mrb[0].mxu0
  %v2984 = vadd.f32 %v2904, %v2983
  %v2985 = vpop.f32.mrb[0].mxu0
  %2986 = vdwg.mxu0
  %2987 = vst [vmem:[%s18] sm:$0xff] %v2979
  %2988 = vst [vmem:[%s18 + $0x8] sm:$0xff] %v2984
  // Predicated region
  $region74: #{bert_class_forward.2} parent=0 // pred_check
    _
  $region75: #{bert_class_forward.2} parent=0 // pred_check_branch
    %2990 = sbr.rel (0) target = $region77
  $region76: #{bert_class_forward.2} parent=0 // pred_region
    _
  $region77: #{bert_class_forward.2} parent=0 // pred_fallthru
    _
  // Predicated region
  $region78: #{bert_class_forward.2} parent=0 // pred_check
    _
  $region79: #{bert_class_forward.2} parent=0 // pred_check_branch
    %2992 = sbr.rel (0) target = $region81
  $region80: #{bert_class_forward.2} parent=0 // pred_region
    _
  $region81: #{bert_class_forward.2} parent=0 // pred_fallthru
    _

</llo_original>
